<compile_context>
chip_gen: v5e
topology: v5e:2x2
jax: 0.10.0
libtpu: 0.0.40
codegen_flags: <defaults>
</compile_context>

<pallas_src>
import functools

import jax
import jax.numpy as jnp
from jax.experimental import pallas as pl
from jax.experimental.pallas import tpu as pltpu


def _get_image_kernel(x_ref, w_ref, o_ref, xp_ref, im2col_ref, *, H, W, bpg, pad):
    """Fused conv3x3 (pad=1, no bias) + tanh for one group of bpg batch items.

    x_ref:      (1, Cin, N)        N = bpg * H * W, items concatenated on lanes
    w_ref:      (Cout, 9*Cin)      im2col-reordered weight, tap-major
    o_ref:      (1, Cout, N)
    xp_ref:     (3*Cin, N + (bpg+1)*pad)  zero-padded, pre-masked sources (f32)
    im2col_ref: (9*Cin, N)         single-materialization im2col (f32 or bf16)
    """
    Cin = x_ref.shape[1]
    HW = H * W
    N = bpg * HW
    stride = HW + pad                       # item-to-item stride inside xp

    # --- zero the (bpg+1) pad gaps once (lane-aligned full-width stores) ----
    zeros_gap = jnp.zeros((3 * Cin, pad), jnp.float32)
    for g in range(bpg + 1):
        xp_ref[:, g * stride: g * stride + pad] = zeros_gap

    # --- column-within-row index as one (1, N) row; broadcast over Cin ------
    lane = jax.lax.broadcasted_iota(jnp.int32, (1, N), 1)
    col = (lane & (W - 1)) if (W & (W - 1)) == 0 else (lane % W)

    x = x_ref[0]                                         # (Cin, N) f32
    # Pre-masked sources (masked ONCE, reused by all three ky taps):
    #   kx == 0 taps read x[..., c-1] -> zero col W-1 so the row-wrap reads 0
    #   kx == 2 taps read x[..., c+1] -> zero col 0
    x_l = jnp.where(col != (W - 1), x, 0.0)
    x_r = jnp.where(col != 0, x, 0.0)

    # --- write the three sources into the padded scratch ---------------------
    for b in range(bpg):
        base = pad + b * stride
        sl = slice(b * HW, (b + 1) * HW)
        xp_ref[0 * Cin:1 * Cin, base: base + HW] = x_l[:, sl]   # for kx == 0
        xp_ref[1 * Cin:2 * Cin, base: base + HW] = x[:, sl]     # for kx == 1
        xp_ref[2 * Cin:3 * Cin, base: base + HW] = x_r[:, sl]   # for kx == 2

    # --- im2col: store each shifted tap directly (single materialization) ---
    for ky in range(3):
        for kx in range(3):
            t = ky * 3 + kx
            s = (ky - 1) * W + (kx - 1)
            for b in range(bpg):
                src0 = pad + b * stride + s
                tap = xp_ref[kx * Cin:(kx + 1) * Cin, src0: src0 + HW]
                im2col_ref[t * Cin:(t + 1) * Cin, b * HW:(b + 1) * HW] = (
                    tap.astype(im2col_ref.dtype))

    # --- one (Cout, 9*Cin) x (9*Cin, N) matmul + tanh, lane-dense store ------
    out = jnp.dot(w_ref[...], im2col_ref[...],
                  preferred_element_type=jnp.float32)    # (Cout, N) f32
    o_ref[0] = jnp.tanh(out)


def get_image_g(h_code, weight, operand_dtype=jnp.float32):
    """GET_IMAGE_G forward.  h_code: (B, ngf, H, W); weight: (3, ngf, 3, 3).

    operand_dtype: dtype of the matmul operands (im2col scratch + weights).
    jnp.float32 everywhere by default; jnp.bfloat16 halves im2col traffic and
    uses the native bf16 MXU rate on v6e/v7x (accumulation stays f32).
    """
    B, Cin, H, W = h_code.shape
    Cout = weight.shape[0]
    HW = H * W
    pad = -(-(W + 1) // 128) * 128           # lane-aligned, covers +/-(W+1) shifts

    # Weight -> im2col layout: column index = (ky*3 + kx)*Cin + cin.
    w2 = jnp.transpose(weight.reshape(Cout, Cin, 9), (0, 2, 1)).reshape(
        Cout, 9 * Cin).astype(operand_dtype)

    # Pick the number of grid steps: fold batch items onto the lane axis to cut
    # per-step overhead on single-TC chips, keep >=2 parallel steps when B
    # allows (v7x megacore), and cap the per-step im2col scratch (~8 MiB).
    item_bytes = 9 * Cin * HW * jnp.dtype(operand_dtype).itemsize
    max_bpg = max(1, (8 * 1024 * 1024) // item_bytes)
    G = 1 if B == 1 else B
    for cand in range(2, B + 1):
        if B % cand == 0 and (B // cand) <= max_bpg:
            G = cand
            break
    bpg = B // G
    N = bpg * HW

    # Fold bpg batch items onto the lane axis: (G, Cin, bpg*HW).
    x = (h_code.reshape(G, bpg, Cin, HW)
               .transpose(0, 2, 1, 3)
               .reshape(G, Cin, N))

    kernel = functools.partial(_get_image_kernel, H=H, W=W, bpg=bpg, pad=pad)
    out = pl.pallas_call(
        kernel,
        grid=(G,),
        in_specs=[pl.BlockSpec((1, Cin, N), lambda g: (g, 0, 0)),
                  pl.BlockSpec((Cout, 9 * Cin), lambda g: (0, 0))],
        out_specs=pl.BlockSpec((1, Cout, N), lambda g: (g, 0, 0)),
        out_shape=jax.ShapeDtypeStruct((G, Cout, N), jnp.float32),
        scratch_shapes=[
            pltpu.VMEM((3 * Cin, N + (bpg + 1) * pad), jnp.float32),
            pltpu.VMEM((9 * Cin, N), operand_dtype),
        ],
        compiler_params=pltpu.CompilerParams(
            dimension_semantics=("parallel",)),
    )(x, w2)

    # Unfold: (G, Cout, bpg*HW) -> (B, Cout, H, W).
    return (out.reshape(G, Cout, bpg, H, W)
               .transpose(0, 2, 1, 3, 4)
               .reshape(B, Cout, H, W))


if __name__ == "__main__":
    key = jax.random.PRNGKey(0)
    kx_, kw_ = jax.random.split(key)

    B, NGF, H, W = 2, 8, 64, 64            # ngf = cfg.GAN.GF_DIM, 64x64 stage
    h_code = jax.random.normal(kx_, (B, NGF, H, W), dtype=jnp.float32)
    weight = (0.05 * jax.random.normal(kw_, (3, NGF, 3, 3))).astype(jnp.float32)

    ref = jnp.tanh(jax.lax.conv_general_dilated(
        h_code, weight, window_strides=(1, 1), padding=((1, 1), (1, 1)),
        dimension_numbers=("NCHW", "OIHW", "NCHW")))

    # Default f32 path.
    out_f32 = jax.jit(functools.partial(
        get_image_g, operand_dtype=jnp.float32))(h_code, weight)
    jax.block_until_ready(out_f32)
    assert out_f32.shape == (B, 3, H, W)
    err_f32 = float(jnp.max(jnp.abs(out_f32 - ref)))
    assert err_f32 < 1e-3, f"f32 path mismatch vs reference conv: {err_f32}"

    # bf16-operand path (v6e/v7x suggestion); accumulation stays f32.
    out_bf16 = jax.jit(functools.partial(
        get_image_g, operand_dtype=jnp.bfloat16))(h_code, weight)
    jax.block_until_ready(out_bf16)
    err_bf16 = float(jnp.max(jnp.abs(out_bf16 - ref)))
    assert err_bf16 < 6e-2, f"bf16 path mismatch vs reference conv: {err_bf16}"

    print("KERNEL_OK")
</pallas_src>

<mosaic_0001>
module attributes {stable_mosaic.version = 11 : i64} {
  func.func @_get_image_kernel(%arg0: i32, %arg1: memref<1x8x4096xf32, #tpu.memory_space<vmem>>, %arg2: memref<3x72xf32, #tpu.memory_space<vmem>>, %arg3: memref<1x3x4096xf32, #tpu.memory_space<vmem>>, %arg4: memref<24x4352xf32, #tpu.memory_space<vmem>>, %arg5: memref<72x4096xf32, #tpu.memory_space<vmem>>) attributes {dimension_semantics = [#tpu.dimension_semantics<parallel>], iteration_bounds = array<i64: 2>, scalar_prefetch = 0 : i64, scratch_operands = 2 : i64, tpu.core_type = #tpu.core_type<tc>, window_params = [{transform_indices = @transform_0, window_bounds = array<i64: 1, 8, 4096>}, {pipeline_mode = #tpu.pipeline_mode<synchronous>, transform_indices = @transform_1, window_bounds = array<i64: 3, 72>}, {transform_indices = @transform_2, window_bounds = array<i64: 1, 3, 4096>}]} {
    %cst = arith.constant 0.000000e+00 : f32
    %0 = vector.broadcast %cst : f32 to vector<24x128xf32>
    %c0 = arith.constant 0 : index
    %c0_0 = arith.constant 0 : index
    %1 = vector.load %arg4[%c0, %c0_0] : memref<24x4352xf32, #tpu.memory_space<vmem>>, vector<24x128xf32>
    tpu.vector_store %arg4[%c0, %c0_0], %0 {strides = array<i32>} : memref<24x4352xf32, #tpu.memory_space<vmem>>, vector<24x128xf32>,
    %c0_1 = arith.constant 0 : index
    %c4224 = arith.constant 4224 : index
    %2 = vector.load %arg4[%c0_1, %c4224] : memref<24x4352xf32, #tpu.memory_space<vmem>>, vector<24x128xf32>
    tpu.vector_store %arg4[%c0_1, %c4224], %0 {strides = array<i32>} : memref<24x4352xf32, #tpu.memory_space<vmem>>, vector<24x128xf32>,
    %3 = tpu.iota {dimensions = array<i32: 1>} : vector<1x4096xi32>
    %c63_i32 = arith.constant 63 : i32
    %4 = vector.broadcast %c63_i32 : i32 to vector<1x4096xi32>
    %5 = arith.andi %3, %4 : vector<1x4096xi32>
    %c0_2 = arith.constant 0 : index
    %c0_3 = arith.constant 0 : index
    %c0_4 = arith.constant 0 : index
    %6 = vector.load %arg1[%c0_2, %c0_3, %c0_4] : memref<1x8x4096xf32, #tpu.memory_space<vmem>>, vector<1x8x4096xf32>
    %7 = vector.shape_cast %6 : vector<1x8x4096xf32> to vector<8x4096xf32>
    %c63_i32_5 = arith.constant 63 : i32
    %8 = vector.broadcast %c63_i32_5 : i32 to vector<1x4096xi32>
    %9 = arith.cmpi ne, %5, %8 : vector<1x4096xi32>
    %cst_6 = arith.constant 0.000000e+00 : f32
    %10 = vector.shape_cast %9 : vector<1x4096xi1> to vector<1x4096xi1>
    %11 = vector.broadcast %10 : vector<1x4096xi1> to vector<8x4096xi1>
    %12 = vector.broadcast %cst_6 : f32 to vector<8x4096xf32>
    %13 = arith.select %11, %7, %12 : vector<8x4096xi1>, vector<8x4096xf32>
    %c0_i32 = arith.constant 0 : i32
    %14 = vector.broadcast %c0_i32 : i32 to vector<1x4096xi32>
    %15 = arith.cmpi ne, %5, %14 : vector<1x4096xi32>
    %cst_7 = arith.constant 0.000000e+00 : f32
    %16 = vector.shape_cast %15 : vector<1x4096xi1> to vector<1x4096xi1>
    %17 = vector.broadcast %16 : vector<1x4096xi1> to vector<8x4096xi1>
    %18 = vector.broadcast %cst_7 : f32 to vector<8x4096xf32>
    %19 = arith.select %17, %7, %18 : vector<8x4096xi1>, vector<8x4096xf32>
    %c0_8 = arith.constant 0 : index
    %c128 = arith.constant 128 : index
    %20 = vector.load %arg4[%c0_8, %c128] : memref<24x4352xf32, #tpu.memory_space<vmem>>, vector<8x4096xf32>
    tpu.vector_store %arg4[%c0_8, %c128], %13 {strides = array<i32>} : memref<24x4352xf32, #tpu.memory_space<vmem>>, vector<8x4096xf32>,
    %c8 = arith.constant 8 : index
    %c128_9 = arith.constant 128 : index
    %21 = vector.load %arg4[%c8, %c128_9] : memref<24x4352xf32, #tpu.memory_space<vmem>>, vector<8x4096xf32>
    tpu.vector_store %arg4[%c8, %c128_9], %7 {strides = array<i32>} : memref<24x4352xf32, #tpu.memory_space<vmem>>, vector<8x4096xf32>,
    %c16 = arith.constant 16 : index
    %c128_10 = arith.constant 128 : index
    %22 = vector.load %arg4[%c16, %c128_10] : memref<24x4352xf32, #tpu.memory_space<vmem>>, vector<8x4096xf32>
    tpu.vector_store %arg4[%c16, %c128_10], %19 {strides = array<i32>} : memref<24x4352xf32, #tpu.memory_space<vmem>>, vector<8x4096xf32>,
    %c0_11 = arith.constant 0 : index
    %c63 = arith.constant 63 : index
    %23 = vector.load %arg4[%c0_11, %c63] : memref<24x4352xf32, #tpu.memory_space<vmem>>, vector<8x4096xf32>
    %c0_12 = arith.constant 0 : index
    %c0_13 = arith.constant 0 : index
    %24 = vector.load %arg5[%c0_12, %c0_13] : memref<72x4096xf32, #tpu.memory_space<vmem>>, vector<8x4096xf32>
    tpu.vector_store %arg5[%c0_12, %c0_13], %23 {strides = array<i32>} : memref<72x4096xf32, #tpu.memory_space<vmem>>, vector<8x4096xf32>,
    %c8_14 = arith.constant 8 : index
    %c64 = arith.constant 64 : index
    %25 = vector.load %arg4[%c8_14, %c64] : memref<24x4352xf32, #tpu.memory_space<vmem>>, vector<8x4096xf32>
    %c8_15 = arith.constant 8 : index
    %c0_16 = arith.constant 0 : index
    %26 = vector.load %arg5[%c8_15, %c0_16] : memref<72x4096xf32, #tpu.memory_space<vmem>>, vector<8x4096xf32>
    tpu.vector_store %arg5[%c8_15, %c0_16], %25 {strides = array<i32>} : memref<72x4096xf32, #tpu.memory_space<vmem>>, vector<8x4096xf32>,
    %c16_17 = arith.constant 16 : index
    %c65 = arith.constant 65 : index
    %27 = vector.load %arg4[%c16_17, %c65] : memref<24x4352xf32, #tpu.memory_space<vmem>>, vector<8x4096xf32>
    %c16_18 = arith.constant 16 : index
    %c0_19 = arith.constant 0 : index
    %28 = vector.load %arg5[%c16_18, %c0_19] : memref<72x4096xf32, #tpu.memory_space<vmem>>, vector<8x4096xf32>
    tpu.vector_store %arg5[%c16_18, %c0_19], %27 {strides = array<i32>} : memref<72x4096xf32, #tpu.memory_space<vmem>>, vector<8x4096xf32>,
    %c0_20 = arith.constant 0 : index
    %c127 = arith.constant 127 : index
    %29 = vector.load %arg4[%c0_20, %c127] : memref<24x4352xf32, #tpu.memory_space<vmem>>, vector<8x4096xf32>
    %c24 = arith.constant 24 : index
    %c0_21 = arith.constant 0 : index
    %30 = vector.load %arg5[%c24, %c0_21] : memref<72x4096xf32, #tpu.memory_space<vmem>>, vector<8x4096xf32>
    tpu.vector_store %arg5[%c24, %c0_21], %29 {strides = array<i32>} : memref<72x4096xf32, #tpu.memory_space<vmem>>, vector<8x4096xf32>,
    %c8_22 = arith.constant 8 : index
    %c128_23 = arith.constant 128 : index
    %31 = vector.load %arg4[%c8_22, %c128_23] : memref<24x4352xf32, #tpu.memory_space<vmem>>, vector<8x4096xf32>
    %c32 = arith.constant 32 : index
    %c0_24 = arith.constant 0 : index
    %32 = vector.load %arg5[%c32, %c0_24] : memref<72x4096xf32, #tpu.memory_space<vmem>>, vector<8x4096xf32>
    tpu.vector_store %arg5[%c32, %c0_24], %31 {strides = array<i32>} : memref<72x4096xf32, #tpu.memory_space<vmem>>, vector<8x4096xf32>,
    %c16_25 = arith.constant 16 : index
    %c129 = arith.constant 129 : index
    %33 = vector.load %arg4[%c16_25, %c129] : memref<24x4352xf32, #tpu.memory_space<vmem>>, vector<8x4096xf32>
    %c40 = arith.constant 40 : index
    %c0_26 = arith.constant 0 : index
    %34 = vector.load %arg5[%c40, %c0_26] : memref<72x4096xf32, #tpu.memory_space<vmem>>, vector<8x4096xf32>
    tpu.vector_store %arg5[%c40, %c0_26], %33 {strides = array<i32>} : memref<72x4096xf32, #tpu.memory_space<vmem>>, vector<8x4096xf32>,
    %c0_27 = arith.constant 0 : index
    %c191 = arith.constant 191 : index
    %35 = vector.load %arg4[%c0_27, %c191] : memref<24x4352xf32, #tpu.memory_space<vmem>>, vector<8x4096xf32>
    %c48 = arith.constant 48 : index
    %c0_28 = arith.constant 0 : index
    %36 = vector.load %arg5[%c48, %c0_28] : memref<72x4096xf32, #tpu.memory_space<vmem>>, vector<8x4096xf32>
    tpu.vector_store %arg5[%c48, %c0_28], %35 {strides = array<i32>} : memref<72x4096xf32, #tpu.memory_space<vmem>>, vector<8x4096xf32>,
    %c8_29 = arith.constant 8 : index
    %c192 = arith.constant 192 : index
    %37 = vector.load %arg4[%c8_29, %c192] : memref<24x4352xf32, #tpu.memory_space<vmem>>, vector<8x4096xf32>
    %c56 = arith.constant 56 : index
    %c0_30 = arith.constant 0 : index
    %38 = vector.load %arg5[%c56, %c0_30] : memref<72x4096xf32, #tpu.memory_space<vmem>>, vector<8x4096xf32>
    tpu.vector_store %arg5[%c56, %c0_30], %37 {strides = array<i32>} : memref<72x4096xf32, #tpu.memory_space<vmem>>, vector<8x4096xf32>,
    %c16_31 = arith.constant 16 : index
    %c193 = arith.constant 193 : index
    %39 = vector.load %arg4[%c16_31, %c193] : memref<24x4352xf32, #tpu.memory_space<vmem>>, vector<8x4096xf32>
    %c64_32 = arith.constant 64 : index
    %c0_33 = arith.constant 0 : index
    %40 = vector.load %arg5[%c64_32, %c0_33] : memref<72x4096xf32, #tpu.memory_space<vmem>>, vector<8x4096xf32>
    tpu.vector_store %arg5[%c64_32, %c0_33], %39 {strides = array<i32>} : memref<72x4096xf32, #tpu.memory_space<vmem>>, vector<8x4096xf32>,
    %c0_34 = arith.constant 0 : index
    %c0_35 = arith.constant 0 : index
    %41 = vector.load %arg2[%c0_34, %c0_35] : memref<3x72xf32, #tpu.memory_space<vmem>>, vector<3x72xf32>
    %c0_36 = arith.constant 0 : index
    %c0_37 = arith.constant 0 : index
    %42 = vector.load %arg5[%c0_36, %c0_37] : memref<72x4096xf32, #tpu.memory_space<vmem>>, vector<72x4096xf32>
    %cst_38 = arith.constant dense<0.000000e+00> : vector<3x4096xf32>
    %43 = tpu.matmul %41, %42, %cst_38 {dimension_numbers = #tpu.dot_dimension_numbers<[1], [0], [0], [1], [0, 0, 1, 1], [], []>} : vector<3x72xf32>, vector<72x4096xf32>, vector<3x4096xf32> -> vector<3x4096xf32>
    %44 = math.tanh %43 : vector<3x4096xf32>
    %c0_39 = arith.constant 0 : index
    %c0_40 = arith.constant 0 : index
    %c0_41 = arith.constant 0 : index
    %45 = vector.load %arg3[%c0_39, %c0_40, %c0_41] : memref<1x3x4096xf32, #tpu.memory_space<vmem>>, vector<1x3x4096xf32>
    %46 = vector.shape_cast %45 : vector<1x3x4096xf32> to vector<3x4096xf32>
    %47 = vector.shape_cast %44 : vector<3x4096xf32> to vector<1x3x4096xf32>
    tpu.vector_store %arg3[%c0_39, %c0_40, %c0_41], %47 {strides = array<i32>} : memref<1x3x4096xf32, #tpu.memory_space<vmem>>, vector<1x3x4096xf32>,
    return
  }
  func.func @transform_0(%arg0: i32) -> (i32, i32, i32) {
    %c0_i32 = arith.constant 0 : i32
    %c0_i32_0 = arith.constant 0 : i32
    %c0_i32_1 = arith.constant 0 : i32
    return %arg0, %c0_i32, %c0_i32_0 : i32, i32, i32
  }
  func.func @transform_1(%arg0: i32) -> (i32, i32) {
    %c0_i32 = arith.constant 0 : i32
    %c0_i32_0 = arith.constant 0 : i32
    %c0_i32_1 = arith.constant 0 : i32
    return %c0_i32, %c0_i32_0 : i32, i32
  }
  func.func @transform_2(%arg0: i32) -> (i32, i32, i32) {
    %c0_i32 = arith.constant 0 : i32
    %c0_i32_0 = arith.constant 0 : i32
    %c0_i32_1 = arith.constant 0 : i32
    return %arg0, %c0_i32, %c0_i32_0 : i32, i32, i32
  }
}

</mosaic_0001>

<llo_original>
// kernel: get_image_g.1
$region0: #{get_image_g.1}
  #allocation0 [shape = 'u32[]', space=smem, size = 0x4, offset = 0x4, fixed_abs, tag = 'smem constant byte address 0x4 - core index']
  #allocation1 [shape = 'u32[72,128]{1,0:T(1,128)}', space=vmem, size = 0x9000, scoped, tag = 'internal scratch']
  #allocation2 [shape = 'f32[24,4352]{1,0:T(8,128)}', space=vmem, size = 0x66000, scoped, tag = 'scratch operand']
  #allocation3 [shape = 'f32[72,4096]{1,0:T(8,128)}', space=vmem, size = 0x120000, scoped, tag = 'scratch operand']
  %s0 = inlined_call_operand.vmem [shape: f32[2,8,4096], index: 0, kind: input, shape index: {}]
  %s1 = inlined_call_operand.vmem [shape: f32[3,72], index: 1, kind: input, shape index: {}]
  %s2 = inlined_call_operand.vmem [shape: f32[2,3,4096], index: 2, kind: output, shape index: {}]
  %s3 = sld [smem:[#allocation0]]
  $region41: #{get_image_g.1} parent=0
    _
  %s5 = ssub.s32 1, %s3
  %s6 = scalar_select 0, %s5, %s3
  loop: start=0, step=1, limit=4
  $region2: #{get_image_g.1} parent=0 // loop_pre_header
    _
  $region3: #{get_image_g.1} parent=0 // loop_header
    %s8 = sphi 0, %s12
    %p9 = scmp.ge.s32.totalorder %s8, 4
    %s18 = sphi 0, %s20
    %s21 = sphi 0, %s18
    %s22 = sphi 0, %s21
    %s38 = sphi 0, %s22
    %s42 = sphi 0, %s42
    %s44 = sphi 0, %s42
    %s45 = sphi 0, %s44
    %s59 = sphi 0, %s45
    %s65 = sphi 0, %s67
    %s68 = sphi 0, %s65
    %s69 = sphi 0, %s68
    %s85 = sphi 0, %s69
  $region4: #{get_image_g.1} parent=0 // loop_header_branch
    %11 = sbr.rel (%p9) target = $region8
  $region5: #{get_image_g.1} parent=0 // loop_body
    %s13 = ssub.s32 %s8, 1
    %s14 = ssub.s32 %s8, 2
    %s15 = sadd.s32 %s8, 1
    %s16 = ssub.s32 %s8, %s15
    %p17 = scmp.eq.s32.totalorder %s16, 0
    %s19 = sadd.s32 %s18, 1
    %s20 = scalar_select %p17, %s18, %s19
    %p23 = pneg %p17
    %p24 = scmp.eq.s32.totalorder %s8, 1
    %p25 = por %p23, %p24
    %p26 = scmp.ne.s32.totalorder %s18, %s21
    %p27 = scmp.eq.s32.totalorder %s8, 0
    %p28 = por %p26, %p27
    %p29 = scmp.ne.s32.totalorder %s18, %s21
    %p30 = scmp.eq.s32.totalorder %s13, 1
    %p31 = por %p29, %p30
    %p32 = scmp.ne.s32.totalorder %s21, %s22
    %p33 = scmp.eq.s32.totalorder %s13, 0
    %p34 = por %p32, %p33
    %p35 = scmp.ne.s32.totalorder %s21, %s22
    %p36 = scmp.eq.s32.totalorder %s14, 1
    %p37 = por %p35, %p36
    %p39 = scmp.ne.s32.totalorder %s22, %s38
    %p40 = scmp.eq.s32.totalorder %s14, 0
    %p41 = por %p39, %p40
    %s43 = sadd.s32 %s42, 1
    %p46 = scmp.eq.s32.totalorder %s8, 1
    %p47 = scmp.ne.s32.totalorder %s42, %s44
    %p48 = scmp.eq.s32.totalorder %s8, 0
    %p49 = por %p47, %p48
    %p50 = scmp.ne.s32.totalorder %s42, %s44
    %p51 = scmp.eq.s32.totalorder %s13, 1
    %p52 = por %p50, %p51
    %p53 = scmp.ne.s32.totalorder %s44, %s45
    %p54 = scmp.eq.s32.totalorder %s13, 0
    %p55 = por %p53, %p54
    %p56 = scmp.ne.s32.totalorder %s44, %s45
    %p57 = scmp.eq.s32.totalorder %s14, 1
    %p58 = por %p56, %p57
    %p60 = scmp.ne.s32.totalorder %s45, %s59
    %p61 = scmp.eq.s32.totalorder %s14, 0
    %p62 = por %p60, %p61
    %s63 = ssub.s32 %s8, %s15
    %p64 = scmp.eq.s32.totalorder %s63, 0
    %s66 = sadd.s32 %s65, 1
    %s67 = scalar_select %p64, %s65, %s66
    %p70 = pneg %p64
    %p71 = scmp.eq.s32.totalorder %s8, 1
    %p72 = por %p70, %p71
    %p73 = scmp.ne.s32.totalorder %s65, %s68
    %p74 = scmp.eq.s32.totalorder %s8, 0
    %p75 = por %p73, %p74
    %p76 = scmp.ne.s32.totalorder %s65, %s68
    %p77 = scmp.eq.s32.totalorder %s13, 1
    %p78 = por %p76, %p77
    %p79 = scmp.ne.s32.totalorder %s68, %s69
    %p80 = scmp.eq.s32.totalorder %s13, 0
    %p81 = por %p79, %p80
    %p82 = scmp.ne.s32.totalorder %s68, %s69
    %p83 = scmp.eq.s32.totalorder %s14, 1
    %p84 = por %p82, %p83
    %p86 = scmp.ne.s32.totalorder %s69, %s85
    %p87 = scmp.eq.s32.totalorder %s14, 0
    %p88 = por %p86, %p87
    %p89 = scmp.le.s32.totalorder 1, %s8
    %p90 = scmp.lt.s32.totalorder %s8, 3
    %p91 = pnand %p89, %p90
    %p92 = pneg %p91
    // Predicated region
    $region9: #{get_image_g.1} parent=5 // pred_check
      _
    $region10: #{get_image_g.1} parent=5 // pred_check_branch
      %94 = sbr.rel (%p91) target = $region12
    $region11: #{get_image_g.1} parent=5 // pred_region
      %s95 = ssub.s32 %s8, 1
      // Predicated region
      $region13: #{get_image_g.1} parent=11 // pred_check
        %p96 = pneg %p55
      $region14: #{get_image_g.1} parent=11 // pred_check_branch
        %98 = sbr.rel (%p96) target = $region16
      $region15: #{get_image_g.1} parent=11 // pred_region
        _
      $region16: #{get_image_g.1} parent=11 // pred_fallthru
        _
    $region12: #{get_image_g.1} parent=5 // pred_fallthru
      _
    %p99 = scmp.lt.s32.totalorder %s8, 2
    // Predicated region
    $region17: #{get_image_g.1} parent=5 // pred_check
      %p100 = pneg %p99
    $region18: #{get_image_g.1} parent=5 // pred_check_branch
      %102 = sbr.rel (%p100) target = $region20
    $region19: #{get_image_g.1} parent=5 // pred_region
      // Predicated region
      $region21: #{get_image_g.1} parent=19 // pred_check
        %p103 = pneg %p28
      $region22: #{get_image_g.1} parent=19 // pred_check_branch
        %105 = sbr.rel (%p103) target = $region24
      $region23: #{get_image_g.1} parent=19 // pred_region
        %p106 = scmp.lt.s32.totalorder %s8, 1
        %s107 = scalar_select %p106, %s8, 1
        %s108 = smul.addr %s107, 32
        %s109 = smul.addr %s108, 8
        %s110 = scalar_lea.vmem %s0, %s109
      $region24: #{get_image_g.1} parent=19 // pred_fallthru
        _
    $region20: #{get_image_g.1} parent=5 // pred_fallthru
      _
    %p111 = scmp.le.s32.totalorder 1, %s8
    %p112 = scmp.lt.s32.totalorder %s8, 3
    %p113 = pnand %p111, %p112
    %p114 = pneg %p113
    // Predicated region
    $region25: #{get_image_g.1} parent=5 // pred_check
      _
    $region26: #{get_image_g.1} parent=5 // pred_check_branch
      %116 = sbr.rel (%p113) target = $region28
    $region27: #{get_image_g.1} parent=5 // pred_region
      %s117 = ssub.s32 %s8, 1
      %p118 = scmp.lt.s32.totalorder %s13, 1
      %s119 = scalar_select %p118, %s13, 1
      %s120 = smul.addr %s119, 32
      %s121 = smul.addr %s120, 8
      %s122 = scalar_lea.vmem %s0, %s121
      %p123 = pneg %p34
      %p124 = pneg %p31
      %p125 = pneg %p55
      %p126 = pneg %p52
      %p127 = pneg %p81
      %p128 = pneg %p78
      %p129 = scmp.lt.s32.totalorder %s13, 1
      %s130 = scalar_select %p129, %s13, 1
      %s131 = smul.addr %s130, 32
      %s132 = smul.addr %s131, 4
      %s133 = scalar_lea.vmem %s2, %s132
      %p134 = scmp.lt.s32.totalorder %s13, 1
      %s135 = scalar_select %p134, %s13, 1
      %s136 = smul.addr %s135, 32
      %s137 = smul.addr %s136, 8
      %s138 = scalar_lea.vmem %s0, %s137
      %p139 = scmp.lt.s32.totalorder %s13, 1
      %s140 = scalar_select %p139, %s13, 1
      %s141 = smul.addr %s140, 32
      %s142 = smul.addr %s141, 4
      %s143 = scalar_lea.vmem %s2, %s142
      %144 = vst [vmem:[#allocation2] sm:$0xff] 0.0
      %145 = vst [vmem:[#allocation2 + $0x110] sm:$0xff] 0.0
      %146 = vst [vmem:[#allocation2 + $0x220] sm:$0xff] 0.0
      %147 = vst [vmem:[#allocation2 + $0x108] sm:$0xff] 0.0
      %148 = vst [vmem:[#allocation2 + $0x218] sm:$0xff] 0.0
      %149 = vst [vmem:[#allocation2 + $0x328] sm:$0xff] 0.0
      %v150 = vlaneseq
      %v151 = vand.u32 %v150, 127
      %v152 = vadd.s32 %v151, 128
      %v153 = vadd.s32 %v151, 256
      %v154 = vadd.s32 %v151, 384
      %v155 = vadd.s32 %v151, 512
      %v156 = vadd.s32 %v151, 640
      %v157 = vadd.s32 %v151, 768
      %v158 = vadd.s32 %v151, 896
      %v159 = vadd.s32 %v151, 1024
      %v160 = vadd.s32 %v151, 1152
      %v161 = vadd.s32 %v151, 1280
      %v162 = vadd.s32 %v151, 1408
      %v163 = vadd.s32 %v151, 1536
      %v164 = vadd.s32 %v151, 1664
      %v165 = vadd.s32 %v151, 1792
      %v166 = vadd.s32 %v151, 1920
      %v167 = vadd.s32 %v151, 2048
      %v168 = vadd.s32 %v151, 2176
      %v169 = vadd.s32 %v151, 2304
      %v170 = vadd.s32 %v151, 2432
      %v171 = vadd.s32 %v151, 2560
      %v172 = vadd.s32 %v151, 2688
      %v173 = vadd.s32 %v151, 2816
      %v174 = vadd.s32 %v151, 2944
      %v175 = vadd.s32 %v151, 3072
      %v176 = vadd.s32 %v151, 3200
      %v177 = vadd.s32 %v151, 3328
      %v178 = vadd.s32 %v151, 3456
      %v179 = vadd.s32 %v151, 3584
      %v180 = vadd.s32 %v151, 3712
      %v181 = vadd.s32 %v151, 3840
      %v182 = vadd.s32 %v151, 3968
      %v183 = vand.u32 %v151, 63
      %v184 = vand.u32 %v152, 63
      %v185 = vand.u32 %v153, 63
      %v186 = vand.u32 %v154, 63
      %v187 = vand.u32 %v155, 63
      %v188 = vand.u32 %v156, 63
      %v189 = vand.u32 %v157, 63
      %v190 = vand.u32 %v158, 63
      %v191 = vand.u32 %v159, 63
      %v192 = vand.u32 %v160, 63
      %v193 = vand.u32 %v161, 63
      %v194 = vand.u32 %v162, 63
      %v195 = vand.u32 %v163, 63
      %v196 = vand.u32 %v164, 63
      %v197 = vand.u32 %v165, 63
      %v198 = vand.u32 %v166, 63
      %v199 = vand.u32 %v167, 63
      %v200 = vand.u32 %v168, 63
      %v201 = vand.u32 %v169, 63
      %v202 = vand.u32 %v170, 63
      %v203 = vand.u32 %v171, 63
      %v204 = vand.u32 %v172, 63
      %v205 = vand.u32 %v173, 63
      %v206 = vand.u32 %v174, 63
      %v207 = vand.u32 %v175, 63
      %v208 = vand.u32 %v176, 63
      %v209 = vand.u32 %v177, 63
      %v210 = vand.u32 %v178, 63
      %v211 = vand.u32 %v179, 63
      %v212 = vand.u32 %v180, 63
      %v213 = vand.u32 %v181, 63
      %v214 = vand.u32 %v182, 63
      %v215 = vld [vmem:[%s138] sm:$0xff]
      %v216 = vld [vmem:[%s138 + $0x8] sm:$0xff]
      %v217 = vld [vmem:[%s138 + $0x10] sm:$0xff]
      %v218 = vld [vmem:[%s138 + $0x18] sm:$0xff]
      %v219 = vld [vmem:[%s138 + $0x20] sm:$0xff]
      %v220 = vld [vmem:[%s138 + $0x28] sm:$0xff]
      %v221 = vld [vmem:[%s138 + $0x30] sm:$0xff]
      %v222 = vld [vmem:[%s138 + $0x38] sm:$0xff]
      %v223 = vld [vmem:[%s138 + $0x40] sm:$0xff]
      %v224 = vld [vmem:[%s138 + $0x48] sm:$0xff]
      %v225 = vld [vmem:[%s138 + $0x50] sm:$0xff]
      %v226 = vld [vmem:[%s138 + $0x58] sm:$0xff]
      %v227 = vld [vmem:[%s138 + $0x60] sm:$0xff]
      %v228 = vld [vmem:[%s138 + $0x68] sm:$0xff]
      %v229 = vld [vmem:[%s138 + $0x70] sm:$0xff]
      %v230 = vld [vmem:[%s138 + $0x78] sm:$0xff]
      %v231 = vld [vmem:[%s138 + $0x80] sm:$0xff]
      %v232 = vld [vmem:[%s138 + $0x88] sm:$0xff]
      %v233 = vld [vmem:[%s138 + $0x90] sm:$0xff]
      %v234 = vld [vmem:[%s138 + $0x98] sm:$0xff]
      %v235 = vld [vmem:[%s138 + $0xa0] sm:$0xff]
      %v236 = vld [vmem:[%s138 + $0xa8] sm:$0xff]
      %v237 = vld [vmem:[%s138 + $0xb0] sm:$0xff]
      %v238 = vld [vmem:[%s138 + $0xb8] sm:$0xff]
      %v239 = vld [vmem:[%s138 + $0xc0] sm:$0xff]
      %v240 = vld [vmem:[%s138 + $0xc8] sm:$0xff]
      %v241 = vld [vmem:[%s138 + $0xd0] sm:$0xff]
      %v242 = vld [vmem:[%s138 + $0xd8] sm:$0xff]
      %v243 = vld [vmem:[%s138 + $0xe0] sm:$0xff]
      %v244 = vld [vmem:[%s138 + $0xe8] sm:$0xff]
      %v245 = vld [vmem:[%s138 + $0xf0] sm:$0xff]
      %v246 = vld [vmem:[%s138 + $0xf8] sm:$0xff]
      %vm247 = vcmp.ne.s32.totalorder %v183, 63
      %vm248 = vcmp.ne.s32.totalorder %v184, 63
      %vm249 = vcmp.ne.s32.totalorder %v185, 63
      %vm250 = vcmp.ne.s32.totalorder %v186, 63
      %vm251 = vcmp.ne.s32.totalorder %v187, 63
      %vm252 = vcmp.ne.s32.totalorder %v188, 63
      %vm253 = vcmp.ne.s32.totalorder %v189, 63
      %vm254 = vcmp.ne.s32.totalorder %v190, 63
      %vm255 = vcmp.ne.s32.totalorder %v191, 63
      %vm256 = vcmp.ne.s32.totalorder %v192, 63
      %vm257 = vcmp.ne.s32.totalorder %v193, 63
      %vm258 = vcmp.ne.s32.totalorder %v194, 63
      %vm259 = vcmp.ne.s32.totalorder %v195, 63
      %vm260 = vcmp.ne.s32.totalorder %v196, 63
      %vm261 = vcmp.ne.s32.totalorder %v197, 63
      %vm262 = vcmp.ne.s32.totalorder %v198, 63
      %vm263 = vcmp.ne.s32.totalorder %v199, 63
      %vm264 = vcmp.ne.s32.totalorder %v200, 63
      %vm265 = vcmp.ne.s32.totalorder %v201, 63
      %vm266 = vcmp.ne.s32.totalorder %v202, 63
      %vm267 = vcmp.ne.s32.totalorder %v203, 63
      %vm268 = vcmp.ne.s32.totalorder %v204, 63
      %vm269 = vcmp.ne.s32.totalorder %v205, 63
      %vm270 = vcmp.ne.s32.totalorder %v206, 63
      %vm271 = vcmp.ne.s32.totalorder %v207, 63
      %vm272 = vcmp.ne.s32.totalorder %v208, 63
      %vm273 = vcmp.ne.s32.totalorder %v209, 63
      %vm274 = vcmp.ne.s32.totalorder %v210, 63
      %vm275 = vcmp.ne.s32.totalorder %v211, 63
      %vm276 = vcmp.ne.s32.totalorder %v212, 63
      %vm277 = vcmp.ne.s32.totalorder %v213, 63
      %vm278 = vcmp.ne.s32.totalorder %v214, 63
      %v279 = vsel %vm247, 1, 0
      %v280 = vsel %vm248, 1, 0
      %v281 = vsel %vm249, 1, 0
      %v282 = vsel %vm250, 1, 0
      %v283 = vsel %vm251, 1, 0
      %v284 = vsel %vm252, 1, 0
      %v285 = vsel %vm253, 1, 0
      %v286 = vsel %vm254, 1, 0
      %v287 = vsel %vm255, 1, 0
      %v288 = vsel %vm256, 1, 0
      %v289 = vsel %vm257, 1, 0
      %v290 = vsel %vm258, 1, 0
      %v291 = vsel %vm259, 1, 0
      %v292 = vsel %vm260, 1, 0
      %v293 = vsel %vm261, 1, 0
      %v294 = vsel %vm262, 1, 0
      %v295 = vsel %vm263, 1, 0
      %v296 = vsel %vm264, 1, 0
      %v297 = vsel %vm265, 1, 0
      %v298 = vsel %vm266, 1, 0
      %v299 = vsel %vm267, 1, 0
      %v300 = vsel %vm268, 1, 0
      %v301 = vsel %vm269, 1, 0
      %v302 = vsel %vm270, 1, 0
      %v303 = vsel %vm271, 1, 0
      %v304 = vsel %vm272, 1, 0
      %v305 = vsel %vm273, 1, 0
      %v306 = vsel %vm274, 1, 0
      %v307 = vsel %vm275, 1, 0
      %v308 = vsel %vm276, 1, 0
      %v309 = vsel %vm277, 1, 0
      %v310 = vsel %vm278, 1, 0
      %vm311 = vcmp.eq.s32.totalorder %v279, 1
      %vm312 = vcmp.eq.s32.totalorder %v280, 1
      %vm313 = vcmp.eq.s32.totalorder %v281, 1
      %vm314 = vcmp.eq.s32.totalorder %v282, 1
      %vm315 = vcmp.eq.s32.totalorder %v283, 1
      %vm316 = vcmp.eq.s32.totalorder %v284, 1
      %vm317 = vcmp.eq.s32.totalorder %v285, 1
      %vm318 = vcmp.eq.s32.totalorder %v286, 1
      %vm319 = vcmp.eq.s32.totalorder %v287, 1
      %vm320 = vcmp.eq.s32.totalorder %v288, 1
      %vm321 = vcmp.eq.s32.totalorder %v289, 1
      %vm322 = vcmp.eq.s32.totalorder %v290, 1
      %vm323 = vcmp.eq.s32.totalorder %v291, 1
      %vm324 = vcmp.eq.s32.totalorder %v292, 1
      %vm325 = vcmp.eq.s32.totalorder %v293, 1
      %vm326 = vcmp.eq.s32.totalorder %v294, 1
      %vm327 = vcmp.eq.s32.totalorder %v295, 1
      %vm328 = vcmp.eq.s32.totalorder %v296, 1
      %vm329 = vcmp.eq.s32.totalorder %v297, 1
      %vm330 = vcmp.eq.s32.totalorder %v298, 1
      %vm331 = vcmp.eq.s32.totalorder %v299, 1
      %vm332 = vcmp.eq.s32.totalorder %v300, 1
      %vm333 = vcmp.eq.s32.totalorder %v301, 1
      %vm334 = vcmp.eq.s32.totalorder %v302, 1
      %vm335 = vcmp.eq.s32.totalorder %v303, 1
      %vm336 = vcmp.eq.s32.totalorder %v304, 1
      %vm337 = vcmp.eq.s32.totalorder %v305, 1
      %vm338 = vcmp.eq.s32.totalorder %v306, 1
      %vm339 = vcmp.eq.s32.totalorder %v307, 1
      %vm340 = vcmp.eq.s32.totalorder %v308, 1
      %vm341 = vcmp.eq.s32.totalorder %v309, 1
      %vm342 = vcmp.eq.s32.totalorder %v310, 1
      %v343 = vsel %vm311, %v215, 0.0
      %v344 = vsel %vm312, %v216, 0.0
      %v345 = vsel %vm313, %v217, 0.0
      %v346 = vsel %vm314, %v218, 0.0
      %v347 = vsel %vm315, %v219, 0.0
      %v348 = vsel %vm316, %v220, 0.0
      %v349 = vsel %vm317, %v221, 0.0
      %v350 = vsel %vm318, %v222, 0.0
      %v351 = vsel %vm319, %v223, 0.0
      %v352 = vsel %vm320, %v224, 0.0
      %v353 = vsel %vm321, %v225, 0.0
      %v354 = vsel %vm322, %v226, 0.0
      %v355 = vsel %vm323, %v227, 0.0
      %v356 = vsel %vm324, %v228, 0.0
      %v357 = vsel %vm325, %v229, 0.0
      %v358 = vsel %vm326, %v230, 0.0
      %v359 = vsel %vm327, %v231, 0.0
      %v360 = vsel %vm328, %v232, 0.0
      %v361 = vsel %vm329, %v233, 0.0
      %v362 = vsel %vm330, %v234, 0.0
      %v363 = vsel %vm331, %v235, 0.0
      %v364 = vsel %vm332, %v236, 0.0
      %v365 = vsel %vm333, %v237, 0.0
      %v366 = vsel %vm334, %v238, 0.0
      %v367 = vsel %vm335, %v239, 0.0
      %v368 = vsel %vm336, %v240, 0.0
      %v369 = vsel %vm337, %v241, 0.0
      %v370 = vsel %vm338, %v242, 0.0
      %v371 = vsel %vm339, %v243, 0.0
      %v372 = vsel %vm340, %v244, 0.0
      %v373 = vsel %vm341, %v245, 0.0
      %v374 = vsel %vm342, %v246, 0.0
      %vm375 = vcmp.ne.s32.totalorder %v183, 0
      %vm376 = vcmp.ne.s32.totalorder %v184, 0
      %vm377 = vcmp.ne.s32.totalorder %v185, 0
      %vm378 = vcmp.ne.s32.totalorder %v186, 0
      %vm379 = vcmp.ne.s32.totalorder %v187, 0
      %vm380 = vcmp.ne.s32.totalorder %v188, 0
      %vm381 = vcmp.ne.s32.totalorder %v189, 0
      %vm382 = vcmp.ne.s32.totalorder %v190, 0
      %vm383 = vcmp.ne.s32.totalorder %v191, 0
      %vm384 = vcmp.ne.s32.totalorder %v192, 0
      %vm385 = vcmp.ne.s32.totalorder %v193, 0
      %vm386 = vcmp.ne.s32.totalorder %v194, 0
      %vm387 = vcmp.ne.s32.totalorder %v195, 0
      %vm388 = vcmp.ne.s32.totalorder %v196, 0
      %vm389 = vcmp.ne.s32.totalorder %v197, 0
      %vm390 = vcmp.ne.s32.totalorder %v198, 0
      %vm391 = vcmp.ne.s32.totalorder %v199, 0
      %vm392 = vcmp.ne.s32.totalorder %v200, 0
      %vm393 = vcmp.ne.s32.totalorder %v201, 0
      %vm394 = vcmp.ne.s32.totalorder %v202, 0
      %vm395 = vcmp.ne.s32.totalorder %v203, 0
      %vm396 = vcmp.ne.s32.totalorder %v204, 0
      %vm397 = vcmp.ne.s32.totalorder %v205, 0
      %vm398 = vcmp.ne.s32.totalorder %v206, 0
      %vm399 = vcmp.ne.s32.totalorder %v207, 0
      %vm400 = vcmp.ne.s32.totalorder %v208, 0
      %vm401 = vcmp.ne.s32.totalorder %v209, 0
      %vm402 = vcmp.ne.s32.totalorder %v210, 0
      %vm403 = vcmp.ne.s32.totalorder %v211, 0
      %vm404 = vcmp.ne.s32.totalorder %v212, 0
      %vm405 = vcmp.ne.s32.totalorder %v213, 0
      %vm406 = vcmp.ne.s32.totalorder %v214, 0
      %v407 = vsel %vm375, 1, 0
      %v408 = vsel %vm376, 1, 0
      %v409 = vsel %vm377, 1, 0
      %v410 = vsel %vm378, 1, 0
      %v411 = vsel %vm379, 1, 0
      %v412 = vsel %vm380, 1, 0
      %v413 = vsel %vm381, 1, 0
      %v414 = vsel %vm382, 1, 0
      %v415 = vsel %vm383, 1, 0
      %v416 = vsel %vm384, 1, 0
      %v417 = vsel %vm385, 1, 0
      %v418 = vsel %vm386, 1, 0
      %v419 = vsel %vm387, 1, 0
      %v420 = vsel %vm388, 1, 0
      %v421 = vsel %vm389, 1, 0
      %v422 = vsel %vm390, 1, 0
      %v423 = vsel %vm391, 1, 0
      %v424 = vsel %vm392, 1, 0
      %v425 = vsel %vm393, 1, 0
      %v426 = vsel %vm394, 1, 0
      %v427 = vsel %vm395, 1, 0
      %v428 = vsel %vm396, 1, 0
      %v429 = vsel %vm397, 1, 0
      %v430 = vsel %vm398, 1, 0
      %v431 = vsel %vm399, 1, 0
      %v432 = vsel %vm400, 1, 0
      %v433 = vsel %vm401, 1, 0
      %v434 = vsel %vm402, 1, 0
      %v435 = vsel %vm403, 1, 0
      %v436 = vsel %vm404, 1, 0
      %v437 = vsel %vm405, 1, 0
      %v438 = vsel %vm406, 1, 0
      %vm439 = vcmp.eq.s32.totalorder %v407, 1
      %vm440 = vcmp.eq.s32.totalorder %v408, 1
      %vm441 = vcmp.eq.s32.totalorder %v409, 1
      %vm442 = vcmp.eq.s32.totalorder %v410, 1
      %vm443 = vcmp.eq.s32.totalorder %v411, 1
      %vm444 = vcmp.eq.s32.totalorder %v412, 1
      %vm445 = vcmp.eq.s32.totalorder %v413, 1
      %vm446 = vcmp.eq.s32.totalorder %v414, 1
      %vm447 = vcmp.eq.s32.totalorder %v415, 1
      %vm448 = vcmp.eq.s32.totalorder %v416, 1
      %vm449 = vcmp.eq.s32.totalorder %v417, 1
      %vm450 = vcmp.eq.s32.totalorder %v418, 1
      %vm451 = vcmp.eq.s32.totalorder %v419, 1
      %vm452 = vcmp.eq.s32.totalorder %v420, 1
      %vm453 = vcmp.eq.s32.totalorder %v421, 1
      %vm454 = vcmp.eq.s32.totalorder %v422, 1
      %vm455 = vcmp.eq.s32.totalorder %v423, 1
      %vm456 = vcmp.eq.s32.totalorder %v424, 1
      %vm457 = vcmp.eq.s32.totalorder %v425, 1
      %vm458 = vcmp.eq.s32.totalorder %v426, 1
      %vm459 = vcmp.eq.s32.totalorder %v427, 1
      %vm460 = vcmp.eq.s32.totalorder %v428, 1
      %vm461 = vcmp.eq.s32.totalorder %v429, 1
      %vm462 = vcmp.eq.s32.totalorder %v430, 1
      %vm463 = vcmp.eq.s32.totalorder %v431, 1
      %vm464 = vcmp.eq.s32.totalorder %v432, 1
      %vm465 = vcmp.eq.s32.totalorder %v433, 1
      %vm466 = vcmp.eq.s32.totalorder %v434, 1
      %vm467 = vcmp.eq.s32.totalorder %v435, 1
      %vm468 = vcmp.eq.s32.totalorder %v436, 1
      %vm469 = vcmp.eq.s32.totalorder %v437, 1
      %vm470 = vcmp.eq.s32.totalorder %v438, 1
      %v471 = vsel %vm439, %v215, 0.0
      %v472 = vsel %vm440, %v216, 0.0
      %v473 = vsel %vm441, %v217, 0.0
      %v474 = vsel %vm442, %v218, 0.0
      %v475 = vsel %vm443, %v219, 0.0
      %v476 = vsel %vm444, %v220, 0.0
      %v477 = vsel %vm445, %v221, 0.0
      %v478 = vsel %vm446, %v222, 0.0
      %v479 = vsel %vm447, %v223, 0.0
      %v480 = vsel %vm448, %v224, 0.0
      %v481 = vsel %vm449, %v225, 0.0
      %v482 = vsel %vm450, %v226, 0.0
      %v483 = vsel %vm451, %v227, 0.0
      %v484 = vsel %vm452, %v228, 0.0
      %v485 = vsel %vm453, %v229, 0.0
      %v486 = vsel %vm454, %v230, 0.0
      %v487 = vsel %vm455, %v231, 0.0
      %v488 = vsel %vm456, %v232, 0.0
      %v489 = vsel %vm457, %v233, 0.0
      %v490 = vsel %vm458, %v234, 0.0
      %v491 = vsel %vm459, %v235, 0.0
      %v492 = vsel %vm460, %v236, 0.0
      %v493 = vsel %vm461, %v237, 0.0
      %v494 = vsel %vm462, %v238, 0.0
      %v495 = vsel %vm463, %v239, 0.0
      %v496 = vsel %vm464, %v240, 0.0
      %v497 = vsel %vm465, %v241, 0.0
      %v498 = vsel %vm466, %v242, 0.0
      %v499 = vsel %vm467, %v243, 0.0
      %v500 = vsel %vm468, %v244, 0.0
      %v501 = vsel %vm469, %v245, 0.0
      %v502 = vsel %vm470, %v246, 0.0
      %503 = vst [vmem:[#allocation2 + $0x8] sm:$0xff] %v343
      %504 = vst [vmem:[#allocation2 + $0x10] sm:$0xff] %v344
      %505 = vst [vmem:[#allocation2 + $0x18] sm:$0xff] %v345
      %506 = vst [vmem:[#allocation2 + $0x20] sm:$0xff] %v346
      %507 = vst [vmem:[#allocation2 + $0x28] sm:$0xff] %v347
      %508 = vst [vmem:[#allocation2 + $0x30] sm:$0xff] %v348
      %509 = vst [vmem:[#allocation2 + $0x38] sm:$0xff] %v349
      %510 = vst [vmem:[#allocation2 + $0x40] sm:$0xff] %v350
      %511 = vst [vmem:[#allocation2 + $0x48] sm:$0xff] %v351
      %512 = vst [vmem:[#allocation2 + $0x50] sm:$0xff] %v352
      %513 = vst [vmem:[#allocation2 + $0x58] sm:$0xff] %v353
      %514 = vst [vmem:[#allocation2 + $0x60] sm:$0xff] %v354
      %515 = vst [vmem:[#allocation2 + $0x68] sm:$0xff] %v355
      %516 = vst [vmem:[#allocation2 + $0x70] sm:$0xff] %v356
      %517 = vst [vmem:[#allocation2 + $0x78] sm:$0xff] %v357
      %518 = vst [vmem:[#allocation2 + $0x80] sm:$0xff] %v358
      %519 = vst [vmem:[#allocation2 + $0x88] sm:$0xff] %v359
      %520 = vst [vmem:[#allocation2 + $0x90] sm:$0xff] %v360
      %521 = vst [vmem:[#allocation2 + $0x98] sm:$0xff] %v361
      %522 = vst [vmem:[#allocation2 + $0xa0] sm:$0xff] %v362
      %523 = vst [vmem:[#allocation2 + $0xa8] sm:$0xff] %v363
      %524 = vst [vmem:[#allocation2 + $0xb0] sm:$0xff] %v364
      %525 = vst [vmem:[#allocation2 + $0xb8] sm:$0xff] %v365
      %526 = vst [vmem:[#allocation2 + $0xc0] sm:$0xff] %v366
      %527 = vst [vmem:[#allocation2 + $0xc8] sm:$0xff] %v367
      %528 = vst [vmem:[#allocation2 + $0xd0] sm:$0xff] %v368
      %529 = vst [vmem:[#allocation2 + $0xd8] sm:$0xff] %v369
      %530 = vst [vmem:[#allocation2 + $0xe0] sm:$0xff] %v370
      %531 = vst [vmem:[#allocation2 + $0xe8] sm:$0xff] %v371
      %532 = vst [vmem:[#allocation2 + $0xf0] sm:$0xff] %v372
      %533 = vst [vmem:[#allocation2 + $0xf8] sm:$0xff] %v373
      %534 = vst [vmem:[#allocation2 + $0x100] sm:$0xff] %v374
      %535 = vst [vmem:[#allocation2 + $0x118] sm:$0xff] %v215
      %536 = vst [vmem:[#allocation2 + $0x120] sm:$0xff] %v216
      %537 = vst [vmem:[#allocation2 + $0x128] sm:$0xff] %v217
      %538 = vst [vmem:[#allocation2 + $0x130] sm:$0xff] %v218
      %539 = vst [vmem:[#allocation2 + $0x138] sm:$0xff] %v219
      %540 = vst [vmem:[#allocation2 + $0x140] sm:$0xff] %v220
      %541 = vst [vmem:[#allocation2 + $0x148] sm:$0xff] %v221
      %542 = vst [vmem:[#allocation2 + $0x150] sm:$0xff] %v222
      %543 = vst [vmem:[#allocation2 + $0x158] sm:$0xff] %v223
      %544 = vst [vmem:[#allocation2 + $0x160] sm:$0xff] %v224
      %545 = vst [vmem:[#allocation2 + $0x168] sm:$0xff] %v225
      %546 = vst [vmem:[#allocation2 + $0x170] sm:$0xff] %v226
      %547 = vst [vmem:[#allocation2 + $0x178] sm:$0xff] %v227
      %548 = vst [vmem:[#allocation2 + $0x180] sm:$0xff] %v228
      %549 = vst [vmem:[#allocation2 + $0x188] sm:$0xff] %v229
      %550 = vst [vmem:[#allocation2 + $0x190] sm:$0xff] %v230
      %551 = vst [vmem:[#allocation2 + $0x198] sm:$0xff] %v231
      %552 = vst [vmem:[#allocation2 + $0x1a0] sm:$0xff] %v232
      %553 = vst [vmem:[#allocation2 + $0x1a8] sm:$0xff] %v233
      %554 = vst [vmem:[#allocation2 + $0x1b0] sm:$0xff] %v234
      %555 = vst [vmem:[#allocation2 + $0x1b8] sm:$0xff] %v235
      %556 = vst [vmem:[#allocation2 + $0x1c0] sm:$0xff] %v236
      %557 = vst [vmem:[#allocation2 + $0x1c8] sm:$0xff] %v237
      %558 = vst [vmem:[#allocation2 + $0x1d0] sm:$0xff] %v238
      %559 = vst [vmem:[#allocation2 + $0x1d8] sm:$0xff] %v239
      %560 = vst [vmem:[#allocation2 + $0x1e0] sm:$0xff] %v240
      %561 = vst [vmem:[#allocation2 + $0x1e8] sm:$0xff] %v241
      %562 = vst [vmem:[#allocation2 + $0x1f0] sm:$0xff] %v242
      %563 = vst [vmem:[#allocation2 + $0x1f8] sm:$0xff] %v243
      %564 = vst [vmem:[#allocation2 + $0x200] sm:$0xff] %v244
      %565 = vst [vmem:[#allocation2 + $0x208] sm:$0xff] %v245
      %566 = vst [vmem:[#allocation2 + $0x210] sm:$0xff] %v246
      %567 = vst [vmem:[#allocation2 + $0x228] sm:$0xff] %v471
      %568 = vst [vmem:[#allocation2 + $0x230] sm:$0xff] %v472
      %569 = vst [vmem:[#allocation2 + $0x238] sm:$0xff] %v473
      %570 = vst [vmem:[#allocation2 + $0x240] sm:$0xff] %v474
      %571 = vst [vmem:[#allocation2 + $0x248] sm:$0xff] %v475
      %572 = vst [vmem:[#allocation2 + $0x250] sm:$0xff] %v476
      %573 = vst [vmem:[#allocation2 + $0x258] sm:$0xff] %v477
      %574 = vst [vmem:[#allocation2 + $0x260] sm:$0xff] %v478
      %575 = vst [vmem:[#allocation2 + $0x268] sm:$0xff] %v479
      %576 = vst [vmem:[#allocation2 + $0x270] sm:$0xff] %v480
      %577 = vst [vmem:[#allocation2 + $0x278] sm:$0xff] %v481
      %578 = vst [vmem:[#allocation2 + $0x280] sm:$0xff] %v482
      %579 = vst [vmem:[#allocation2 + $0x288] sm:$0xff] %v483
      %580 = vst [vmem:[#allocation2 + $0x290] sm:$0xff] %v484
      %581 = vst [vmem:[#allocation2 + $0x298] sm:$0xff] %v485
      %582 = vst [vmem:[#allocation2 + $0x2a0] sm:$0xff] %v486
      %583 = vst [vmem:[#allocation2 + $0x2a8] sm:$0xff] %v487
      %584 = vst [vmem:[#allocation2 + $0x2b0] sm:$0xff] %v488
      %585 = vst [vmem:[#allocation2 + $0x2b8] sm:$0xff] %v489
      %586 = vst [vmem:[#allocation2 + $0x2c0] sm:$0xff] %v490
      %587 = vst [vmem:[#allocation2 + $0x2c8] sm:$0xff] %v491
      %588 = vst [vmem:[#allocation2 + $0x2d0] sm:$0xff] %v492
      %589 = vst [vmem:[#allocation2 + $0x2d8] sm:$0xff] %v493
      %590 = vst [vmem:[#allocation2 + $0x2e0] sm:$0xff] %v494
      %591 = vst [vmem:[#allocation2 + $0x2e8] sm:$0xff] %v495
      %592 = vst [vmem:[#allocation2 + $0x2f0] sm:$0xff] %v496
      %593 = vst [vmem:[#allocation2 + $0x2f8] sm:$0xff] %v497
      %594 = vst [vmem:[#allocation2 + $0x300] sm:$0xff] %v498
      %595 = vst [vmem:[#allocation2 + $0x308] sm:$0xff] %v499
      %596 = vst [vmem:[#allocation2 + $0x310] sm:$0xff] %v500
      %597 = vst [vmem:[#allocation2 + $0x318] sm:$0xff] %v501
      %598 = vst [vmem:[#allocation2 + $0x320] sm:$0xff] %v502
      %v599 = vld [vmem:[#allocation2] sm:$0xff]
      %v600 = vld [vmem:[#allocation2 + $0x8] sm:$0xff]
      %v601 = vld [vmem:[#allocation2 + $0x10] sm:$0xff]
      %v602 = vld [vmem:[#allocation2 + $0x18] sm:$0xff]
      %v603 = vld [vmem:[#allocation2 + $0x20] sm:$0xff]
      %v604 = vld [vmem:[#allocation2 + $0x28] sm:$0xff]
      %v605 = vld [vmem:[#allocation2 + $0x30] sm:$0xff]
      %v606 = vld [vmem:[#allocation2 + $0x38] sm:$0xff]
      %v607 = vld [vmem:[#allocation2 + $0x40] sm:$0xff]
      %v608 = vld [vmem:[#allocation2 + $0x48] sm:$0xff]
      %v609 = vld [vmem:[#allocation2 + $0x50] sm:$0xff]
      %v610 = vld [vmem:[#allocation2 + $0x58] sm:$0xff]
      %v611 = vld [vmem:[#allocation2 + $0x60] sm:$0xff]
      %v612 = vld [vmem:[#allocation2 + $0x68] sm:$0xff]
      %v613 = vld [vmem:[#allocation2 + $0x70] sm:$0xff]
      %v614 = vld [vmem:[#allocation2 + $0x78] sm:$0xff]
      %v615 = vld [vmem:[#allocation2 + $0x80] sm:$0xff]
      %v616 = vld [vmem:[#allocation2 + $0x88] sm:$0xff]
      %v617 = vld [vmem:[#allocation2 + $0x90] sm:$0xff]
      %v618 = vld [vmem:[#allocation2 + $0x98] sm:$0xff]
      %v619 = vld [vmem:[#allocation2 + $0xa0] sm:$0xff]
      %v620 = vld [vmem:[#allocation2 + $0xa8] sm:$0xff]
      %v621 = vld [vmem:[#allocation2 + $0xb0] sm:$0xff]
      %v622 = vld [vmem:[#allocation2 + $0xb8] sm:$0xff]
      %v623 = vld [vmem:[#allocation2 + $0xc0] sm:$0xff]
      %v624 = vld [vmem:[#allocation2 + $0xc8] sm:$0xff]
      %v625 = vld [vmem:[#allocation2 + $0xd0] sm:$0xff]
      %v626 = vld [vmem:[#allocation2 + $0xd8] sm:$0xff]
      %v627 = vld [vmem:[#allocation2 + $0xe0] sm:$0xff]
      %v628 = vld [vmem:[#allocation2 + $0xe8] sm:$0xff]
      %v629 = vld [vmem:[#allocation2 + $0xf0] sm:$0xff]
      %v630 = vld [vmem:[#allocation2 + $0xf8] sm:$0xff]
      %v631 = vld [vmem:[#allocation2 + $0x100] sm:$0xff]
      %665 = vrot.lane.b32.xlu0 %v599, 65
      %v666 = vpop.permute.xlu0 %665
      %667 = vrot.lane.b32.xlu0 %v600, 65
      %v668 = vpop.permute.xlu0 %667
      %669 = vrot.lane.b32.xlu0 %v601, 65
      %v670 = vpop.permute.xlu0 %669
      %671 = vrot.lane.b32.xlu0 %v602, 65
      %v672 = vpop.permute.xlu0 %671
      %673 = vrot.lane.b32.xlu0 %v603, 65
      %v674 = vpop.permute.xlu0 %673
      %675 = vrot.lane.b32.xlu0 %v604, 65
      %v676 = vpop.permute.xlu0 %675
      %677 = vrot.lane.b32.xlu0 %v605, 65
      %v678 = vpop.permute.xlu0 %677
      %679 = vrot.lane.b32.xlu0 %v606, 65
      %v680 = vpop.permute.xlu0 %679
      %681 = vrot.lane.b32.xlu0 %v607, 65
      %v682 = vpop.permute.xlu0 %681
      %683 = vrot.lane.b32.xlu0 %v608, 65
      %v684 = vpop.permute.xlu0 %683
      %685 = vrot.lane.b32.xlu0 %v609, 65
      %v686 = vpop.permute.xlu0 %685
      %687 = vrot.lane.b32.xlu0 %v610, 65
      %v688 = vpop.permute.xlu0 %687
      %689 = vrot.lane.b32.xlu0 %v611, 65
      %v690 = vpop.permute.xlu0 %689
      %691 = vrot.lane.b32.xlu0 %v612, 65
      %v692 = vpop.permute.xlu0 %691
      %693 = vrot.lane.b32.xlu0 %v613, 65
      %v694 = vpop.permute.xlu0 %693
      %695 = vrot.lane.b32.xlu0 %v614, 65
      %v696 = vpop.permute.xlu0 %695
      %697 = vrot.lane.b32.xlu0 %v615, 65
      %v698 = vpop.permute.xlu0 %697
      %699 = vrot.lane.b32.xlu0 %v616, 65
      %v700 = vpop.permute.xlu0 %699
      %701 = vrot.lane.b32.xlu0 %v617, 65
      %v702 = vpop.permute.xlu0 %701
      %703 = vrot.lane.b32.xlu0 %v618, 65
      %v704 = vpop.permute.xlu0 %703
      %705 = vrot.lane.b32.xlu0 %v619, 65
      %v706 = vpop.permute.xlu0 %705
      %707 = vrot.lane.b32.xlu0 %v620, 65
      %v708 = vpop.permute.xlu0 %707
      %709 = vrot.lane.b32.xlu0 %v621, 65
      %v710 = vpop.permute.xlu0 %709
      %711 = vrot.lane.b32.xlu0 %v622, 65
      %v712 = vpop.permute.xlu0 %711
      %713 = vrot.lane.b32.xlu0 %v623, 65
      %v714 = vpop.permute.xlu0 %713
      %715 = vrot.lane.b32.xlu0 %v624, 65
      %v716 = vpop.permute.xlu0 %715
      %717 = vrot.lane.b32.xlu0 %v625, 65
      %v718 = vpop.permute.xlu0 %717
      %719 = vrot.lane.b32.xlu0 %v626, 65
      %v720 = vpop.permute.xlu0 %719
      %721 = vrot.lane.b32.xlu0 %v627, 65
      %v722 = vpop.permute.xlu0 %721
      %723 = vrot.lane.b32.xlu0 %v628, 65
      %v724 = vpop.permute.xlu0 %723
      %725 = vrot.lane.b32.xlu0 %v629, 65
      %v726 = vpop.permute.xlu0 %725
      %727 = vrot.lane.b32.xlu0 %v630, 65
      %v728 = vpop.permute.xlu0 %727
      %729 = vrot.lane.b32.xlu0 %v631, 65
      %v730 = vpop.permute.xlu0 %729
      %vm731 = vcmask 531456
      %v732 = vsel %vm731, %v666, %v668
      %v733 = vsel %vm731, %v668, %v670
      %v734 = vsel %vm731, %v670, %v672
      %v735 = vsel %vm731, %v672, %v674
      %v736 = vsel %vm731, %v674, %v676
      %v737 = vsel %vm731, %v676, %v678
      %v738 = vsel %vm731, %v678, %v680
      %v739 = vsel %vm731, %v680, %v682
      %v740 = vsel %vm731, %v682, %v684
      %v741 = vsel %vm731, %v684, %v686
      %v742 = vsel %vm731, %v686, %v688
      %v743 = vsel %vm731, %v688, %v690
      %v744 = vsel %vm731, %v690, %v692
      %v745 = vsel %vm731, %v692, %v694
      %v746 = vsel %vm731, %v694, %v696
      %v747 = vsel %vm731, %v696, %v698
      %v748 = vsel %vm731, %v698, %v700
      %v749 = vsel %vm731, %v700, %v702
      %v750 = vsel %vm731, %v702, %v704
      %v751 = vsel %vm731, %v704, %v706
      %v752 = vsel %vm731, %v706, %v708
      %v753 = vsel %vm731, %v708, %v710
      %v754 = vsel %vm731, %v710, %v712
      %v755 = vsel %vm731, %v712, %v714
      %v756 = vsel %vm731, %v714, %v716
      %v757 = vsel %vm731, %v716, %v718
      %v758 = vsel %vm731, %v718, %v720
      %v759 = vsel %vm731, %v720, %v722
      %v760 = vsel %vm731, %v722, %v724
      %v761 = vsel %vm731, %v724, %v726
      %v762 = vsel %vm731, %v726, %v728
      %v763 = vsel %vm731, %v728, %v730
      %796 = vst [vmem:[#allocation3] sm:$0xff] %v732
      %797 = vst [vmem:[#allocation3 + $0x8] sm:$0xff] %v733
      %798 = vst [vmem:[#allocation3 + $0x10] sm:$0xff] %v734
      %799 = vst [vmem:[#allocation3 + $0x18] sm:$0xff] %v735
      %800 = vst [vmem:[#allocation3 + $0x20] sm:$0xff] %v736
      %801 = vst [vmem:[#allocation3 + $0x28] sm:$0xff] %v737
      %802 = vst [vmem:[#allocation3 + $0x30] sm:$0xff] %v738
      %803 = vst [vmem:[#allocation3 + $0x38] sm:$0xff] %v739
      %804 = vst [vmem:[#allocation3 + $0x40] sm:$0xff] %v740
      %805 = vst [vmem:[#allocation3 + $0x48] sm:$0xff] %v741
      %806 = vst [vmem:[#allocation3 + $0x50] sm:$0xff] %v742
      %807 = vst [vmem:[#allocation3 + $0x58] sm:$0xff] %v743
      %808 = vst [vmem:[#allocation3 + $0x60] sm:$0xff] %v744
      %809 = vst [vmem:[#allocation3 + $0x68] sm:$0xff] %v745
      %810 = vst [vmem:[#allocation3 + $0x70] sm:$0xff] %v746
      %811 = vst [vmem:[#allocation3 + $0x78] sm:$0xff] %v747
      %812 = vst [vmem:[#allocation3 + $0x80] sm:$0xff] %v748
      %813 = vst [vmem:[#allocation3 + $0x88] sm:$0xff] %v749
      %814 = vst [vmem:[#allocation3 + $0x90] sm:$0xff] %v750
      %815 = vst [vmem:[#allocation3 + $0x98] sm:$0xff] %v751
      %816 = vst [vmem:[#allocation3 + $0xa0] sm:$0xff] %v752
      %817 = vst [vmem:[#allocation3 + $0xa8] sm:$0xff] %v753
      %818 = vst [vmem:[#allocation3 + $0xb0] sm:$0xff] %v754
      %819 = vst [vmem:[#allocation3 + $0xb8] sm:$0xff] %v755
      %820 = vst [vmem:[#allocation3 + $0xc0] sm:$0xff] %v756
      %821 = vst [vmem:[#allocation3 + $0xc8] sm:$0xff] %v757
      %822 = vst [vmem:[#allocation3 + $0xd0] sm:$0xff] %v758
      %823 = vst [vmem:[#allocation3 + $0xd8] sm:$0xff] %v759
      %824 = vst [vmem:[#allocation3 + $0xe0] sm:$0xff] %v760
      %825 = vst [vmem:[#allocation3 + $0xe8] sm:$0xff] %v761
      %826 = vst [vmem:[#allocation3 + $0xf0] sm:$0xff] %v762
      %827 = vst [vmem:[#allocation3 + $0xf8] sm:$0xff] %v763
      %v828 = vld [vmem:[#allocation2 + $0x110] sm:$0xff]
      %v829 = vld [vmem:[#allocation2 + $0x118] sm:$0xff]
      %v830 = vld [vmem:[#allocation2 + $0x120] sm:$0xff]
      %v831 = vld [vmem:[#allocation2 + $0x128] sm:$0xff]
      %v832 = vld [vmem:[#allocation2 + $0x130] sm:$0xff]
      %v833 = vld [vmem:[#allocation2 + $0x138] sm:$0xff]
      %v834 = vld [vmem:[#allocation2 + $0x140] sm:$0xff]
      %v835 = vld [vmem:[#allocation2 + $0x148] sm:$0xff]
      %v836 = vld [vmem:[#allocation2 + $0x150] sm:$0xff]
      %v837 = vld [vmem:[#allocation2 + $0x158] sm:$0xff]
      %v838 = vld [vmem:[#allocation2 + $0x160] sm:$0xff]
      %v839 = vld [vmem:[#allocation2 + $0x168] sm:$0xff]
      %v840 = vld [vmem:[#allocation2 + $0x170] sm:$0xff]
      %v841 = vld [vmem:[#allocation2 + $0x178] sm:$0xff]
      %v842 = vld [vmem:[#allocation2 + $0x180] sm:$0xff]
      %v843 = vld [vmem:[#allocation2 + $0x188] sm:$0xff]
      %v844 = vld [vmem:[#allocation2 + $0x190] sm:$0xff]
      %v845 = vld [vmem:[#allocation2 + $0x198] sm:$0xff]
      %v846 = vld [vmem:[#allocation2 + $0x1a0] sm:$0xff]
      %v847 = vld [vmem:[#allocation2 + $0x1a8] sm:$0xff]
      %v848 = vld [vmem:[#allocation2 + $0x1b0] sm:$0xff]
      %v849 = vld [vmem:[#allocation2 + $0x1b8] sm:$0xff]
      %v850 = vld [vmem:[#allocation2 + $0x1c0] sm:$0xff]
      %v851 = vld [vmem:[#allocation2 + $0x1c8] sm:$0xff]
      %v852 = vld [vmem:[#allocation2 + $0x1d0] sm:$0xff]
      %v853 = vld [vmem:[#allocation2 + $0x1d8] sm:$0xff]
      %v854 = vld [vmem:[#allocation2 + $0x1e0] sm:$0xff]
      %v855 = vld [vmem:[#allocation2 + $0x1e8] sm:$0xff]
      %v856 = vld [vmem:[#allocation2 + $0x1f0] sm:$0xff]
      %v857 = vld [vmem:[#allocation2 + $0x1f8] sm:$0xff]
      %v858 = vld [vmem:[#allocation2 + $0x200] sm:$0xff]
      %v859 = vld [vmem:[#allocation2 + $0x208] sm:$0xff]
      %v860 = vld [vmem:[#allocation2 + $0x210] sm:$0xff]
      %894 = vrot.lane.b32.xlu0 %v828, 64
      %v895 = vpop.permute.xlu0 %894
      %896 = vrot.lane.b32.xlu0 %v829, 64
      %v897 = vpop.permute.xlu0 %896
      %898 = vrot.lane.b32.xlu0 %v830, 64
      %v899 = vpop.permute.xlu0 %898
      %900 = vrot.lane.b32.xlu0 %v831, 64
      %v901 = vpop.permute.xlu0 %900
      %902 = vrot.lane.b32.xlu0 %v832, 64
      %v903 = vpop.permute.xlu0 %902
      %904 = vrot.lane.b32.xlu0 %v833, 64
      %v905 = vpop.permute.xlu0 %904
      %906 = vrot.lane.b32.xlu0 %v834, 64
      %v907 = vpop.permute.xlu0 %906
      %908 = vrot.lane.b32.xlu0 %v835, 64
      %v909 = vpop.permute.xlu0 %908
      %910 = vrot.lane.b32.xlu0 %v836, 64
      %v911 = vpop.permute.xlu0 %910
      %912 = vrot.lane.b32.xlu0 %v837, 64
      %v913 = vpop.permute.xlu0 %912
      %914 = vrot.lane.b32.xlu0 %v838, 64
      %v915 = vpop.permute.xlu0 %914
      %916 = vrot.lane.b32.xlu0 %v839, 64
      %v917 = vpop.permute.xlu0 %916
      %918 = vrot.lane.b32.xlu0 %v840, 64
      %v919 = vpop.permute.xlu0 %918
      %920 = vrot.lane.b32.xlu0 %v841, 64
      %v921 = vpop.permute.xlu0 %920
      %922 = vrot.lane.b32.xlu0 %v842, 64
      %v923 = vpop.permute.xlu0 %922
      %924 = vrot.lane.b32.xlu0 %v843, 64
      %v925 = vpop.permute.xlu0 %924
      %926 = vrot.lane.b32.xlu0 %v844, 64
      %v927 = vpop.permute.xlu0 %926
      %928 = vrot.lane.b32.xlu0 %v845, 64
      %v929 = vpop.permute.xlu0 %928
      %930 = vrot.lane.b32.xlu0 %v846, 64
      %v931 = vpop.permute.xlu0 %930
      %932 = vrot.lane.b32.xlu0 %v847, 64
      %v933 = vpop.permute.xlu0 %932
      %934 = vrot.lane.b32.xlu0 %v848, 64
      %v935 = vpop.permute.xlu0 %934
      %936 = vrot.lane.b32.xlu0 %v849, 64
      %v937 = vpop.permute.xlu0 %936
      %938 = vrot.lane.b32.xlu0 %v850, 64
      %v939 = vpop.permute.xlu0 %938
      %940 = vrot.lane.b32.xlu0 %v851, 64
      %v941 = vpop.permute.xlu0 %940
      %942 = vrot.lane.b32.xlu0 %v852, 64
      %v943 = vpop.permute.xlu0 %942
      %944 = vrot.lane.b32.xlu0 %v853, 64
      %v945 = vpop.permute.xlu0 %944
      %946 = vrot.lane.b32.xlu0 %v854, 64
      %v947 = vpop.permute.xlu0 %946
      %948 = vrot.lane.b32.xlu0 %v855, 64
      %v949 = vpop.permute.xlu0 %948
      %950 = vrot.lane.b32.xlu0 %v856, 64
      %v951 = vpop.permute.xlu0 %950
      %952 = vrot.lane.b32.xlu0 %v857, 64
      %v953 = vpop.permute.xlu0 %952
      %954 = vrot.lane.b32.xlu0 %v858, 64
      %v955 = vpop.permute.xlu0 %954
      %956 = vrot.lane.b32.xlu0 %v859, 64
      %v957 = vpop.permute.xlu0 %956
      %958 = vrot.lane.b32.xlu0 %v860, 64
      %v959 = vpop.permute.xlu0 %958
      %vm960 = vcmask 523264
      %v961 = vsel %vm960, %v895, %v897
      %v962 = vsel %vm960, %v897, %v899
      %v963 = vsel %vm960, %v899, %v901
      %v964 = vsel %vm960, %v901, %v903
      %v965 = vsel %vm960, %v903, %v905
      %v966 = vsel %vm960, %v905, %v907
      %v967 = vsel %vm960, %v907, %v909
      %v968 = vsel %vm960, %v909, %v911
      %v969 = vsel %vm960, %v911, %v913
      %v970 = vsel %vm960, %v913, %v915
      %v971 = vsel %vm960, %v915, %v917
      %v972 = vsel %vm960, %v917, %v919
      %v973 = vsel %vm960, %v919, %v921
      %v974 = vsel %vm960, %v921, %v923
      %v975 = vsel %vm960, %v923, %v925
      %v976 = vsel %vm960, %v925, %v927
      %v977 = vsel %vm960, %v927, %v929
      %v978 = vsel %vm960, %v929, %v931
      %v979 = vsel %vm960, %v931, %v933
      %v980 = vsel %vm960, %v933, %v935
      %v981 = vsel %vm960, %v935, %v937
      %v982 = vsel %vm960, %v937, %v939
      %v983 = vsel %vm960, %v939, %v941
      %v984 = vsel %vm960, %v941, %v943
      %v985 = vsel %vm960, %v943, %v945
      %v986 = vsel %vm960, %v945, %v947
      %v987 = vsel %vm960, %v947, %v949
      %v988 = vsel %vm960, %v949, %v951
      %v989 = vsel %vm960, %v951, %v953
      %v990 = vsel %vm960, %v953, %v955
      %v991 = vsel %vm960, %v955, %v957
      %v992 = vsel %vm960, %v957, %v959
      %1025 = vst [vmem:[#allocation3 + $0x100] sm:$0xff] %v961
      %1026 = vst [vmem:[#allocation3 + $0x108] sm:$0xff] %v962
      %1027 = vst [vmem:[#allocation3 + $0x110] sm:$0xff] %v963
      %1028 = vst [vmem:[#allocation3 + $0x118] sm:$0xff] %v964
      %1029 = vst [vmem:[#allocation3 + $0x120] sm:$0xff] %v965
      %1030 = vst [vmem:[#allocation3 + $0x128] sm:$0xff] %v966
      %1031 = vst [vmem:[#allocation3 + $0x130] sm:$0xff] %v967
      %1032 = vst [vmem:[#allocation3 + $0x138] sm:$0xff] %v968
      %1033 = vst [vmem:[#allocation3 + $0x140] sm:$0xff] %v969
      %1034 = vst [vmem:[#allocation3 + $0x148] sm:$0xff] %v970
      %1035 = vst [vmem:[#allocation3 + $0x150] sm:$0xff] %v971
      %1036 = vst [vmem:[#allocation3 + $0x158] sm:$0xff] %v972
      %1037 = vst [vmem:[#allocation3 + $0x160] sm:$0xff] %v973
      %1038 = vst [vmem:[#allocation3 + $0x168] sm:$0xff] %v974
      %1039 = vst [vmem:[#allocation3 + $0x170] sm:$0xff] %v975
      %1040 = vst [vmem:[#allocation3 + $0x178] sm:$0xff] %v976
      %1041 = vst [vmem:[#allocation3 + $0x180] sm:$0xff] %v977
      %1042 = vst [vmem:[#allocation3 + $0x188] sm:$0xff] %v978
      %1043 = vst [vmem:[#allocation3 + $0x190] sm:$0xff] %v979
      %1044 = vst [vmem:[#allocation3 + $0x198] sm:$0xff] %v980
      %1045 = vst [vmem:[#allocation3 + $0x1a0] sm:$0xff] %v981
      %1046 = vst [vmem:[#allocation3 + $0x1a8] sm:$0xff] %v982
      %1047 = vst [vmem:[#allocation3 + $0x1b0] sm:$0xff] %v983
      %1048 = vst [vmem:[#allocation3 + $0x1b8] sm:$0xff] %v984
      %1049 = vst [vmem:[#allocation3 + $0x1c0] sm:$0xff] %v985
      %1050 = vst [vmem:[#allocation3 + $0x1c8] sm:$0xff] %v986
      %1051 = vst [vmem:[#allocation3 + $0x1d0] sm:$0xff] %v987
      %1052 = vst [vmem:[#allocation3 + $0x1d8] sm:$0xff] %v988
      %1053 = vst [vmem:[#allocation3 + $0x1e0] sm:$0xff] %v989
      %1054 = vst [vmem:[#allocation3 + $0x1e8] sm:$0xff] %v990
      %1055 = vst [vmem:[#allocation3 + $0x1f0] sm:$0xff] %v991
      %1056 = vst [vmem:[#allocation3 + $0x1f8] sm:$0xff] %v992
      %v1057 = vld [vmem:[#allocation2 + $0x220] sm:$0xff]
      %v1058 = vld [vmem:[#allocation2 + $0x228] sm:$0xff]
      %v1059 = vld [vmem:[#allocation2 + $0x230] sm:$0xff]
      %v1060 = vld [vmem:[#allocation2 + $0x238] sm:$0xff]
      %v1061 = vld [vmem:[#allocation2 + $0x240] sm:$0xff]
      %v1062 = vld [vmem:[#allocation2 + $0x248] sm:$0xff]
      %v1063 = vld [vmem:[#allocation2 + $0x250] sm:$0xff]
      %v1064 = vld [vmem:[#allocation2 + $0x258] sm:$0xff]
      %v1065 = vld [vmem:[#allocation2 + $0x260] sm:$0xff]
      %v1066 = vld [vmem:[#allocation2 + $0x268] sm:$0xff]
      %v1067 = vld [vmem:[#allocation2 + $0x270] sm:$0xff]
      %v1068 = vld [vmem:[#allocation2 + $0x278] sm:$0xff]
      %v1069 = vld [vmem:[#allocation2 + $0x280] sm:$0xff]
      %v1070 = vld [vmem:[#allocation2 + $0x288] sm:$0xff]
      %v1071 = vld [vmem:[#allocation2 + $0x290] sm:$0xff]
      %v1072 = vld [vmem:[#allocation2 + $0x298] sm:$0xff]
      %v1073 = vld [vmem:[#allocation2 + $0x2a0] sm:$0xff]
      %v1074 = vld [vmem:[#allocation2 + $0x2a8] sm:$0xff]
      %v1075 = vld [vmem:[#allocation2 + $0x2b0] sm:$0xff]
      %v1076 = vld [vmem:[#allocation2 + $0x2b8] sm:$0xff]
      %v1077 = vld [vmem:[#allocation2 + $0x2c0] sm:$0xff]
      %v1078 = vld [vmem:[#allocation2 + $0x2c8] sm:$0xff]
      %v1079 = vld [vmem:[#allocation2 + $0x2d0] sm:$0xff]
      %v1080 = vld [vmem:[#allocation2 + $0x2d8] sm:$0xff]
      %v1081 = vld [vmem:[#allocation2 + $0x2e0] sm:$0xff]
      %v1082 = vld [vmem:[#allocation2 + $0x2e8] sm:$0xff]
      %v1083 = vld [vmem:[#allocation2 + $0x2f0] sm:$0xff]
      %v1084 = vld [vmem:[#allocation2 + $0x2f8] sm:$0xff]
      %v1085 = vld [vmem:[#allocation2 + $0x300] sm:$0xff]
      %v1086 = vld [vmem:[#allocation2 + $0x308] sm:$0xff]
      %v1087 = vld [vmem:[#allocation2 + $0x310] sm:$0xff]
      %v1088 = vld [vmem:[#allocation2 + $0x318] sm:$0xff]
      %v1089 = vld [vmem:[#allocation2 + $0x320] sm:$0xff]
      %1123 = vrot.lane.b32.xlu0 %v1057, 63
      %v1124 = vpop.permute.xlu0 %1123
      %1125 = vrot.lane.b32.xlu0 %v1058, 63
      %v1126 = vpop.permute.xlu0 %1125
      %1127 = vrot.lane.b32.xlu0 %v1059, 63
      %v1128 = vpop.permute.xlu0 %1127
      %1129 = vrot.lane.b32.xlu0 %v1060, 63
      %v1130 = vpop.permute.xlu0 %1129
      %1131 = vrot.lane.b32.xlu0 %v1061, 63
      %v1132 = vpop.permute.xlu0 %1131
      %1133 = vrot.lane.b32.xlu0 %v1062, 63
      %v1134 = vpop.permute.xlu0 %1133
      %1135 = vrot.lane.b32.xlu0 %v1063, 63
      %v1136 = vpop.permute.xlu0 %1135
      %1137 = vrot.lane.b32.xlu0 %v1064, 63
      %v1138 = vpop.permute.xlu0 %1137
      %1139 = vrot.lane.b32.xlu0 %v1065, 63
      %v1140 = vpop.permute.xlu0 %1139
      %1141 = vrot.lane.b32.xlu0 %v1066, 63
      %v1142 = vpop.permute.xlu0 %1141
      %1143 = vrot.lane.b32.xlu0 %v1067, 63
      %v1144 = vpop.permute.xlu0 %1143
      %1145 = vrot.lane.b32.xlu0 %v1068, 63
      %v1146 = vpop.permute.xlu0 %1145
      %1147 = vrot.lane.b32.xlu0 %v1069, 63
      %v1148 = vpop.permute.xlu0 %1147
      %1149 = vrot.lane.b32.xlu0 %v1070, 63
      %v1150 = vpop.permute.xlu0 %1149
      %1151 = vrot.lane.b32.xlu0 %v1071, 63
      %v1152 = vpop.permute.xlu0 %1151
      %1153 = vrot.lane.b32.xlu0 %v1072, 63
      %v1154 = vpop.permute.xlu0 %1153
      %1155 = vrot.lane.b32.xlu0 %v1073, 63
      %v1156 = vpop.permute.xlu0 %1155
      %1157 = vrot.lane.b32.xlu0 %v1074, 63
      %v1158 = vpop.permute.xlu0 %1157
      %1159 = vrot.lane.b32.xlu0 %v1075, 63
      %v1160 = vpop.permute.xlu0 %1159
      %1161 = vrot.lane.b32.xlu0 %v1076, 63
      %v1162 = vpop.permute.xlu0 %1161
      %1163 = vrot.lane.b32.xlu0 %v1077, 63
      %v1164 = vpop.permute.xlu0 %1163
      %1165 = vrot.lane.b32.xlu0 %v1078, 63
      %v1166 = vpop.permute.xlu0 %1165
      %1167 = vrot.lane.b32.xlu0 %v1079, 63
      %v1168 = vpop.permute.xlu0 %1167
      %1169 = vrot.lane.b32.xlu0 %v1080, 63
      %v1170 = vpop.permute.xlu0 %1169
      %1171 = vrot.lane.b32.xlu0 %v1081, 63
      %v1172 = vpop.permute.xlu0 %1171
      %1173 = vrot.lane.b32.xlu0 %v1082, 63
      %v1174 = vpop.permute.xlu0 %1173
      %1175 = vrot.lane.b32.xlu0 %v1083, 63
      %v1176 = vpop.permute.xlu0 %1175
      %1177 = vrot.lane.b32.xlu0 %v1084, 63
      %v1178 = vpop.permute.xlu0 %1177
      %1179 = vrot.lane.b32.xlu0 %v1085, 63
      %v1180 = vpop.permute.xlu0 %1179
      %1181 = vrot.lane.b32.xlu0 %v1086, 63
      %v1182 = vpop.permute.xlu0 %1181
      %1183 = vrot.lane.b32.xlu0 %v1087, 63
      %v1184 = vpop.permute.xlu0 %1183
      %1185 = vrot.lane.b32.xlu0 %v1088, 63
      %v1186 = vpop.permute.xlu0 %1185
      %1187 = vrot.lane.b32.xlu0 %v1089, 63
      %v1188 = vpop.permute.xlu0 %1187
      %vm1189 = vcmask 515072
      %v1190 = vsel %vm1189, %v1124, %v1126
      %v1191 = vsel %vm1189, %v1126, %v1128
      %v1192 = vsel %vm1189, %v1128, %v1130
      %v1193 = vsel %vm1189, %v1130, %v1132
      %v1194 = vsel %vm1189, %v1132, %v1134
      %v1195 = vsel %vm1189, %v1134, %v1136
      %v1196 = vsel %vm1189, %v1136, %v1138
      %v1197 = vsel %vm1189, %v1138, %v1140
      %v1198 = vsel %vm1189, %v1140, %v1142
      %v1199 = vsel %vm1189, %v1142, %v1144
      %v1200 = vsel %vm1189, %v1144, %v1146
      %v1201 = vsel %vm1189, %v1146, %v1148
      %v1202 = vsel %vm1189, %v1148, %v1150
      %v1203 = vsel %vm1189, %v1150, %v1152
      %v1204 = vsel %vm1189, %v1152, %v1154
      %v1205 = vsel %vm1189, %v1154, %v1156
      %v1206 = vsel %vm1189, %v1156, %v1158
      %v1207 = vsel %vm1189, %v1158, %v1160
      %v1208 = vsel %vm1189, %v1160, %v1162
      %v1209 = vsel %vm1189, %v1162, %v1164
      %v1210 = vsel %vm1189, %v1164, %v1166
      %v1211 = vsel %vm1189, %v1166, %v1168
      %v1212 = vsel %vm1189, %v1168, %v1170
      %v1213 = vsel %vm1189, %v1170, %v1172
      %v1214 = vsel %vm1189, %v1172, %v1174
      %v1215 = vsel %vm1189, %v1174, %v1176
      %v1216 = vsel %vm1189, %v1176, %v1178
      %v1217 = vsel %vm1189, %v1178, %v1180
      %v1218 = vsel %vm1189, %v1180, %v1182
      %v1219 = vsel %vm1189, %v1182, %v1184
      %v1220 = vsel %vm1189, %v1184, %v1186
      %v1221 = vsel %vm1189, %v1186, %v1188
      %1254 = vst [vmem:[#allocation3 + $0x200] sm:$0xff] %v1190
      %1255 = vst [vmem:[#allocation3 + $0x208] sm:$0xff] %v1191
      %1256 = vst [vmem:[#allocation3 + $0x210] sm:$0xff] %v1192
      %1257 = vst [vmem:[#allocation3 + $0x218] sm:$0xff] %v1193
      %1258 = vst [vmem:[#allocation3 + $0x220] sm:$0xff] %v1194
      %1259 = vst [vmem:[#allocation3 + $0x228] sm:$0xff] %v1195
      %1260 = vst [vmem:[#allocation3 + $0x230] sm:$0xff] %v1196
      %1261 = vst [vmem:[#allocation3 + $0x238] sm:$0xff] %v1197
      %1262 = vst [vmem:[#allocation3 + $0x240] sm:$0xff] %v1198
      %1263 = vst [vmem:[#allocation3 + $0x248] sm:$0xff] %v1199
      %1264 = vst [vmem:[#allocation3 + $0x250] sm:$0xff] %v1200
      %1265 = vst [vmem:[#allocation3 + $0x258] sm:$0xff] %v1201
      %1266 = vst [vmem:[#allocation3 + $0x260] sm:$0xff] %v1202
      %1267 = vst [vmem:[#allocation3 + $0x268] sm:$0xff] %v1203
      %1268 = vst [vmem:[#allocation3 + $0x270] sm:$0xff] %v1204
      %1269 = vst [vmem:[#allocation3 + $0x278] sm:$0xff] %v1205
      %1270 = vst [vmem:[#allocation3 + $0x280] sm:$0xff] %v1206
      %1271 = vst [vmem:[#allocation3 + $0x288] sm:$0xff] %v1207
      %1272 = vst [vmem:[#allocation3 + $0x290] sm:$0xff] %v1208
      %1273 = vst [vmem:[#allocation3 + $0x298] sm:$0xff] %v1209
      %1274 = vst [vmem:[#allocation3 + $0x2a0] sm:$0xff] %v1210
      %1275 = vst [vmem:[#allocation3 + $0x2a8] sm:$0xff] %v1211
      %1276 = vst [vmem:[#allocation3 + $0x2b0] sm:$0xff] %v1212
      %1277 = vst [vmem:[#allocation3 + $0x2b8] sm:$0xff] %v1213
      %1278 = vst [vmem:[#allocation3 + $0x2c0] sm:$0xff] %v1214
      %1279 = vst [vmem:[#allocation3 + $0x2c8] sm:$0xff] %v1215
      %1280 = vst [vmem:[#allocation3 + $0x2d0] sm:$0xff] %v1216
      %1281 = vst [vmem:[#allocation3 + $0x2d8] sm:$0xff] %v1217
      %1282 = vst [vmem:[#allocation3 + $0x2e0] sm:$0xff] %v1218
      %1283 = vst [vmem:[#allocation3 + $0x2e8] sm:$0xff] %v1219
      %1284 = vst [vmem:[#allocation3 + $0x2f0] sm:$0xff] %v1220
      %1285 = vst [vmem:[#allocation3 + $0x2f8] sm:$0xff] %v1221
      %v1286 = vld [vmem:[#allocation2] sm:$0xff]
      %v1287 = vld [vmem:[#allocation2 + $0x8] sm:$0xff]
      %v1288 = vld [vmem:[#allocation2 + $0x10] sm:$0xff]
      %v1289 = vld [vmem:[#allocation2 + $0x18] sm:$0xff]
      %v1290 = vld [vmem:[#allocation2 + $0x20] sm:$0xff]
      %v1291 = vld [vmem:[#allocation2 + $0x28] sm:$0xff]
      %v1292 = vld [vmem:[#allocation2 + $0x30] sm:$0xff]
      %v1293 = vld [vmem:[#allocation2 + $0x38] sm:$0xff]
      %v1294 = vld [vmem:[#allocation2 + $0x40] sm:$0xff]
      %v1295 = vld [vmem:[#allocation2 + $0x48] sm:$0xff]
      %v1296 = vld [vmem:[#allocation2 + $0x50] sm:$0xff]
      %v1297 = vld [vmem:[#allocation2 + $0x58] sm:$0xff]
      %v1298 = vld [vmem:[#allocation2 + $0x60] sm:$0xff]
      %v1299 = vld [vmem:[#allocation2 + $0x68] sm:$0xff]
      %v1300 = vld [vmem:[#allocation2 + $0x70] sm:$0xff]
      %v1301 = vld [vmem:[#allocation2 + $0x78] sm:$0xff]
      %v1302 = vld [vmem:[#allocation2 + $0x80] sm:$0xff]
      %v1303 = vld [vmem:[#allocation2 + $0x88] sm:$0xff]
      %v1304 = vld [vmem:[#allocation2 + $0x90] sm:$0xff]
      %v1305 = vld [vmem:[#allocation2 + $0x98] sm:$0xff]
      %v1306 = vld [vmem:[#allocation2 + $0xa0] sm:$0xff]
      %v1307 = vld [vmem:[#allocation2 + $0xa8] sm:$0xff]
      %v1308 = vld [vmem:[#allocation2 + $0xb0] sm:$0xff]
      %v1309 = vld [vmem:[#allocation2 + $0xb8] sm:$0xff]
      %v1310 = vld [vmem:[#allocation2 + $0xc0] sm:$0xff]
      %v1311 = vld [vmem:[#allocation2 + $0xc8] sm:$0xff]
      %v1312 = vld [vmem:[#allocation2 + $0xd0] sm:$0xff]
      %v1313 = vld [vmem:[#allocation2 + $0xd8] sm:$0xff]
      %v1314 = vld [vmem:[#allocation2 + $0xe0] sm:$0xff]
      %v1315 = vld [vmem:[#allocation2 + $0xe8] sm:$0xff]
      %v1316 = vld [vmem:[#allocation2 + $0xf0] sm:$0xff]
      %v1317 = vld [vmem:[#allocation2 + $0xf8] sm:$0xff]
      %v1318 = vld [vmem:[#allocation2 + $0x100] sm:$0xff]
      %1352 = vrot.lane.b32.xlu0 %v1286, 1
      %v1353 = vpop.permute.xlu0 %1352
      %1354 = vrot.lane.b32.xlu0 %v1287, 1
      %v1355 = vpop.permute.xlu0 %1354
      %1356 = vrot.lane.b32.xlu0 %v1288, 1
      %v1357 = vpop.permute.xlu0 %1356
      %1358 = vrot.lane.b32.xlu0 %v1289, 1
      %v1359 = vpop.permute.xlu0 %1358
      %1360 = vrot.lane.b32.xlu0 %v1290, 1
      %v1361 = vpop.permute.xlu0 %1360
      %1362 = vrot.lane.b32.xlu0 %v1291, 1
      %v1363 = vpop.permute.xlu0 %1362
      %1364 = vrot.lane.b32.xlu0 %v1292, 1
      %v1365 = vpop.permute.xlu0 %1364
      %1366 = vrot.lane.b32.xlu0 %v1293, 1
      %v1367 = vpop.permute.xlu0 %1366
      %1368 = vrot.lane.b32.xlu0 %v1294, 1
      %v1369 = vpop.permute.xlu0 %1368
      %1370 = vrot.lane.b32.xlu0 %v1295, 1
      %v1371 = vpop.permute.xlu0 %1370
      %1372 = vrot.lane.b32.xlu0 %v1296, 1
      %v1373 = vpop.permute.xlu0 %1372
      %1374 = vrot.lane.b32.xlu0 %v1297, 1
      %v1375 = vpop.permute.xlu0 %1374
      %1376 = vrot.lane.b32.xlu0 %v1298, 1
      %v1377 = vpop.permute.xlu0 %1376
      %1378 = vrot.lane.b32.xlu0 %v1299, 1
      %v1379 = vpop.permute.xlu0 %1378
      %1380 = vrot.lane.b32.xlu0 %v1300, 1
      %v1381 = vpop.permute.xlu0 %1380
      %1382 = vrot.lane.b32.xlu0 %v1301, 1
      %v1383 = vpop.permute.xlu0 %1382
      %1384 = vrot.lane.b32.xlu0 %v1302, 1
      %v1385 = vpop.permute.xlu0 %1384
      %1386 = vrot.lane.b32.xlu0 %v1303, 1
      %v1387 = vpop.permute.xlu0 %1386
      %1388 = vrot.lane.b32.xlu0 %v1304, 1
      %v1389 = vpop.permute.xlu0 %1388
      %1390 = vrot.lane.b32.xlu0 %v1305, 1
      %v1391 = vpop.permute.xlu0 %1390
      %1392 = vrot.lane.b32.xlu0 %v1306, 1
      %v1393 = vpop.permute.xlu0 %1392
      %1394 = vrot.lane.b32.xlu0 %v1307, 1
      %v1395 = vpop.permute.xlu0 %1394
      %1396 = vrot.lane.b32.xlu0 %v1308, 1
      %v1397 = vpop.permute.xlu0 %1396
      %1398 = vrot.lane.b32.xlu0 %v1309, 1
      %v1399 = vpop.permute.xlu0 %1398
      %1400 = vrot.lane.b32.xlu0 %v1310, 1
      %v1401 = vpop.permute.xlu0 %1400
      %1402 = vrot.lane.b32.xlu0 %v1311, 1
      %v1403 = vpop.permute.xlu0 %1402
      %1404 = vrot.lane.b32.xlu0 %v1312, 1
      %v1405 = vpop.permute.xlu0 %1404
      %1406 = vrot.lane.b32.xlu0 %v1313, 1
      %v1407 = vpop.permute.xlu0 %1406
      %1408 = vrot.lane.b32.xlu0 %v1314, 1
      %v1409 = vpop.permute.xlu0 %1408
      %1410 = vrot.lane.b32.xlu0 %v1315, 1
      %v1411 = vpop.permute.xlu0 %1410
      %1412 = vrot.lane.b32.xlu0 %v1316, 1
      %v1413 = vpop.permute.xlu0 %1412
      %1414 = vrot.lane.b32.xlu0 %v1317, 1
      %v1415 = vpop.permute.xlu0 %1414
      %1416 = vrot.lane.b32.xlu0 %v1318, 1
      %v1417 = vpop.permute.xlu0 %1416
      %vm1418 = vcmask 7168
      %v1419 = vsel %vm1418, %v1353, %v1355
      %v1420 = vsel %vm1418, %v1355, %v1357
      %v1421 = vsel %vm1418, %v1357, %v1359
      %v1422 = vsel %vm1418, %v1359, %v1361
      %v1423 = vsel %vm1418, %v1361, %v1363
      %v1424 = vsel %vm1418, %v1363, %v1365
      %v1425 = vsel %vm1418, %v1365, %v1367
      %v1426 = vsel %vm1418, %v1367, %v1369
      %v1427 = vsel %vm1418, %v1369, %v1371
      %v1428 = vsel %vm1418, %v1371, %v1373
      %v1429 = vsel %vm1418, %v1373, %v1375
      %v1430 = vsel %vm1418, %v1375, %v1377
      %v1431 = vsel %vm1418, %v1377, %v1379
      %v1432 = vsel %vm1418, %v1379, %v1381
      %v1433 = vsel %vm1418, %v1381, %v1383
      %v1434 = vsel %vm1418, %v1383, %v1385
      %v1435 = vsel %vm1418, %v1385, %v1387
      %v1436 = vsel %vm1418, %v1387, %v1389
      %v1437 = vsel %vm1418, %v1389, %v1391
      %v1438 = vsel %vm1418, %v1391, %v1393
      %v1439 = vsel %vm1418, %v1393, %v1395
      %v1440 = vsel %vm1418, %v1395, %v1397
      %v1441 = vsel %vm1418, %v1397, %v1399
      %v1442 = vsel %vm1418, %v1399, %v1401
      %v1443 = vsel %vm1418, %v1401, %v1403
      %v1444 = vsel %vm1418, %v1403, %v1405
      %v1445 = vsel %vm1418, %v1405, %v1407
      %v1446 = vsel %vm1418, %v1407, %v1409
      %v1447 = vsel %vm1418, %v1409, %v1411
      %v1448 = vsel %vm1418, %v1411, %v1413
      %v1449 = vsel %vm1418, %v1413, %v1415
      %v1450 = vsel %vm1418, %v1415, %v1417
      %1483 = vst [vmem:[#allocation3 + $0x300] sm:$0xff] %v1419
      %1484 = vst [vmem:[#allocation3 + $0x308] sm:$0xff] %v1420
      %1485 = vst [vmem:[#allocation3 + $0x310] sm:$0xff] %v1421
      %1486 = vst [vmem:[#allocation3 + $0x318] sm:$0xff] %v1422
      %1487 = vst [vmem:[#allocation3 + $0x320] sm:$0xff] %v1423
      %1488 = vst [vmem:[#allocation3 + $0x328] sm:$0xff] %v1424
      %1489 = vst [vmem:[#allocation3 + $0x330] sm:$0xff] %v1425
      %1490 = vst [vmem:[#allocation3 + $0x338] sm:$0xff] %v1426
      %1491 = vst [vmem:[#allocation3 + $0x340] sm:$0xff] %v1427
      %1492 = vst [vmem:[#allocation3 + $0x348] sm:$0xff] %v1428
      %1493 = vst [vmem:[#allocation3 + $0x350] sm:$0xff] %v1429
      %1494 = vst [vmem:[#allocation3 + $0x358] sm:$0xff] %v1430
      %1495 = vst [vmem:[#allocation3 + $0x360] sm:$0xff] %v1431
      %1496 = vst [vmem:[#allocation3 + $0x368] sm:$0xff] %v1432
      %1497 = vst [vmem:[#allocation3 + $0x370] sm:$0xff] %v1433
      %1498 = vst [vmem:[#allocation3 + $0x378] sm:$0xff] %v1434
      %1499 = vst [vmem:[#allocation3 + $0x380] sm:$0xff] %v1435
      %1500 = vst [vmem:[#allocation3 + $0x388] sm:$0xff] %v1436
      %1501 = vst [vmem:[#allocation3 + $0x390] sm:$0xff] %v1437
      %1502 = vst [vmem:[#allocation3 + $0x398] sm:$0xff] %v1438
      %1503 = vst [vmem:[#allocation3 + $0x3a0] sm:$0xff] %v1439
      %1504 = vst [vmem:[#allocation3 + $0x3a8] sm:$0xff] %v1440
      %1505 = vst [vmem:[#allocation3 + $0x3b0] sm:$0xff] %v1441
      %1506 = vst [vmem:[#allocation3 + $0x3b8] sm:$0xff] %v1442
      %1507 = vst [vmem:[#allocation3 + $0x3c0] sm:$0xff] %v1443
      %1508 = vst [vmem:[#allocation3 + $0x3c8] sm:$0xff] %v1444
      %1509 = vst [vmem:[#allocation3 + $0x3d0] sm:$0xff] %v1445
      %1510 = vst [vmem:[#allocation3 + $0x3d8] sm:$0xff] %v1446
      %1511 = vst [vmem:[#allocation3 + $0x3e0] sm:$0xff] %v1447
      %1512 = vst [vmem:[#allocation3 + $0x3e8] sm:$0xff] %v1448
      %1513 = vst [vmem:[#allocation3 + $0x3f0] sm:$0xff] %v1449
      %1514 = vst [vmem:[#allocation3 + $0x3f8] sm:$0xff] %v1450
      %v1515 = vld [vmem:[#allocation2 + $0x118] sm:$0xff]
      %v1516 = vld [vmem:[#allocation2 + $0x120] sm:$0xff]
      %v1517 = vld [vmem:[#allocation2 + $0x128] sm:$0xff]
      %v1518 = vld [vmem:[#allocation2 + $0x130] sm:$0xff]
      %v1519 = vld [vmem:[#allocation2 + $0x138] sm:$0xff]
      %v1520 = vld [vmem:[#allocation2 + $0x140] sm:$0xff]
      %v1521 = vld [vmem:[#allocation2 + $0x148] sm:$0xff]
      %v1522 = vld [vmem:[#allocation2 + $0x150] sm:$0xff]
      %v1523 = vld [vmem:[#allocation2 + $0x158] sm:$0xff]
      %v1524 = vld [vmem:[#allocation2 + $0x160] sm:$0xff]
      %v1525 = vld [vmem:[#allocation2 + $0x168] sm:$0xff]
      %v1526 = vld [vmem:[#allocation2 + $0x170] sm:$0xff]
      %v1527 = vld [vmem:[#allocation2 + $0x178] sm:$0xff]
      %v1528 = vld [vmem:[#allocation2 + $0x180] sm:$0xff]
      %v1529 = vld [vmem:[#allocation2 + $0x188] sm:$0xff]
      %v1530 = vld [vmem:[#allocation2 + $0x190] sm:$0xff]
      %v1531 = vld [vmem:[#allocation2 + $0x198] sm:$0xff]
      %v1532 = vld [vmem:[#allocation2 + $0x1a0] sm:$0xff]
      %v1533 = vld [vmem:[#allocation2 + $0x1a8] sm:$0xff]
      %v1534 = vld [vmem:[#allocation2 + $0x1b0] sm:$0xff]
      %v1535 = vld [vmem:[#allocation2 + $0x1b8] sm:$0xff]
      %v1536 = vld [vmem:[#allocation2 + $0x1c0] sm:$0xff]
      %v1537 = vld [vmem:[#allocation2 + $0x1c8] sm:$0xff]
      %v1538 = vld [vmem:[#allocation2 + $0x1d0] sm:$0xff]
      %v1539 = vld [vmem:[#allocation2 + $0x1d8] sm:$0xff]
      %v1540 = vld [vmem:[#allocation2 + $0x1e0] sm:$0xff]
      %v1541 = vld [vmem:[#allocation2 + $0x1e8] sm:$0xff]
      %v1542 = vld [vmem:[#allocation2 + $0x1f0] sm:$0xff]
      %v1543 = vld [vmem:[#allocation2 + $0x1f8] sm:$0xff]
      %v1544 = vld [vmem:[#allocation2 + $0x200] sm:$0xff]
      %v1545 = vld [vmem:[#allocation2 + $0x208] sm:$0xff]
      %v1546 = vld [vmem:[#allocation2 + $0x210] sm:$0xff]
      %1547 = vst [vmem:[#allocation3 + $0x400] sm:$0xff] %v1515
      %1548 = vst [vmem:[#allocation3 + $0x408] sm:$0xff] %v1516
      %1549 = vst [vmem:[#allocation3 + $0x410] sm:$0xff] %v1517
      %1550 = vst [vmem:[#allocation3 + $0x418] sm:$0xff] %v1518
      %1551 = vst [vmem:[#allocation3 + $0x420] sm:$0xff] %v1519
      %1552 = vst [vmem:[#allocation3 + $0x428] sm:$0xff] %v1520
      %1553 = vst [vmem:[#allocation3 + $0x430] sm:$0xff] %v1521
      %1554 = vst [vmem:[#allocation3 + $0x438] sm:$0xff] %v1522
      %1555 = vst [vmem:[#allocation3 + $0x440] sm:$0xff] %v1523
      %1556 = vst [vmem:[#allocation3 + $0x448] sm:$0xff] %v1524
      %1557 = vst [vmem:[#allocation3 + $0x450] sm:$0xff] %v1525
      %1558 = vst [vmem:[#allocation3 + $0x458] sm:$0xff] %v1526
      %1559 = vst [vmem:[#allocation3 + $0x460] sm:$0xff] %v1527
      %1560 = vst [vmem:[#allocation3 + $0x468] sm:$0xff] %v1528
      %1561 = vst [vmem:[#allocation3 + $0x470] sm:$0xff] %v1529
      %1562 = vst [vmem:[#allocation3 + $0x478] sm:$0xff] %v1530
      %1563 = vst [vmem:[#allocation3 + $0x480] sm:$0xff] %v1531
      %1564 = vst [vmem:[#allocation3 + $0x488] sm:$0xff] %v1532
      %1565 = vst [vmem:[#allocation3 + $0x490] sm:$0xff] %v1533
      %1566 = vst [vmem:[#allocation3 + $0x498] sm:$0xff] %v1534
      %1567 = vst [vmem:[#allocation3 + $0x4a0] sm:$0xff] %v1535
      %1568 = vst [vmem:[#allocation3 + $0x4a8] sm:$0xff] %v1536
      %1569 = vst [vmem:[#allocation3 + $0x4b0] sm:$0xff] %v1537
      %1570 = vst [vmem:[#allocation3 + $0x4b8] sm:$0xff] %v1538
      %1571 = vst [vmem:[#allocation3 + $0x4c0] sm:$0xff] %v1539
      %1572 = vst [vmem:[#allocation3 + $0x4c8] sm:$0xff] %v1540
      %1573 = vst [vmem:[#allocation3 + $0x4d0] sm:$0xff] %v1541
      %1574 = vst [vmem:[#allocation3 + $0x4d8] sm:$0xff] %v1542
      %1575 = vst [vmem:[#allocation3 + $0x4e0] sm:$0xff] %v1543
      %1576 = vst [vmem:[#allocation3 + $0x4e8] sm:$0xff] %v1544
      %1577 = vst [vmem:[#allocation3 + $0x4f0] sm:$0xff] %v1545
      %1578 = vst [vmem:[#allocation3 + $0x4f8] sm:$0xff] %v1546
      %v1579 = vld [vmem:[#allocation2 + $0x228] sm:$0xff]
      %v1580 = vld [vmem:[#allocation2 + $0x230] sm:$0xff]
      %v1581 = vld [vmem:[#allocation2 + $0x238] sm:$0xff]
      %v1582 = vld [vmem:[#allocation2 + $0x240] sm:$0xff]
      %v1583 = vld [vmem:[#allocation2 + $0x248] sm:$0xff]
      %v1584 = vld [vmem:[#allocation2 + $0x250] sm:$0xff]
      %v1585 = vld [vmem:[#allocation2 + $0x258] sm:$0xff]
      %v1586 = vld [vmem:[#allocation2 + $0x260] sm:$0xff]
      %v1587 = vld [vmem:[#allocation2 + $0x268] sm:$0xff]
      %v1588 = vld [vmem:[#allocation2 + $0x270] sm:$0xff]
      %v1589 = vld [vmem:[#allocation2 + $0x278] sm:$0xff]
      %v1590 = vld [vmem:[#allocation2 + $0x280] sm:$0xff]
      %v1591 = vld [vmem:[#allocation2 + $0x288] sm:$0xff]
      %v1592 = vld [vmem:[#allocation2 + $0x290] sm:$0xff]
      %v1593 = vld [vmem:[#allocation2 + $0x298] sm:$0xff]
      %v1594 = vld [vmem:[#allocation2 + $0x2a0] sm:$0xff]
      %v1595 = vld [vmem:[#allocation2 + $0x2a8] sm:$0xff]
      %v1596 = vld [vmem:[#allocation2 + $0x2b0] sm:$0xff]
      %v1597 = vld [vmem:[#allocation2 + $0x2b8] sm:$0xff]
      %v1598 = vld [vmem:[#allocation2 + $0x2c0] sm:$0xff]
      %v1599 = vld [vmem:[#allocation2 + $0x2c8] sm:$0xff]
      %v1600 = vld [vmem:[#allocation2 + $0x2d0] sm:$0xff]
      %v1601 = vld [vmem:[#allocation2 + $0x2d8] sm:$0xff]
      %v1602 = vld [vmem:[#allocation2 + $0x2e0] sm:$0xff]
      %v1603 = vld [vmem:[#allocation2 + $0x2e8] sm:$0xff]
      %v1604 = vld [vmem:[#allocation2 + $0x2f0] sm:$0xff]
      %v1605 = vld [vmem:[#allocation2 + $0x2f8] sm:$0xff]
      %v1606 = vld [vmem:[#allocation2 + $0x300] sm:$0xff]
      %v1607 = vld [vmem:[#allocation2 + $0x308] sm:$0xff]
      %v1608 = vld [vmem:[#allocation2 + $0x310] sm:$0xff]
      %v1609 = vld [vmem:[#allocation2 + $0x318] sm:$0xff]
      %v1610 = vld [vmem:[#allocation2 + $0x320] sm:$0xff]
      %v1611 = vld [vmem:[#allocation2 + $0x328] sm:$0xff]
      %1645 = vrot.lane.b32.xlu0 %v1579, 127
      %v1646 = vpop.permute.xlu0 %1645
      %1647 = vrot.lane.b32.xlu0 %v1580, 127
      %v1648 = vpop.permute.xlu0 %1647
      %1649 = vrot.lane.b32.xlu0 %v1581, 127
      %v1650 = vpop.permute.xlu0 %1649
      %1651 = vrot.lane.b32.xlu0 %v1582, 127
      %v1652 = vpop.permute.xlu0 %1651
      %1653 = vrot.lane.b32.xlu0 %v1583, 127
      %v1654 = vpop.permute.xlu0 %1653
      %1655 = vrot.lane.b32.xlu0 %v1584, 127
      %v1656 = vpop.permute.xlu0 %1655
      %1657 = vrot.lane.b32.xlu0 %v1585, 127
      %v1658 = vpop.permute.xlu0 %1657
      %1659 = vrot.lane.b32.xlu0 %v1586, 127
      %v1660 = vpop.permute.xlu0 %1659
      %1661 = vrot.lane.b32.xlu0 %v1587, 127
      %v1662 = vpop.permute.xlu0 %1661
      %1663 = vrot.lane.b32.xlu0 %v1588, 127
      %v1664 = vpop.permute.xlu0 %1663
      %1665 = vrot.lane.b32.xlu0 %v1589, 127
      %v1666 = vpop.permute.xlu0 %1665
      %1667 = vrot.lane.b32.xlu0 %v1590, 127
      %v1668 = vpop.permute.xlu0 %1667
      %1669 = vrot.lane.b32.xlu0 %v1591, 127
      %v1670 = vpop.permute.xlu0 %1669
      %1671 = vrot.lane.b32.xlu0 %v1592, 127
      %v1672 = vpop.permute.xlu0 %1671
      %1673 = vrot.lane.b32.xlu0 %v1593, 127
      %v1674 = vpop.permute.xlu0 %1673
      %1675 = vrot.lane.b32.xlu0 %v1594, 127
      %v1676 = vpop.permute.xlu0 %1675
      %1677 = vrot.lane.b32.xlu0 %v1595, 127
      %v1678 = vpop.permute.xlu0 %1677
      %1679 = vrot.lane.b32.xlu0 %v1596, 127
      %v1680 = vpop.permute.xlu0 %1679
      %1681 = vrot.lane.b32.xlu0 %v1597, 127
      %v1682 = vpop.permute.xlu0 %1681
      %1683 = vrot.lane.b32.xlu0 %v1598, 127
      %v1684 = vpop.permute.xlu0 %1683
      %1685 = vrot.lane.b32.xlu0 %v1599, 127
      %v1686 = vpop.permute.xlu0 %1685
      %1687 = vrot.lane.b32.xlu0 %v1600, 127
      %v1688 = vpop.permute.xlu0 %1687
      %1689 = vrot.lane.b32.xlu0 %v1601, 127
      %v1690 = vpop.permute.xlu0 %1689
      %1691 = vrot.lane.b32.xlu0 %v1602, 127
      %v1692 = vpop.permute.xlu0 %1691
      %1693 = vrot.lane.b32.xlu0 %v1603, 127
      %v1694 = vpop.permute.xlu0 %1693
      %1695 = vrot.lane.b32.xlu0 %v1604, 127
      %v1696 = vpop.permute.xlu0 %1695
      %1697 = vrot.lane.b32.xlu0 %v1605, 127
      %v1698 = vpop.permute.xlu0 %1697
      %1699 = vrot.lane.b32.xlu0 %v1606, 127
      %v1700 = vpop.permute.xlu0 %1699
      %1701 = vrot.lane.b32.xlu0 %v1607, 127
      %v1702 = vpop.permute.xlu0 %1701
      %1703 = vrot.lane.b32.xlu0 %v1608, 127
      %v1704 = vpop.permute.xlu0 %1703
      %1705 = vrot.lane.b32.xlu0 %v1609, 127
      %v1706 = vpop.permute.xlu0 %1705
      %1707 = vrot.lane.b32.xlu0 %v1610, 127
      %v1708 = vpop.permute.xlu0 %1707
      %1709 = vrot.lane.b32.xlu0 %v1611, 127
      %v1710 = vpop.permute.xlu0 %1709
      %vm1711 = vcmask 1039360
      %v1712 = vsel %vm1711, %v1646, %v1648
      %v1713 = vsel %vm1711, %v1648, %v1650
      %v1714 = vsel %vm1711, %v1650, %v1652
      %v1715 = vsel %vm1711, %v1652, %v1654
      %v1716 = vsel %vm1711, %v1654, %v1656
      %v1717 = vsel %vm1711, %v1656, %v1658
      %v1718 = vsel %vm1711, %v1658, %v1660
      %v1719 = vsel %vm1711, %v1660, %v1662
      %v1720 = vsel %vm1711, %v1662, %v1664
      %v1721 = vsel %vm1711, %v1664, %v1666
      %v1722 = vsel %vm1711, %v1666, %v1668
      %v1723 = vsel %vm1711, %v1668, %v1670
      %v1724 = vsel %vm1711, %v1670, %v1672
      %v1725 = vsel %vm1711, %v1672, %v1674
      %v1726 = vsel %vm1711, %v1674, %v1676
      %v1727 = vsel %vm1711, %v1676, %v1678
      %v1728 = vsel %vm1711, %v1678, %v1680
      %v1729 = vsel %vm1711, %v1680, %v1682
      %v1730 = vsel %vm1711, %v1682, %v1684
      %v1731 = vsel %vm1711, %v1684, %v1686
      %v1732 = vsel %vm1711, %v1686, %v1688
      %v1733 = vsel %vm1711, %v1688, %v1690
      %v1734 = vsel %vm1711, %v1690, %v1692
      %v1735 = vsel %vm1711, %v1692, %v1694
      %v1736 = vsel %vm1711, %v1694, %v1696
      %v1737 = vsel %vm1711, %v1696, %v1698
      %v1738 = vsel %vm1711, %v1698, %v1700
      %v1739 = vsel %vm1711, %v1700, %v1702
      %v1740 = vsel %vm1711, %v1702, %v1704
      %v1741 = vsel %vm1711, %v1704, %v1706
      %v1742 = vsel %vm1711, %v1706, %v1708
      %v1743 = vsel %vm1711, %v1708, %v1710
      %1776 = vst [vmem:[#allocation3 + $0x500] sm:$0xff] %v1712
      %1777 = vst [vmem:[#allocation3 + $0x508] sm:$0xff] %v1713
      %1778 = vst [vmem:[#allocation3 + $0x510] sm:$0xff] %v1714
      %1779 = vst [vmem:[#allocation3 + $0x518] sm:$0xff] %v1715
      %1780 = vst [vmem:[#allocation3 + $0x520] sm:$0xff] %v1716
      %1781 = vst [vmem:[#allocation3 + $0x528] sm:$0xff] %v1717
      %1782 = vst [vmem:[#allocation3 + $0x530] sm:$0xff] %v1718
      %1783 = vst [vmem:[#allocation3 + $0x538] sm:$0xff] %v1719
      %1784 = vst [vmem:[#allocation3 + $0x540] sm:$0xff] %v1720
      %1785 = vst [vmem:[#allocation3 + $0x548] sm:$0xff] %v1721
      %1786 = vst [vmem:[#allocation3 + $0x550] sm:$0xff] %v1722
      %1787 = vst [vmem:[#allocation3 + $0x558] sm:$0xff] %v1723
      %1788 = vst [vmem:[#allocation3 + $0x560] sm:$0xff] %v1724
      %1789 = vst [vmem:[#allocation3 + $0x568] sm:$0xff] %v1725
      %1790 = vst [vmem:[#allocation3 + $0x570] sm:$0xff] %v1726
      %1791 = vst [vmem:[#allocation3 + $0x578] sm:$0xff] %v1727
      %1792 = vst [vmem:[#allocation3 + $0x580] sm:$0xff] %v1728
      %1793 = vst [vmem:[#allocation3 + $0x588] sm:$0xff] %v1729
      %1794 = vst [vmem:[#allocation3 + $0x590] sm:$0xff] %v1730
      %1795 = vst [vmem:[#allocation3 + $0x598] sm:$0xff] %v1731
      %1796 = vst [vmem:[#allocation3 + $0x5a0] sm:$0xff] %v1732
      %1797 = vst [vmem:[#allocation3 + $0x5a8] sm:$0xff] %v1733
      %1798 = vst [vmem:[#allocation3 + $0x5b0] sm:$0xff] %v1734
      %1799 = vst [vmem:[#allocation3 + $0x5b8] sm:$0xff] %v1735
      %1800 = vst [vmem:[#allocation3 + $0x5c0] sm:$0xff] %v1736
      %1801 = vst [vmem:[#allocation3 + $0x5c8] sm:$0xff] %v1737
      %1802 = vst [vmem:[#allocation3 + $0x5d0] sm:$0xff] %v1738
      %1803 = vst [vmem:[#allocation3 + $0x5d8] sm:$0xff] %v1739
      %1804 = vst [vmem:[#allocation3 + $0x5e0] sm:$0xff] %v1740
      %1805 = vst [vmem:[#allocation3 + $0x5e8] sm:$0xff] %v1741
      %1806 = vst [vmem:[#allocation3 + $0x5f0] sm:$0xff] %v1742
      %1807 = vst [vmem:[#allocation3 + $0x5f8] sm:$0xff] %v1743
      %v1808 = vld [vmem:[#allocation2 + $0x8] sm:$0xff]
      %v1809 = vld [vmem:[#allocation2 + $0x10] sm:$0xff]
      %v1810 = vld [vmem:[#allocation2 + $0x18] sm:$0xff]
      %v1811 = vld [vmem:[#allocation2 + $0x20] sm:$0xff]
      %v1812 = vld [vmem:[#allocation2 + $0x28] sm:$0xff]
      %v1813 = vld [vmem:[#allocation2 + $0x30] sm:$0xff]
      %v1814 = vld [vmem:[#allocation2 + $0x38] sm:$0xff]
      %v1815 = vld [vmem:[#allocation2 + $0x40] sm:$0xff]
      %v1816 = vld [vmem:[#allocation2 + $0x48] sm:$0xff]
      %v1817 = vld [vmem:[#allocation2 + $0x50] sm:$0xff]
      %v1818 = vld [vmem:[#allocation2 + $0x58] sm:$0xff]
      %v1819 = vld [vmem:[#allocation2 + $0x60] sm:$0xff]
      %v1820 = vld [vmem:[#allocation2 + $0x68] sm:$0xff]
      %v1821 = vld [vmem:[#allocation2 + $0x70] sm:$0xff]
      %v1822 = vld [vmem:[#allocation2 + $0x78] sm:$0xff]
      %v1823 = vld [vmem:[#allocation2 + $0x80] sm:$0xff]
      %v1824 = vld [vmem:[#allocation2 + $0x88] sm:$0xff]
      %v1825 = vld [vmem:[#allocation2 + $0x90] sm:$0xff]
      %v1826 = vld [vmem:[#allocation2 + $0x98] sm:$0xff]
      %v1827 = vld [vmem:[#allocation2 + $0xa0] sm:$0xff]
      %v1828 = vld [vmem:[#allocation2 + $0xa8] sm:$0xff]
      %v1829 = vld [vmem:[#allocation2 + $0xb0] sm:$0xff]
      %v1830 = vld [vmem:[#allocation2 + $0xb8] sm:$0xff]
      %v1831 = vld [vmem:[#allocation2 + $0xc0] sm:$0xff]
      %v1832 = vld [vmem:[#allocation2 + $0xc8] sm:$0xff]
      %v1833 = vld [vmem:[#allocation2 + $0xd0] sm:$0xff]
      %v1834 = vld [vmem:[#allocation2 + $0xd8] sm:$0xff]
      %v1835 = vld [vmem:[#allocation2 + $0xe0] sm:$0xff]
      %v1836 = vld [vmem:[#allocation2 + $0xe8] sm:$0xff]
      %v1837 = vld [vmem:[#allocation2 + $0xf0] sm:$0xff]
      %v1838 = vld [vmem:[#allocation2 + $0xf8] sm:$0xff]
      %v1839 = vld [vmem:[#allocation2 + $0x100] sm:$0xff]
      %v1840 = vld [vmem:[#allocation2 + $0x108] sm:$0xff]
      %1874 = vrot.lane.b32.xlu0 %v1808, 65
      %v1875 = vpop.permute.xlu0 %1874
      %1876 = vrot.lane.b32.xlu0 %v1809, 65
      %v1877 = vpop.permute.xlu0 %1876
      %1878 = vrot.lane.b32.xlu0 %v1810, 65
      %v1879 = vpop.permute.xlu0 %1878
      %1880 = vrot.lane.b32.xlu0 %v1811, 65
      %v1881 = vpop.permute.xlu0 %1880
      %1882 = vrot.lane.b32.xlu0 %v1812, 65
      %v1883 = vpop.permute.xlu0 %1882
      %1884 = vrot.lane.b32.xlu0 %v1813, 65
      %v1885 = vpop.permute.xlu0 %1884
      %1886 = vrot.lane.b32.xlu0 %v1814, 65
      %v1887 = vpop.permute.xlu0 %1886
      %1888 = vrot.lane.b32.xlu0 %v1815, 65
      %v1889 = vpop.permute.xlu0 %1888
      %1890 = vrot.lane.b32.xlu0 %v1816, 65
      %v1891 = vpop.permute.xlu0 %1890
      %1892 = vrot.lane.b32.xlu0 %v1817, 65
      %v1893 = vpop.permute.xlu0 %1892
      %1894 = vrot.lane.b32.xlu0 %v1818, 65
      %v1895 = vpop.permute.xlu0 %1894
      %1896 = vrot.lane.b32.xlu0 %v1819, 65
      %v1897 = vpop.permute.xlu0 %1896
      %1898 = vrot.lane.b32.xlu0 %v1820, 65
      %v1899 = vpop.permute.xlu0 %1898
      %1900 = vrot.lane.b32.xlu0 %v1821, 65
      %v1901 = vpop.permute.xlu0 %1900
      %1902 = vrot.lane.b32.xlu0 %v1822, 65
      %v1903 = vpop.permute.xlu0 %1902
      %1904 = vrot.lane.b32.xlu0 %v1823, 65
      %v1905 = vpop.permute.xlu0 %1904
      %1906 = vrot.lane.b32.xlu0 %v1824, 65
      %v1907 = vpop.permute.xlu0 %1906
      %1908 = vrot.lane.b32.xlu0 %v1825, 65
      %v1909 = vpop.permute.xlu0 %1908
      %1910 = vrot.lane.b32.xlu0 %v1826, 65
      %v1911 = vpop.permute.xlu0 %1910
      %1912 = vrot.lane.b32.xlu0 %v1827, 65
      %v1913 = vpop.permute.xlu0 %1912
      %1914 = vrot.lane.b32.xlu0 %v1828, 65
      %v1915 = vpop.permute.xlu0 %1914
      %1916 = vrot.lane.b32.xlu0 %v1829, 65
      %v1917 = vpop.permute.xlu0 %1916
      %1918 = vrot.lane.b32.xlu0 %v1830, 65
      %v1919 = vpop.permute.xlu0 %1918
      %1920 = vrot.lane.b32.xlu0 %v1831, 65
      %v1921 = vpop.permute.xlu0 %1920
      %1922 = vrot.lane.b32.xlu0 %v1832, 65
      %v1923 = vpop.permute.xlu0 %1922
      %1924 = vrot.lane.b32.xlu0 %v1833, 65
      %v1925 = vpop.permute.xlu0 %1924
      %1926 = vrot.lane.b32.xlu0 %v1834, 65
      %v1927 = vpop.permute.xlu0 %1926
      %1928 = vrot.lane.b32.xlu0 %v1835, 65
      %v1929 = vpop.permute.xlu0 %1928
      %1930 = vrot.lane.b32.xlu0 %v1836, 65
      %v1931 = vpop.permute.xlu0 %1930
      %1932 = vrot.lane.b32.xlu0 %v1837, 65
      %v1933 = vpop.permute.xlu0 %1932
      %1934 = vrot.lane.b32.xlu0 %v1838, 65
      %v1935 = vpop.permute.xlu0 %1934
      %1936 = vrot.lane.b32.xlu0 %v1839, 65
      %v1937 = vpop.permute.xlu0 %1936
      %1938 = vrot.lane.b32.xlu0 %v1840, 65
      %v1939 = vpop.permute.xlu0 %1938
      %v1940 = vsel %vm731, %v1875, %v1877
      %v1941 = vsel %vm731, %v1877, %v1879
      %v1942 = vsel %vm731, %v1879, %v1881
      %v1943 = vsel %vm731, %v1881, %v1883
      %v1944 = vsel %vm731, %v1883, %v1885
      %v1945 = vsel %vm731, %v1885, %v1887
      %v1946 = vsel %vm731, %v1887, %v1889
      %v1947 = vsel %vm731, %v1889, %v1891
      %v1948 = vsel %vm731, %v1891, %v1893
      %v1949 = vsel %vm731, %v1893, %v1895
      %v1950 = vsel %vm731, %v1895, %v1897
      %v1951 = vsel %vm731, %v1897, %v1899
      %v1952 = vsel %vm731, %v1899, %v1901
      %v1953 = vsel %vm731, %v1901, %v1903
      %v1954 = vsel %vm731, %v1903, %v1905
      %v1955 = vsel %vm731, %v1905, %v1907
      %v1956 = vsel %vm731, %v1907, %v1909
      %v1957 = vsel %vm731, %v1909, %v1911
      %v1958 = vsel %vm731, %v1911, %v1913
      %v1959 = vsel %vm731, %v1913, %v1915
      %v1960 = vsel %vm731, %v1915, %v1917
      %v1961 = vsel %vm731, %v1917, %v1919
      %v1962 = vsel %vm731, %v1919, %v1921
      %v1963 = vsel %vm731, %v1921, %v1923
      %v1964 = vsel %vm731, %v1923, %v1925
      %v1965 = vsel %vm731, %v1925, %v1927
      %v1966 = vsel %vm731, %v1927, %v1929
      %v1967 = vsel %vm731, %v1929, %v1931
      %v1968 = vsel %vm731, %v1931, %v1933
      %v1969 = vsel %vm731, %v1933, %v1935
      %v1970 = vsel %vm731, %v1935, %v1937
      %v1971 = vsel %vm731, %v1937, %v1939
      %2004 = vst [vmem:[#allocation3 + $0x600] sm:$0xff] %v1940
      %2005 = vst [vmem:[#allocation3 + $0x608] sm:$0xff] %v1941
      %2006 = vst [vmem:[#allocation3 + $0x610] sm:$0xff] %v1942
      %2007 = vst [vmem:[#allocation3 + $0x618] sm:$0xff] %v1943
      %2008 = vst [vmem:[#allocation3 + $0x620] sm:$0xff] %v1944
      %2009 = vst [vmem:[#allocation3 + $0x628] sm:$0xff] %v1945
      %2010 = vst [vmem:[#allocation3 + $0x630] sm:$0xff] %v1946
      %2011 = vst [vmem:[#allocation3 + $0x638] sm:$0xff] %v1947
      %2012 = vst [vmem:[#allocation3 + $0x640] sm:$0xff] %v1948
      %2013 = vst [vmem:[#allocation3 + $0x648] sm:$0xff] %v1949
      %2014 = vst [vmem:[#allocation3 + $0x650] sm:$0xff] %v1950
      %2015 = vst [vmem:[#allocation3 + $0x658] sm:$0xff] %v1951
      %2016 = vst [vmem:[#allocation3 + $0x660] sm:$0xff] %v1952
      %2017 = vst [vmem:[#allocation3 + $0x668] sm:$0xff] %v1953
      %2018 = vst [vmem:[#allocation3 + $0x670] sm:$0xff] %v1954
      %2019 = vst [vmem:[#allocation3 + $0x678] sm:$0xff] %v1955
      %2020 = vst [vmem:[#allocation3 + $0x680] sm:$0xff] %v1956
      %2021 = vst [vmem:[#allocation3 + $0x688] sm:$0xff] %v1957
      %2022 = vst [vmem:[#allocation3 + $0x690] sm:$0xff] %v1958
      %2023 = vst [vmem:[#allocation3 + $0x698] sm:$0xff] %v1959
      %2024 = vst [vmem:[#allocation3 + $0x6a0] sm:$0xff] %v1960
      %2025 = vst [vmem:[#allocation3 + $0x6a8] sm:$0xff] %v1961
      %2026 = vst [vmem:[#allocation3 + $0x6b0] sm:$0xff] %v1962
      %2027 = vst [vmem:[#allocation3 + $0x6b8] sm:$0xff] %v1963
      %2028 = vst [vmem:[#allocation3 + $0x6c0] sm:$0xff] %v1964
      %2029 = vst [vmem:[#allocation3 + $0x6c8] sm:$0xff] %v1965
      %2030 = vst [vmem:[#allocation3 + $0x6d0] sm:$0xff] %v1966
      %2031 = vst [vmem:[#allocation3 + $0x6d8] sm:$0xff] %v1967
      %2032 = vst [vmem:[#allocation3 + $0x6e0] sm:$0xff] %v1968
      %2033 = vst [vmem:[#allocation3 + $0x6e8] sm:$0xff] %v1969
      %2034 = vst [vmem:[#allocation3 + $0x6f0] sm:$0xff] %v1970
      %2035 = vst [vmem:[#allocation3 + $0x6f8] sm:$0xff] %v1971
      %v2036 = vld [vmem:[#allocation2 + $0x118] sm:$0xff]
      %v2037 = vld [vmem:[#allocation2 + $0x120] sm:$0xff]
      %v2038 = vld [vmem:[#allocation2 + $0x128] sm:$0xff]
      %v2039 = vld [vmem:[#allocation2 + $0x130] sm:$0xff]
      %v2040 = vld [vmem:[#allocation2 + $0x138] sm:$0xff]
      %v2041 = vld [vmem:[#allocation2 + $0x140] sm:$0xff]
      %v2042 = vld [vmem:[#allocation2 + $0x148] sm:$0xff]
      %v2043 = vld [vmem:[#allocation2 + $0x150] sm:$0xff]
      %v2044 = vld [vmem:[#allocation2 + $0x158] sm:$0xff]
      %v2045 = vld [vmem:[#allocation2 + $0x160] sm:$0xff]
      %v2046 = vld [vmem:[#allocation2 + $0x168] sm:$0xff]
      %v2047 = vld [vmem:[#allocation2 + $0x170] sm:$0xff]
      %v2048 = vld [vmem:[#allocation2 + $0x178] sm:$0xff]
      %v2049 = vld [vmem:[#allocation2 + $0x180] sm:$0xff]
      %v2050 = vld [vmem:[#allocation2 + $0x188] sm:$0xff]
      %v2051 = vld [vmem:[#allocation2 + $0x190] sm:$0xff]
      %v2052 = vld [vmem:[#allocation2 + $0x198] sm:$0xff]
      %v2053 = vld [vmem:[#allocation2 + $0x1a0] sm:$0xff]
      %v2054 = vld [vmem:[#allocation2 + $0x1a8] sm:$0xff]
      %v2055 = vld [vmem:[#allocation2 + $0x1b0] sm:$0xff]
      %v2056 = vld [vmem:[#allocation2 + $0x1b8] sm:$0xff]
      %v2057 = vld [vmem:[#allocation2 + $0x1c0] sm:$0xff]
      %v2058 = vld [vmem:[#allocation2 + $0x1c8] sm:$0xff]
      %v2059 = vld [vmem:[#allocation2 + $0x1d0] sm:$0xff]
      %v2060 = vld [vmem:[#allocation2 + $0x1d8] sm:$0xff]
      %v2061 = vld [vmem:[#allocation2 + $0x1e0] sm:$0xff]
      %v2062 = vld [vmem:[#allocation2 + $0x1e8] sm:$0xff]
      %v2063 = vld [vmem:[#allocation2 + $0x1f0] sm:$0xff]
      %v2064 = vld [vmem:[#allocation2 + $0x1f8] sm:$0xff]
      %v2065 = vld [vmem:[#allocation2 + $0x200] sm:$0xff]
      %v2066 = vld [vmem:[#allocation2 + $0x208] sm:$0xff]
      %v2067 = vld [vmem:[#allocation2 + $0x210] sm:$0xff]
      %v2068 = vld [vmem:[#allocation2 + $0x218] sm:$0xff]
      %2102 = vrot.lane.b32.xlu0 %v2036, 64
      %v2103 = vpop.permute.xlu0 %2102
      %2104 = vrot.lane.b32.xlu0 %v2037, 64
      %v2105 = vpop.permute.xlu0 %2104
      %2106 = vrot.lane.b32.xlu0 %v2038, 64
      %v2107 = vpop.permute.xlu0 %2106
      %2108 = vrot.lane.b32.xlu0 %v2039, 64
      %v2109 = vpop.permute.xlu0 %2108
      %2110 = vrot.lane.b32.xlu0 %v2040, 64
      %v2111 = vpop.permute.xlu0 %2110
      %2112 = vrot.lane.b32.xlu0 %v2041, 64
      %v2113 = vpop.permute.xlu0 %2112
      %2114 = vrot.lane.b32.xlu0 %v2042, 64
      %v2115 = vpop.permute.xlu0 %2114
      %2116 = vrot.lane.b32.xlu0 %v2043, 64
      %v2117 = vpop.permute.xlu0 %2116
      %2118 = vrot.lane.b32.xlu0 %v2044, 64
      %v2119 = vpop.permute.xlu0 %2118
      %2120 = vrot.lane.b32.xlu0 %v2045, 64
      %v2121 = vpop.permute.xlu0 %2120
      %2122 = vrot.lane.b32.xlu0 %v2046, 64
      %v2123 = vpop.permute.xlu0 %2122
      %2124 = vrot.lane.b32.xlu0 %v2047, 64
      %v2125 = vpop.permute.xlu0 %2124
      %2126 = vrot.lane.b32.xlu0 %v2048, 64
      %v2127 = vpop.permute.xlu0 %2126
      %2128 = vrot.lane.b32.xlu0 %v2049, 64
      %v2129 = vpop.permute.xlu0 %2128
      %2130 = vrot.lane.b32.xlu0 %v2050, 64
      %v2131 = vpop.permute.xlu0 %2130
      %2132 = vrot.lane.b32.xlu0 %v2051, 64
      %v2133 = vpop.permute.xlu0 %2132
      %2134 = vrot.lane.b32.xlu0 %v2052, 64
      %v2135 = vpop.permute.xlu0 %2134
      %2136 = vrot.lane.b32.xlu0 %v2053, 64
      %v2137 = vpop.permute.xlu0 %2136
      %2138 = vrot.lane.b32.xlu0 %v2054, 64
      %v2139 = vpop.permute.xlu0 %2138
      %2140 = vrot.lane.b32.xlu0 %v2055, 64
      %v2141 = vpop.permute.xlu0 %2140
      %2142 = vrot.lane.b32.xlu0 %v2056, 64
      %v2143 = vpop.permute.xlu0 %2142
      %2144 = vrot.lane.b32.xlu0 %v2057, 64
      %v2145 = vpop.permute.xlu0 %2144
      %2146 = vrot.lane.b32.xlu0 %v2058, 64
      %v2147 = vpop.permute.xlu0 %2146
      %2148 = vrot.lane.b32.xlu0 %v2059, 64
      %v2149 = vpop.permute.xlu0 %2148
      %2150 = vrot.lane.b32.xlu0 %v2060, 64
      %v2151 = vpop.permute.xlu0 %2150
      %2152 = vrot.lane.b32.xlu0 %v2061, 64
      %v2153 = vpop.permute.xlu0 %2152
      %2154 = vrot.lane.b32.xlu0 %v2062, 64
      %v2155 = vpop.permute.xlu0 %2154
      %2156 = vrot.lane.b32.xlu0 %v2063, 64
      %v2157 = vpop.permute.xlu0 %2156
      %2158 = vrot.lane.b32.xlu0 %v2064, 64
      %v2159 = vpop.permute.xlu0 %2158
      %2160 = vrot.lane.b32.xlu0 %v2065, 64
      %v2161 = vpop.permute.xlu0 %2160
      %2162 = vrot.lane.b32.xlu0 %v2066, 64
      %v2163 = vpop.permute.xlu0 %2162
      %2164 = vrot.lane.b32.xlu0 %v2067, 64
      %v2165 = vpop.permute.xlu0 %2164
      %2166 = vrot.lane.b32.xlu0 %v2068, 64
      %v2167 = vpop.permute.xlu0 %2166
      %v2168 = vsel %vm960, %v2103, %v2105
      %v2169 = vsel %vm960, %v2105, %v2107
      %v2170 = vsel %vm960, %v2107, %v2109
      %v2171 = vsel %vm960, %v2109, %v2111
      %v2172 = vsel %vm960, %v2111, %v2113
      %v2173 = vsel %vm960, %v2113, %v2115
      %v2174 = vsel %vm960, %v2115, %v2117
      %v2175 = vsel %vm960, %v2117, %v2119
      %v2176 = vsel %vm960, %v2119, %v2121
      %v2177 = vsel %vm960, %v2121, %v2123
      %v2178 = vsel %vm960, %v2123, %v2125
      %v2179 = vsel %vm960, %v2125, %v2127
      %v2180 = vsel %vm960, %v2127, %v2129
      %v2181 = vsel %vm960, %v2129, %v2131
      %v2182 = vsel %vm960, %v2131, %v2133
      %v2183 = vsel %vm960, %v2133, %v2135
      %v2184 = vsel %vm960, %v2135, %v2137
      %v2185 = vsel %vm960, %v2137, %v2139
      %v2186 = vsel %vm960, %v2139, %v2141
      %v2187 = vsel %vm960, %v2141, %v2143
      %v2188 = vsel %vm960, %v2143, %v2145
      %v2189 = vsel %vm960, %v2145, %v2147
      %v2190 = vsel %vm960, %v2147, %v2149
      %v2191 = vsel %vm960, %v2149, %v2151
      %v2192 = vsel %vm960, %v2151, %v2153
      %v2193 = vsel %vm960, %v2153, %v2155
      %v2194 = vsel %vm960, %v2155, %v2157
      %v2195 = vsel %vm960, %v2157, %v2159
      %v2196 = vsel %vm960, %v2159, %v2161
      %v2197 = vsel %vm960, %v2161, %v2163
      %v2198 = vsel %vm960, %v2163, %v2165
      %v2199 = vsel %vm960, %v2165, %v2167
      %2232 = vst [vmem:[#allocation3 + $0x700] sm:$0xff] %v2168
      %2233 = vst [vmem:[#allocation3 + $0x708] sm:$0xff] %v2169
      %2234 = vst [vmem:[#allocation3 + $0x710] sm:$0xff] %v2170
      %2235 = vst [vmem:[#allocation3 + $0x718] sm:$0xff] %v2171
      %2236 = vst [vmem:[#allocation3 + $0x720] sm:$0xff] %v2172
      %2237 = vst [vmem:[#allocation3 + $0x728] sm:$0xff] %v2173
      %2238 = vst [vmem:[#allocation3 + $0x730] sm:$0xff] %v2174
      %2239 = vst [vmem:[#allocation3 + $0x738] sm:$0xff] %v2175
      %2240 = vst [vmem:[#allocation3 + $0x740] sm:$0xff] %v2176
      %2241 = vst [vmem:[#allocation3 + $0x748] sm:$0xff] %v2177
      %2242 = vst [vmem:[#allocation3 + $0x750] sm:$0xff] %v2178
      %2243 = vst [vmem:[#allocation3 + $0x758] sm:$0xff] %v2179
      %2244 = vst [vmem:[#allocation3 + $0x760] sm:$0xff] %v2180
      %2245 = vst [vmem:[#allocation3 + $0x768] sm:$0xff] %v2181
      %2246 = vst [vmem:[#allocation3 + $0x770] sm:$0xff] %v2182
      %2247 = vst [vmem:[#allocation3 + $0x778] sm:$0xff] %v2183
      %2248 = vst [vmem:[#allocation3 + $0x780] sm:$0xff] %v2184
      %2249 = vst [vmem:[#allocation3 + $0x788] sm:$0xff] %v2185
      %2250 = vst [vmem:[#allocation3 + $0x790] sm:$0xff] %v2186
      %2251 = vst [vmem:[#allocation3 + $0x798] sm:$0xff] %v2187
      %2252 = vst [vmem:[#allocation3 + $0x7a0] sm:$0xff] %v2188
      %2253 = vst [vmem:[#allocation3 + $0x7a8] sm:$0xff] %v2189
      %2254 = vst [vmem:[#allocation3 + $0x7b0] sm:$0xff] %v2190
      %2255 = vst [vmem:[#allocation3 + $0x7b8] sm:$0xff] %v2191
      %2256 = vst [vmem:[#allocation3 + $0x7c0] sm:$0xff] %v2192
      %2257 = vst [vmem:[#allocation3 + $0x7c8] sm:$0xff] %v2193
      %2258 = vst [vmem:[#allocation3 + $0x7d0] sm:$0xff] %v2194
      %2259 = vst [vmem:[#allocation3 + $0x7d8] sm:$0xff] %v2195
      %2260 = vst [vmem:[#allocation3 + $0x7e0] sm:$0xff] %v2196
      %2261 = vst [vmem:[#allocation3 + $0x7e8] sm:$0xff] %v2197
      %2262 = vst [vmem:[#allocation3 + $0x7f0] sm:$0xff] %v2198
      %2263 = vst [vmem:[#allocation3 + $0x7f8] sm:$0xff] %v2199
      %v2264 = vld [vmem:[#allocation2 + $0x228] sm:$0xff]
      %v2265 = vld [vmem:[#allocation2 + $0x230] sm:$0xff]
      %v2266 = vld [vmem:[#allocation2 + $0x238] sm:$0xff]
      %v2267 = vld [vmem:[#allocation2 + $0x240] sm:$0xff]
      %v2268 = vld [vmem:[#allocation2 + $0x248] sm:$0xff]
      %v2269 = vld [vmem:[#allocation2 + $0x250] sm:$0xff]
      %v2270 = vld [vmem:[#allocation2 + $0x258] sm:$0xff]
      %v2271 = vld [vmem:[#allocation2 + $0x260] sm:$0xff]
      %v2272 = vld [vmem:[#allocation2 + $0x268] sm:$0xff]
      %v2273 = vld [vmem:[#allocation2 + $0x270] sm:$0xff]
      %v2274 = vld [vmem:[#allocation2 + $0x278] sm:$0xff]
      %v2275 = vld [vmem:[#allocation2 + $0x280] sm:$0xff]
      %v2276 = vld [vmem:[#allocation2 + $0x288] sm:$0xff]
      %v2277 = vld [vmem:[#allocation2 + $0x290] sm:$0xff]
      %v2278 = vld [vmem:[#allocation2 + $0x298] sm:$0xff]
      %v2279 = vld [vmem:[#allocation2 + $0x2a0] sm:$0xff]
      %v2280 = vld [vmem:[#allocation2 + $0x2a8] sm:$0xff]
      %v2281 = vld [vmem:[#allocation2 + $0x2b0] sm:$0xff]
      %v2282 = vld [vmem:[#allocation2 + $0x2b8] sm:$0xff]
      %v2283 = vld [vmem:[#allocation2 + $0x2c0] sm:$0xff]
      %v2284 = vld [vmem:[#allocation2 + $0x2c8] sm:$0xff]
      %v2285 = vld [vmem:[#allocation2 + $0x2d0] sm:$0xff]
      %v2286 = vld [vmem:[#allocation2 + $0x2d8] sm:$0xff]
      %v2287 = vld [vmem:[#allocation2 + $0x2e0] sm:$0xff]
      %v2288 = vld [vmem:[#allocation2 + $0x2e8] sm:$0xff]
      %v2289 = vld [vmem:[#allocation2 + $0x2f0] sm:$0xff]
      %v2290 = vld [vmem:[#allocation2 + $0x2f8] sm:$0xff]
      %v2291 = vld [vmem:[#allocation2 + $0x300] sm:$0xff]
      %v2292 = vld [vmem:[#allocation2 + $0x308] sm:$0xff]
      %v2293 = vld [vmem:[#allocation2 + $0x310] sm:$0xff]
      %v2294 = vld [vmem:[#allocation2 + $0x318] sm:$0xff]
      %v2295 = vld [vmem:[#allocation2 + $0x320] sm:$0xff]
      %v2296 = vld [vmem:[#allocation2 + $0x328] sm:$0xff]
      %2330 = vrot.lane.b32.xlu0 %v2264, 63
      %v2331 = vpop.permute.xlu0 %2330
      %2332 = vrot.lane.b32.xlu0 %v2265, 63
      %v2333 = vpop.permute.xlu0 %2332
      %2334 = vrot.lane.b32.xlu0 %v2266, 63
      %v2335 = vpop.permute.xlu0 %2334
      %2336 = vrot.lane.b32.xlu0 %v2267, 63
      %v2337 = vpop.permute.xlu0 %2336
      %2338 = vrot.lane.b32.xlu0 %v2268, 63
      %v2339 = vpop.permute.xlu0 %2338
      %2340 = vrot.lane.b32.xlu0 %v2269, 63
      %v2341 = vpop.permute.xlu0 %2340
      %2342 = vrot.lane.b32.xlu0 %v2270, 63
      %v2343 = vpop.permute.xlu0 %2342
      %2344 = vrot.lane.b32.xlu0 %v2271, 63
      %v2345 = vpop.permute.xlu0 %2344
      %2346 = vrot.lane.b32.xlu0 %v2272, 63
      %v2347 = vpop.permute.xlu0 %2346
      %2348 = vrot.lane.b32.xlu0 %v2273, 63
      %v2349 = vpop.permute.xlu0 %2348
      %2350 = vrot.lane.b32.xlu0 %v2274, 63
      %v2351 = vpop.permute.xlu0 %2350
      %2352 = vrot.lane.b32.xlu0 %v2275, 63
      %v2353 = vpop.permute.xlu0 %2352
      %2354 = vrot.lane.b32.xlu0 %v2276, 63
      %v2355 = vpop.permute.xlu0 %2354
      %2356 = vrot.lane.b32.xlu0 %v2277, 63
      %v2357 = vpop.permute.xlu0 %2356
      %2358 = vrot.lane.b32.xlu0 %v2278, 63
      %v2359 = vpop.permute.xlu0 %2358
      %2360 = vrot.lane.b32.xlu0 %v2279, 63
      %v2361 = vpop.permute.xlu0 %2360
      %2362 = vrot.lane.b32.xlu0 %v2280, 63
      %v2363 = vpop.permute.xlu0 %2362
      %2364 = vrot.lane.b32.xlu0 %v2281, 63
      %v2365 = vpop.permute.xlu0 %2364
      %2366 = vrot.lane.b32.xlu0 %v2282, 63
      %v2367 = vpop.permute.xlu0 %2366
      %2368 = vrot.lane.b32.xlu0 %v2283, 63
      %v2369 = vpop.permute.xlu0 %2368
      %2370 = vrot.lane.b32.xlu0 %v2284, 63
      %v2371 = vpop.permute.xlu0 %2370
      %2372 = vrot.lane.b32.xlu0 %v2285, 63
      %v2373 = vpop.permute.xlu0 %2372
      %2374 = vrot.lane.b32.xlu0 %v2286, 63
      %v2375 = vpop.permute.xlu0 %2374
      %2376 = vrot.lane.b32.xlu0 %v2287, 63
      %v2377 = vpop.permute.xlu0 %2376
      %2378 = vrot.lane.b32.xlu0 %v2288, 63
      %v2379 = vpop.permute.xlu0 %2378
      %2380 = vrot.lane.b32.xlu0 %v2289, 63
      %v2381 = vpop.permute.xlu0 %2380
      %2382 = vrot.lane.b32.xlu0 %v2290, 63
      %v2383 = vpop.permute.xlu0 %2382
      %2384 = vrot.lane.b32.xlu0 %v2291, 63
      %v2385 = vpop.permute.xlu0 %2384
      %2386 = vrot.lane.b32.xlu0 %v2292, 63
      %v2387 = vpop.permute.xlu0 %2386
      %2388 = vrot.lane.b32.xlu0 %v2293, 63
      %v2389 = vpop.permute.xlu0 %2388
      %2390 = vrot.lane.b32.xlu0 %v2294, 63
      %v2391 = vpop.permute.xlu0 %2390
      %2392 = vrot.lane.b32.xlu0 %v2295, 63
      %v2393 = vpop.permute.xlu0 %2392
      %2394 = vrot.lane.b32.xlu0 %v2296, 63
      %v2395 = vpop.permute.xlu0 %2394
      %v2396 = vsel %vm1189, %v2331, %v2333
      %v2397 = vsel %vm1189, %v2333, %v2335
      %v2398 = vsel %vm1189, %v2335, %v2337
      %v2399 = vsel %vm1189, %v2337, %v2339
      %v2400 = vsel %vm1189, %v2339, %v2341
      %v2401 = vsel %vm1189, %v2341, %v2343
      %v2402 = vsel %vm1189, %v2343, %v2345
      %v2403 = vsel %vm1189, %v2345, %v2347
      %v2404 = vsel %vm1189, %v2347, %v2349
      %v2405 = vsel %vm1189, %v2349, %v2351
      %v2406 = vsel %vm1189, %v2351, %v2353
      %v2407 = vsel %vm1189, %v2353, %v2355
      %v2408 = vsel %vm1189, %v2355, %v2357
      %v2409 = vsel %vm1189, %v2357, %v2359
      %v2410 = vsel %vm1189, %v2359, %v2361
      %v2411 = vsel %vm1189, %v2361, %v2363
      %v2412 = vsel %vm1189, %v2363, %v2365
      %v2413 = vsel %vm1189, %v2365, %v2367
      %v2414 = vsel %vm1189, %v2367, %v2369
      %v2415 = vsel %vm1189, %v2369, %v2371
      %v2416 = vsel %vm1189, %v2371, %v2373
      %v2417 = vsel %vm1189, %v2373, %v2375
      %v2418 = vsel %vm1189, %v2375, %v2377
      %v2419 = vsel %vm1189, %v2377, %v2379
      %v2420 = vsel %vm1189, %v2379, %v2381
      %v2421 = vsel %vm1189, %v2381, %v2383
      %v2422 = vsel %vm1189, %v2383, %v2385
      %v2423 = vsel %vm1189, %v2385, %v2387
      %v2424 = vsel %vm1189, %v2387, %v2389
      %v2425 = vsel %vm1189, %v2389, %v2391
      %v2426 = vsel %vm1189, %v2391, %v2393
      %v2427 = vsel %vm1189, %v2393, %v2395
      %2460 = vst [vmem:[#allocation3 + $0x800] sm:$0xff] %v2396
      %2461 = vst [vmem:[#allocation3 + $0x808] sm:$0xff] %v2397
      %2462 = vst [vmem:[#allocation3 + $0x810] sm:$0xff] %v2398
      %2463 = vst [vmem:[#allocation3 + $0x818] sm:$0xff] %v2399
      %2464 = vst [vmem:[#allocation3 + $0x820] sm:$0xff] %v2400
      %2465 = vst [vmem:[#allocation3 + $0x828] sm:$0xff] %v2401
      %2466 = vst [vmem:[#allocation3 + $0x830] sm:$0xff] %v2402
      %2467 = vst [vmem:[#allocation3 + $0x838] sm:$0xff] %v2403
      %2468 = vst [vmem:[#allocation3 + $0x840] sm:$0xff] %v2404
      %2469 = vst [vmem:[#allocation3 + $0x848] sm:$0xff] %v2405
      %2470 = vst [vmem:[#allocation3 + $0x850] sm:$0xff] %v2406
      %2471 = vst [vmem:[#allocation3 + $0x858] sm:$0xff] %v2407
      %2472 = vst [vmem:[#allocation3 + $0x860] sm:$0xff] %v2408
      %2473 = vst [vmem:[#allocation3 + $0x868] sm:$0xff] %v2409
      %2474 = vst [vmem:[#allocation3 + $0x870] sm:$0xff] %v2410
      %2475 = vst [vmem:[#allocation3 + $0x878] sm:$0xff] %v2411
      %2476 = vst [vmem:[#allocation3 + $0x880] sm:$0xff] %v2412
      %2477 = vst [vmem:[#allocation3 + $0x888] sm:$0xff] %v2413
      %2478 = vst [vmem:[#allocation3 + $0x890] sm:$0xff] %v2414
      %2479 = vst [vmem:[#allocation3 + $0x898] sm:$0xff] %v2415
      %2480 = vst [vmem:[#allocation3 + $0x8a0] sm:$0xff] %v2416
      %2481 = vst [vmem:[#allocation3 + $0x8a8] sm:$0xff] %v2417
      %2482 = vst [vmem:[#allocation3 + $0x8b0] sm:$0xff] %v2418
      %2483 = vst [vmem:[#allocation3 + $0x8b8] sm:$0xff] %v2419
      %2484 = vst [vmem:[#allocation3 + $0x8c0] sm:$0xff] %v2420
      %2485 = vst [vmem:[#allocation3 + $0x8c8] sm:$0xff] %v2421
      %2486 = vst [vmem:[#allocation3 + $0x8d0] sm:$0xff] %v2422
      %2487 = vst [vmem:[#allocation3 + $0x8d8] sm:$0xff] %v2423
      %2488 = vst [vmem:[#allocation3 + $0x8e0] sm:$0xff] %v2424
      %2489 = vst [vmem:[#allocation3 + $0x8e8] sm:$0xff] %v2425
      %2490 = vst [vmem:[#allocation3 + $0x8f0] sm:$0xff] %v2426
      %2491 = vst [vmem:[#allocation3 + $0x8f8] sm:$0xff] %v2427
      %v2492 = vld [vmem:[%s1] sm:$0x7]
      %v2493 = vld [vmem:[#allocation3] sm:$0xff]
      %v2494 = vld [vmem:[#allocation3 + $0x8] sm:$0xff]
      %v2495 = vld [vmem:[#allocation3 + $0x10] sm:$0xff]
      %v2496 = vld [vmem:[#allocation3 + $0x18] sm:$0xff]
      %v2497 = vld [vmem:[#allocation3 + $0x20] sm:$0xff]
      %v2498 = vld [vmem:[#allocation3 + $0x28] sm:$0xff]
      %v2499 = vld [vmem:[#allocation3 + $0x30] sm:$0xff]
      %v2500 = vld [vmem:[#allocation3 + $0x38] sm:$0xff]
      %v2501 = vld [vmem:[#allocation3 + $0x40] sm:$0xff]
      %v2502 = vld [vmem:[#allocation3 + $0x48] sm:$0xff]
      %v2503 = vld [vmem:[#allocation3 + $0x50] sm:$0xff]
      %v2504 = vld [vmem:[#allocation3 + $0x58] sm:$0xff]
      %v2505 = vld [vmem:[#allocation3 + $0x60] sm:$0xff]
      %v2506 = vld [vmem:[#allocation3 + $0x68] sm:$0xff]
      %v2507 = vld [vmem:[#allocation3 + $0x70] sm:$0xff]
      %v2508 = vld [vmem:[#allocation3 + $0x78] sm:$0xff]
      %v2509 = vld [vmem:[#allocation3 + $0x80] sm:$0xff]
      %v2510 = vld [vmem:[#allocation3 + $0x88] sm:$0xff]
      %v2511 = vld [vmem:[#allocation3 + $0x90] sm:$0xff]
      %v2512 = vld [vmem:[#allocation3 + $0x98] sm:$0xff]
      %v2513 = vld [vmem:[#allocation3 + $0xa0] sm:$0xff]
      %v2514 = vld [vmem:[#allocation3 + $0xa8] sm:$0xff]
      %v2515 = vld [vmem:[#allocation3 + $0xb0] sm:$0xff]
      %v2516 = vld [vmem:[#allocation3 + $0xb8] sm:$0xff]
      %v2517 = vld [vmem:[#allocation3 + $0xc0] sm:$0xff]
      %v2518 = vld [vmem:[#allocation3 + $0xc8] sm:$0xff]
      %v2519 = vld [vmem:[#allocation3 + $0xd0] sm:$0xff]
      %v2520 = vld [vmem:[#allocation3 + $0xd8] sm:$0xff]
      %v2521 = vld [vmem:[#allocation3 + $0xe0] sm:$0xff]
      %v2522 = vld [vmem:[#allocation3 + $0xe8] sm:$0xff]
      %v2523 = vld [vmem:[#allocation3 + $0xf0] sm:$0xff]
      %v2524 = vld [vmem:[#allocation3 + $0xf8] sm:$0xff]
      %v2525 = vld [vmem:[#allocation3 + $0x100] sm:$0xff]
      %v2526 = vld [vmem:[#allocation3 + $0x108] sm:$0xff]
      %v2527 = vld [vmem:[#allocation3 + $0x110] sm:$0xff]
      %v2528 = vld [vmem:[#allocation3 + $0x118] sm:$0xff]
      %v2529 = vld [vmem:[#allocation3 + $0x120] sm:$0xff]
      %v2530 = vld [vmem:[#allocation3 + $0x128] sm:$0xff]
      %v2531 = vld [vmem:[#allocation3 + $0x130] sm:$0xff]
      %v2532 = vld [vmem:[#allocation3 + $0x138] sm:$0xff]
      %v2533 = vld [vmem:[#allocation3 + $0x140] sm:$0xff]
      %v2534 = vld [vmem:[#allocation3 + $0x148] sm:$0xff]
      %v2535 = vld [vmem:[#allocation3 + $0x150] sm:$0xff]
      %v2536 = vld [vmem:[#allocation3 + $0x158] sm:$0xff]
      %v2537 = vld [vmem:[#allocation3 + $0x160] sm:$0xff]
      %v2538 = vld [vmem:[#allocation3 + $0x168] sm:$0xff]
      %v2539 = vld [vmem:[#allocation3 + $0x170] sm:$0xff]
      %v2540 = vld [vmem:[#allocation3 + $0x178] sm:$0xff]
      %v2541 = vld [vmem:[#allocation3 + $0x180] sm:$0xff]
      %v2542 = vld [vmem:[#allocation3 + $0x188] sm:$0xff]
      %v2543 = vld [vmem:[#allocation3 + $0x190] sm:$0xff]
      %v2544 = vld [vmem:[#allocation3 + $0x198] sm:$0xff]
      %v2545 = vld [vmem:[#allocation3 + $0x1a0] sm:$0xff]
      %v2546 = vld [vmem:[#allocation3 + $0x1a8] sm:$0xff]
      %v2547 = vld [vmem:[#allocation3 + $0x1b0] sm:$0xff]
      %v2548 = vld [vmem:[#allocation3 + $0x1b8] sm:$0xff]
      %v2549 = vld [vmem:[#allocation3 + $0x1c0] sm:$0xff]
      %v2550 = vld [vmem:[#allocation3 + $0x1c8] sm:$0xff]
      %v2551 = vld [vmem:[#allocation3 + $0x1d0] sm:$0xff]
      %v2552 = vld [vmem:[#allocation3 + $0x1d8] sm:$0xff]
      %v2553 = vld [vmem:[#allocation3 + $0x1e0] sm:$0xff]
      %v2554 = vld [vmem:[#allocation3 + $0x1e8] sm:$0xff]
      %v2555 = vld [vmem:[#allocation3 + $0x1f0] sm:$0xff]
      %v2556 = vld [vmem:[#allocation3 + $0x1f8] sm:$0xff]
      %v2557 = vld [vmem:[#allocation3 + $0x200] sm:$0xff]
      %v2558 = vld [vmem:[#allocation3 + $0x208] sm:$0xff]
      %v2559 = vld [vmem:[#allocation3 + $0x210] sm:$0xff]
      %v2560 = vld [vmem:[#allocation3 + $0x218] sm:$0xff]
      %v2561 = vld [vmem:[#allocation3 + $0x220] sm:$0xff]
      %v2562 = vld [vmem:[#allocation3 + $0x228] sm:$0xff]
      %v2563 = vld [vmem:[#allocation3 + $0x230] sm:$0xff]
      %v2564 = vld [vmem:[#allocation3 + $0x238] sm:$0xff]
      %v2565 = vld [vmem:[#allocation3 + $0x240] sm:$0xff]
      %v2566 = vld [vmem:[#allocation3 + $0x248] sm:$0xff]
      %v2567 = vld [vmem:[#allocation3 + $0x250] sm:$0xff]
      %v2568 = vld [vmem:[#allocation3 + $0x258] sm:$0xff]
      %v2569 = vld [vmem:[#allocation3 + $0x260] sm:$0xff]
      %v2570 = vld [vmem:[#allocation3 + $0x268] sm:$0xff]
      %v2571 = vld [vmem:[#allocation3 + $0x270] sm:$0xff]
      %v2572 = vld [vmem:[#allocation3 + $0x278] sm:$0xff]
      %v2573 = vld [vmem:[#allocation3 + $0x280] sm:$0xff]
      %v2574 = vld [vmem:[#allocation3 + $0x288] sm:$0xff]
      %v2575 = vld [vmem:[#allocation3 + $0x290] sm:$0xff]
      %v2576 = vld [vmem:[#allocation3 + $0x298] sm:$0xff]
      %v2577 = vld [vmem:[#allocation3 + $0x2a0] sm:$0xff]
      %v2578 = vld [vmem:[#allocation3 + $0x2a8] sm:$0xff]
      %v2579 = vld [vmem:[#allocation3 + $0x2b0] sm:$0xff]
      %v2580 = vld [vmem:[#allocation3 + $0x2b8] sm:$0xff]
      %v2581 = vld [vmem:[#allocation3 + $0x2c0] sm:$0xff]
      %v2582 = vld [vmem:[#allocation3 + $0x2c8] sm:$0xff]
      %v2583 = vld [vmem:[#allocation3 + $0x2d0] sm:$0xff]
      %v2584 = vld [vmem:[#allocation3 + $0x2d8] sm:$0xff]
      %v2585 = vld [vmem:[#allocation3 + $0x2e0] sm:$0xff]
      %v2586 = vld [vmem:[#allocation3 + $0x2e8] sm:$0xff]
      %v2587 = vld [vmem:[#allocation3 + $0x2f0] sm:$0xff]
      %v2588 = vld [vmem:[#allocation3 + $0x2f8] sm:$0xff]
      %v2589 = vld [vmem:[#allocation3 + $0x300] sm:$0xff]
      %v2590 = vld [vmem:[#allocation3 + $0x308] sm:$0xff]
      %v2591 = vld [vmem:[#allocation3 + $0x310] sm:$0xff]
      %v2592 = vld [vmem:[#allocation3 + $0x318] sm:$0xff]
      %v2593 = vld [vmem:[#allocation3 + $0x320] sm:$0xff]
      %v2594 = vld [vmem:[#allocation3 + $0x328] sm:$0xff]
      %v2595 = vld [vmem:[#allocation3 + $0x330] sm:$0xff]
      %v2596 = vld [vmem:[#allocation3 + $0x338] sm:$0xff]
      %v2597 = vld [vmem:[#allocation3 + $0x340] sm:$0xff]
      %v2598 = vld [vmem:[#allocation3 + $0x348] sm:$0xff]
      %v2599 = vld [vmem:[#allocation3 + $0x350] sm:$0xff]
      %v2600 = vld [vmem:[#allocation3 + $0x358] sm:$0xff]
      %v2601 = vld [vmem:[#allocation3 + $0x360] sm:$0xff]
      %v2602 = vld [vmem:[#allocation3 + $0x368] sm:$0xff]
      %v2603 = vld [vmem:[#allocation3 + $0x370] sm:$0xff]
      %v2604 = vld [vmem:[#allocation3 + $0x378] sm:$0xff]
      %v2605 = vld [vmem:[#allocation3 + $0x380] sm:$0xff]
      %v2606 = vld [vmem:[#allocation3 + $0x388] sm:$0xff]
      %v2607 = vld [vmem:[#allocation3 + $0x390] sm:$0xff]
      %v2608 = vld [vmem:[#allocation3 + $0x398] sm:$0xff]
      %v2609 = vld [vmem:[#allocation3 + $0x3a0] sm:$0xff]
      %v2610 = vld [vmem:[#allocation3 + $0x3a8] sm:$0xff]
      %v2611 = vld [vmem:[#allocation3 + $0x3b0] sm:$0xff]
      %v2612 = vld [vmem:[#allocation3 + $0x3b8] sm:$0xff]
      %v2613 = vld [vmem:[#allocation3 + $0x3c0] sm:$0xff]
      %v2614 = vld [vmem:[#allocation3 + $0x3c8] sm:$0xff]
      %v2615 = vld [vmem:[#allocation3 + $0x3d0] sm:$0xff]
      %v2616 = vld [vmem:[#allocation3 + $0x3d8] sm:$0xff]
      %v2617 = vld [vmem:[#allocation3 + $0x3e0] sm:$0xff]
      %v2618 = vld [vmem:[#allocation3 + $0x3e8] sm:$0xff]
      %v2619 = vld [vmem:[#allocation3 + $0x3f0] sm:$0xff]
      %v2620 = vld [vmem:[#allocation3 + $0x3f8] sm:$0xff]
      %v2621 = vld [vmem:[#allocation3 + $0x400] sm:$0xff]
      %v2622 = vld [vmem:[#allocation3 + $0x408] sm:$0xff]
      %v2623 = vld [vmem:[#allocation3 + $0x410] sm:$0xff]
      %v2624 = vld [vmem:[#allocation3 + $0x418] sm:$0xff]
      %v2625 = vld [vmem:[#allocation3 + $0x420] sm:$0xff]
      %v2626 = vld [vmem:[#allocation3 + $0x428] sm:$0xff]
      %v2627 = vld [vmem:[#allocation3 + $0x430] sm:$0xff]
      %v2628 = vld [vmem:[#allocation3 + $0x438] sm:$0xff]
      %v2629 = vld [vmem:[#allocation3 + $0x440] sm:$0xff]
      %v2630 = vld [vmem:[#allocation3 + $0x448] sm:$0xff]
      %v2631 = vld [vmem:[#allocation3 + $0x450] sm:$0xff]
      %v2632 = vld [vmem:[#allocation3 + $0x458] sm:$0xff]
      %v2633 = vld [vmem:[#allocation3 + $0x460] sm:$0xff]
      %v2634 = vld [vmem:[#allocation3 + $0x468] sm:$0xff]
      %v2635 = vld [vmem:[#allocation3 + $0x470] sm:$0xff]
      %v2636 = vld [vmem:[#allocation3 + $0x478] sm:$0xff]
      %v2637 = vld [vmem:[#allocation3 + $0x480] sm:$0xff]
      %v2638 = vld [vmem:[#allocation3 + $0x488] sm:$0xff]
      %v2639 = vld [vmem:[#allocation3 + $0x490] sm:$0xff]
      %v2640 = vld [vmem:[#allocation3 + $0x498] sm:$0xff]
      %v2641 = vld [vmem:[#allocation3 + $0x4a0] sm:$0xff]
      %v2642 = vld [vmem:[#allocation3 + $0x4a8] sm:$0xff]
      %v2643 = vld [vmem:[#allocation3 + $0x4b0] sm:$0xff]
      %v2644 = vld [vmem:[#allocation3 + $0x4b8] sm:$0xff]
      %v2645 = vld [vmem:[#allocation3 + $0x4c0] sm:$0xff]
      %v2646 = vld [vmem:[#allocation3 + $0x4c8] sm:$0xff]
      %v2647 = vld [vmem:[#allocation3 + $0x4d0] sm:$0xff]
      %v2648 = vld [vmem:[#allocation3 + $0x4d8] sm:$0xff]
      %v2649 = vld [vmem:[#allocation3 + $0x4e0] sm:$0xff]
      %v2650 = vld [vmem:[#allocation3 + $0x4e8] sm:$0xff]
      %v2651 = vld [vmem:[#allocation3 + $0x4f0] sm:$0xff]
      %v2652 = vld [vmem:[#allocation3 + $0x4f8] sm:$0xff]
      %v2653 = vld [vmem:[#allocation3 + $0x500] sm:$0xff]
      %v2654 = vld [vmem:[#allocation3 + $0x508] sm:$0xff]
      %v2655 = vld [vmem:[#allocation3 + $0x510] sm:$0xff]
      %v2656 = vld [vmem:[#allocation3 + $0x518] sm:$0xff]
      %v2657 = vld [vmem:[#allocation3 + $0x520] sm:$0xff]
      %v2658 = vld [vmem:[#allocation3 + $0x528] sm:$0xff]
      %v2659 = vld [vmem:[#allocation3 + $0x530] sm:$0xff]
      %v2660 = vld [vmem:[#allocation3 + $0x538] sm:$0xff]
      %v2661 = vld [vmem:[#allocation3 + $0x540] sm:$0xff]
      %v2662 = vld [vmem:[#allocation3 + $0x548] sm:$0xff]
      %v2663 = vld [vmem:[#allocation3 + $0x550] sm:$0xff]
      %v2664 = vld [vmem:[#allocation3 + $0x558] sm:$0xff]
      %v2665 = vld [vmem:[#allocation3 + $0x560] sm:$0xff]
      %v2666 = vld [vmem:[#allocation3 + $0x568] sm:$0xff]
      %v2667 = vld [vmem:[#allocation3 + $0x570] sm:$0xff]
      %v2668 = vld [vmem:[#allocation3 + $0x578] sm:$0xff]
      %v2669 = vld [vmem:[#allocation3 + $0x580] sm:$0xff]
      %v2670 = vld [vmem:[#allocation3 + $0x588] sm:$0xff]
      %v2671 = vld [vmem:[#allocation3 + $0x590] sm:$0xff]
      %v2672 = vld [vmem:[#allocation3 + $0x598] sm:$0xff]
      %v2673 = vld [vmem:[#allocation3 + $0x5a0] sm:$0xff]
      %v2674 = vld [vmem:[#allocation3 + $0x5a8] sm:$0xff]
      %v2675 = vld [vmem:[#allocation3 + $0x5b0] sm:$0xff]
      %v2676 = vld [vmem:[#allocation3 + $0x5b8] sm:$0xff]
      %v2677 = vld [vmem:[#allocation3 + $0x5c0] sm:$0xff]
      %v2678 = vld [vmem:[#allocation3 + $0x5c8] sm:$0xff]
      %v2679 = vld [vmem:[#allocation3 + $0x5d0] sm:$0xff]
      %v2680 = vld [vmem:[#allocation3 + $0x5d8] sm:$0xff]
      %v2681 = vld [vmem:[#allocation3 + $0x5e0] sm:$0xff]
      %v2682 = vld [vmem:[#allocation3 + $0x5e8] sm:$0xff]
      %v2683 = vld [vmem:[#allocation3 + $0x5f0] sm:$0xff]
      %v2684 = vld [vmem:[#allocation3 + $0x5f8] sm:$0xff]
      %v2685 = vld [vmem:[#allocation3 + $0x600] sm:$0xff]
      %v2686 = vld [vmem:[#allocation3 + $0x608] sm:$0xff]
      %v2687 = vld [vmem:[#allocation3 + $0x610] sm:$0xff]
      %v2688 = vld [vmem:[#allocation3 + $0x618] sm:$0xff]
      %v2689 = vld [vmem:[#allocation3 + $0x620] sm:$0xff]
      %v2690 = vld [vmem:[#allocation3 + $0x628] sm:$0xff]
      %v2691 = vld [vmem:[#allocation3 + $0x630] sm:$0xff]
      %v2692 = vld [vmem:[#allocation3 + $0x638] sm:$0xff]
      %v2693 = vld [vmem:[#allocation3 + $0x640] sm:$0xff]
      %v2694 = vld [vmem:[#allocation3 + $0x648] sm:$0xff]
      %v2695 = vld [vmem:[#allocation3 + $0x650] sm:$0xff]
      %v2696 = vld [vmem:[#allocation3 + $0x658] sm:$0xff]
      %v2697 = vld [vmem:[#allocation3 + $0x660] sm:$0xff]
      %v2698 = vld [vmem:[#allocation3 + $0x668] sm:$0xff]
      %v2699 = vld [vmem:[#allocation3 + $0x670] sm:$0xff]
      %v2700 = vld [vmem:[#allocation3 + $0x678] sm:$0xff]
      %v2701 = vld [vmem:[#allocation3 + $0x680] sm:$0xff]
      %v2702 = vld [vmem:[#allocation3 + $0x688] sm:$0xff]
      %v2703 = vld [vmem:[#allocation3 + $0x690] sm:$0xff]
      %v2704 = vld [vmem:[#allocation3 + $0x698] sm:$0xff]
      %v2705 = vld [vmem:[#allocation3 + $0x6a0] sm:$0xff]
      %v2706 = vld [vmem:[#allocation3 + $0x6a8] sm:$0xff]
      %v2707 = vld [vmem:[#allocation3 + $0x6b0] sm:$0xff]
      %v2708 = vld [vmem:[#allocation3 + $0x6b8] sm:$0xff]
      %v2709 = vld [vmem:[#allocation3 + $0x6c0] sm:$0xff]
      %v2710 = vld [vmem:[#allocation3 + $0x6c8] sm:$0xff]
      %v2711 = vld [vmem:[#allocation3 + $0x6d0] sm:$0xff]
      %v2712 = vld [vmem:[#allocation3 + $0x6d8] sm:$0xff]
      %v2713 = vld [vmem:[#allocation3 + $0x6e0] sm:$0xff]
      %v2714 = vld [vmem:[#allocation3 + $0x6e8] sm:$0xff]
      %v2715 = vld [vmem:[#allocation3 + $0x6f0] sm:$0xff]
      %v2716 = vld [vmem:[#allocation3 + $0x6f8] sm:$0xff]
      %v2717 = vld [vmem:[#allocation3 + $0x700] sm:$0xff]
      %v2718 = vld [vmem:[#allocation3 + $0x708] sm:$0xff]
      %v2719 = vld [vmem:[#allocation3 + $0x710] sm:$0xff]
      %v2720 = vld [vmem:[#allocation3 + $0x718] sm:$0xff]
      %v2721 = vld [vmem:[#allocation3 + $0x720] sm:$0xff]
      %v2722 = vld [vmem:[#allocation3 + $0x728] sm:$0xff]
      %v2723 = vld [vmem:[#allocation3 + $0x730] sm:$0xff]
      %v2724 = vld [vmem:[#allocation3 + $0x738] sm:$0xff]
      %v2725 = vld [vmem:[#allocation3 + $0x740] sm:$0xff]
      %v2726 = vld [vmem:[#allocation3 + $0x748] sm:$0xff]
      %v2727 = vld [vmem:[#allocation3 + $0x750] sm:$0xff]
      %v2728 = vld [vmem:[#allocation3 + $0x758] sm:$0xff]
      %v2729 = vld [vmem:[#allocation3 + $0x760] sm:$0xff]
      %v2730 = vld [vmem:[#allocation3 + $0x768] sm:$0xff]
      %v2731 = vld [vmem:[#allocation3 + $0x770] sm:$0xff]
      %v2732 = vld [vmem:[#allocation3 + $0x778] sm:$0xff]
      %v2733 = vld [vmem:[#allocation3 + $0x780] sm:$0xff]
      %v2734 = vld [vmem:[#allocation3 + $0x788] sm:$0xff]
      %v2735 = vld [vmem:[#allocation3 + $0x790] sm:$0xff]
      %v2736 = vld [vmem:[#allocation3 + $0x798] sm:$0xff]
      %v2737 = vld [vmem:[#allocation3 + $0x7a0] sm:$0xff]
      %v2738 = vld [vmem:[#allocation3 + $0x7a8] sm:$0xff]
      %v2739 = vld [vmem:[#allocation3 + $0x7b0] sm:$0xff]
      %v2740 = vld [vmem:[#allocation3 + $0x7b8] sm:$0xff]
      %v2741 = vld [vmem:[#allocation3 + $0x7c0] sm:$0xff]
      %v2742 = vld [vmem:[#allocation3 + $0x7c8] sm:$0xff]
      %v2743 = vld [vmem:[#allocation3 + $0x7d0] sm:$0xff]
      %v2744 = vld [vmem:[#allocation3 + $0x7d8] sm:$0xff]
      %v2745 = vld [vmem:[#allocation3 + $0x7e0] sm:$0xff]
      %v2746 = vld [vmem:[#allocation3 + $0x7e8] sm:$0xff]
      %v2747 = vld [vmem:[#allocation3 + $0x7f0] sm:$0xff]
      %v2748 = vld [vmem:[#allocation3 + $0x7f8] sm:$0xff]
      %v2749 = vld [vmem:[#allocation3 + $0x800] sm:$0xff]
      %v2750 = vld [vmem:[#allocation3 + $0x808] sm:$0xff]
      %v2751 = vld [vmem:[#allocation3 + $0x810] sm:$0xff]
      %v2752 = vld [vmem:[#allocation3 + $0x818] sm:$0xff]
      %v2753 = vld [vmem:[#allocation3 + $0x820] sm:$0xff]
      %v2754 = vld [vmem:[#allocation3 + $0x828] sm:$0xff]
      %v2755 = vld [vmem:[#allocation3 + $0x830] sm:$0xff]
      %v2756 = vld [vmem:[#allocation3 + $0x838] sm:$0xff]
      %v2757 = vld [vmem:[#allocation3 + $0x840] sm:$0xff]
      %v2758 = vld [vmem:[#allocation3 + $0x848] sm:$0xff]
      %v2759 = vld [vmem:[#allocation3 + $0x850] sm:$0xff]
      %v2760 = vld [vmem:[#allocation3 + $0x858] sm:$0xff]
      %v2761 = vld [vmem:[#allocation3 + $0x860] sm:$0xff]
      %v2762 = vld [vmem:[#allocation3 + $0x868] sm:$0xff]
      %v2763 = vld [vmem:[#allocation3 + $0x870] sm:$0xff]
      %v2764 = vld [vmem:[#allocation3 + $0x878] sm:$0xff]
      %v2765 = vld [vmem:[#allocation3 + $0x880] sm:$0xff]
      %v2766 = vld [vmem:[#allocation3 + $0x888] sm:$0xff]
      %v2767 = vld [vmem:[#allocation3 + $0x890] sm:$0xff]
      %v2768 = vld [vmem:[#allocation3 + $0x898] sm:$0xff]
      %v2769 = vld [vmem:[#allocation3 + $0x8a0] sm:$0xff]
      %v2770 = vld [vmem:[#allocation3 + $0x8a8] sm:$0xff]
      %v2771 = vld [vmem:[#allocation3 + $0x8b0] sm:$0xff]
      %v2772 = vld [vmem:[#allocation3 + $0x8b8] sm:$0xff]
      %v2773 = vld [vmem:[#allocation3 + $0x8c0] sm:$0xff]
      %v2774 = vld [vmem:[#allocation3 + $0x8c8] sm:$0xff]
      %v2775 = vld [vmem:[#allocation3 + $0x8d0] sm:$0xff]
      %v2776 = vld [vmem:[#allocation3 + $0x8d8] sm:$0xff]
      %v2777 = vld [vmem:[#allocation3 + $0x8e0] sm:$0xff]
      %v2778 = vld [vmem:[#allocation3 + $0x8e8] sm:$0xff]
      %v2779 = vld [vmem:[#allocation3 + $0x8f0] sm:$0xff]
      %v2780 = vld [vmem:[#allocation3 + $0x8f8] sm:$0xff]
      %vm2781 = vcmask 588800
      %v2783 = vsel %vm2781, %v2492, 0
      %2785 = vmatpush.msra.mxu0 0.0
      %2786 = vmatpush.msra.mxu0 0.0
      %2787 = vmatpush.msra.mxu0 0.0
      %2788 = vmatpush.msra.mxu0 0.0
      %2789 = vmatpush.msra.mxu0 0.0
      %2790 = vmatpush.msra.mxu0 0.0
      %2791 = vmatpush.msra.mxu0 0.0
      %2792 = vmatpush.msra.mxu0 %v2749
      %2793 = vmatpush.msra.mxu0 %v2717
      %2794 = vmatpush.msra.mxu0 %v2685
      %2795 = vmatpush.msra.mxu0 %v2653
      %2796 = vmatpush.msra.mxu0 %v2621
      %2797 = vmatpush.msra.mxu0 %v2589
      %2798 = vmatpush.msra.mxu0 %v2557
      %2799 = vmatpush.msra.mxu0 %v2525
      %2800 = vmatpush.msra.mxu0 %v2493
      %2801 = vmatmul.f32.gmra.mxu0 %v2783
      %v2802 = vpop.f32.mrf.mxu0
      %v2803 = vadd.f32 0.0, %v2802
      %2804 = vdwg.mxu0
      %2805 = vmatpush.msra.mxu0 0.0
      %2806 = vmatpush.msra.mxu0 0.0
      %2807 = vmatpush.msra.mxu0 0.0
      %2808 = vmatpush.msra.mxu0 0.0
      %2809 = vmatpush.msra.mxu0 0.0
      %2810 = vmatpush.msra.mxu0 0.0
      %2811 = vmatpush.msra.mxu0 0.0
      %2812 = vmatpush.msra.mxu0 %v2750
      %2813 = vmatpush.msra.mxu0 %v2718
      %2814 = vmatpush.msra.mxu0 %v2686
      %2815 = vmatpush.msra.mxu0 %v2654
      %2816 = vmatpush.msra.mxu0 %v2622
      %2817 = vmatpush.msra.mxu0 %v2590
      %2818 = vmatpush.msra.mxu0 %v2558
      %2819 = vmatpush.msra.mxu0 %v2526
      %2820 = vmatpush.msra.mxu0 %v2494
      %2821 = vmatmul.f32.gmra.mxu0 %v2783
      %v2822 = vpop.f32.mrf.mxu0
      %v2823 = vadd.f32 0.0, %v2822
      %2824 = vdwg.mxu0
      %2825 = vmatpush.msra.mxu0 0.0
      %2826 = vmatpush.msra.mxu0 0.0
      %2827 = vmatpush.msra.mxu0 0.0
      %2828 = vmatpush.msra.mxu0 0.0
      %2829 = vmatpush.msra.mxu0 0.0
      %2830 = vmatpush.msra.mxu0 0.0
      %2831 = vmatpush.msra.mxu0 0.0
      %2832 = vmatpush.msra.mxu0 %v2751
      %2833 = vmatpush.msra.mxu0 %v2719
      %2834 = vmatpush.msra.mxu0 %v2687
      %2835 = vmatpush.msra.mxu0 %v2655
      %2836 = vmatpush.msra.mxu0 %v2623
      %2837 = vmatpush.msra.mxu0 %v2591
      %2838 = vmatpush.msra.mxu0 %v2559
      %2839 = vmatpush.msra.mxu0 %v2527
      %2840 = vmatpush.msra.mxu0 %v2495
      %2841 = vmatmul.f32.gmra.mxu0 %v2783
      %v2842 = vpop.f32.mrf.mxu0
      %v2843 = vadd.f32 0.0, %v2842
      %2844 = vdwg.mxu0
      %2845 = vmatpush.msra.mxu0 0.0
      %2846 = vmatpush.msra.mxu0 0.0
      %2847 = vmatpush.msra.mxu0 0.0
      %2848 = vmatpush.msra.mxu0 0.0
      %2849 = vmatpush.msra.mxu0 0.0
      %2850 = vmatpush.msra.mxu0 0.0
      %2851 = vmatpush.msra.mxu0 0.0
      %2852 = vmatpush.msra.mxu0 %v2752
      %2853 = vmatpush.msra.mxu0 %v2720
      %2854 = vmatpush.msra.mxu0 %v2688
      %2855 = vmatpush.msra.mxu0 %v2656
      %2856 = vmatpush.msra.mxu0 %v2624
      %2857 = vmatpush.msra.mxu0 %v2592
      %2858 = vmatpush.msra.mxu0 %v2560
      %2859 = vmatpush.msra.mxu0 %v2528
      %2860 = vmatpush.msra.mxu0 %v2496
      %2861 = vmatmul.f32.gmra.mxu0 %v2783
      %v2862 = vpop.f32.mrf.mxu0
      %v2863 = vadd.f32 0.0, %v2862
      %2864 = vdwg.mxu0
      %2865 = vmatpush.msra.mxu0 0.0
      %2866 = vmatpush.msra.mxu0 0.0
      %2867 = vmatpush.msra.mxu0 0.0
      %2868 = vmatpush.msra.mxu0 0.0
      %2869 = vmatpush.msra.mxu0 0.0
      %2870 = vmatpush.msra.mxu0 0.0
      %2871 = vmatpush.msra.mxu0 0.0
      %2872 = vmatpush.msra.mxu0 %v2753
      %2873 = vmatpush.msra.mxu0 %v2721
      %2874 = vmatpush.msra.mxu0 %v2689
      %2875 = vmatpush.msra.mxu0 %v2657
      %2876 = vmatpush.msra.mxu0 %v2625
      %2877 = vmatpush.msra.mxu0 %v2593
      %2878 = vmatpush.msra.mxu0 %v2561
      %2879 = vmatpush.msra.mxu0 %v2529
      %2880 = vmatpush.msra.mxu0 %v2497
      %2881 = vmatmul.f32.gmra.mxu0 %v2783
      %v2882 = vpop.f32.mrf.mxu0
      %v2883 = vadd.f32 0.0, %v2882
      %2884 = vdwg.mxu0
      %2885 = vmatpush.msra.mxu0 0.0
      %2886 = vmatpush.msra.mxu0 0.0
      %2887 = vmatpush.msra.mxu0 0.0
      %2888 = vmatpush.msra.mxu0 0.0
      %2889 = vmatpush.msra.mxu0 0.0
      %2890 = vmatpush.msra.mxu0 0.0
      %2891 = vmatpush.msra.mxu0 0.0
      %2892 = vmatpush.msra.mxu0 %v2754
      %2893 = vmatpush.msra.mxu0 %v2722
      %2894 = vmatpush.msra.mxu0 %v2690
      %2895 = vmatpush.msra.mxu0 %v2658
      %2896 = vmatpush.msra.mxu0 %v2626
      %2897 = vmatpush.msra.mxu0 %v2594
      %2898 = vmatpush.msra.mxu0 %v2562
      %2899 = vmatpush.msra.mxu0 %v2530
      %2900 = vmatpush.msra.mxu0 %v2498
      %2901 = vmatmul.f32.gmra.mxu0 %v2783
      %v2902 = vpop.f32.mrf.mxu0
      %v2903 = vadd.f32 0.0, %v2902
      %2904 = vdwg.mxu0
      %2905 = vmatpush.msra.mxu0 0.0
      %2906 = vmatpush.msra.mxu0 0.0
      %2907 = vmatpush.msra.mxu0 0.0
      %2908 = vmatpush.msra.mxu0 0.0
      %2909 = vmatpush.msra.mxu0 0.0
      %2910 = vmatpush.msra.mxu0 0.0
      %2911 = vmatpush.msra.mxu0 0.0
      %2912 = vmatpush.msra.mxu0 %v2755
      %2913 = vmatpush.msra.mxu0 %v2723
      %2914 = vmatpush.msra.mxu0 %v2691
      %2915 = vmatpush.msra.mxu0 %v2659
      %2916 = vmatpush.msra.mxu0 %v2627
      %2917 = vmatpush.msra.mxu0 %v2595
      %2918 = vmatpush.msra.mxu0 %v2563
      %2919 = vmatpush.msra.mxu0 %v2531
      %2920 = vmatpush.msra.mxu0 %v2499
      %2921 = vmatmul.f32.gmra.mxu0 %v2783
      %v2922 = vpop.f32.mrf.mxu0
      %v2923 = vadd.f32 0.0, %v2922
      %2924 = vdwg.mxu0
      %2925 = vmatpush.msra.mxu0 0.0
      %2926 = vmatpush.msra.mxu0 0.0
      %2927 = vmatpush.msra.mxu0 0.0
      %2928 = vmatpush.msra.mxu0 0.0
      %2929 = vmatpush.msra.mxu0 0.0
      %2930 = vmatpush.msra.mxu0 0.0
      %2931 = vmatpush.msra.mxu0 0.0
      %2932 = vmatpush.msra.mxu0 %v2756
      %2933 = vmatpush.msra.mxu0 %v2724
      %2934 = vmatpush.msra.mxu0 %v2692
      %2935 = vmatpush.msra.mxu0 %v2660
      %2936 = vmatpush.msra.mxu0 %v2628
      %2937 = vmatpush.msra.mxu0 %v2596
      %2938 = vmatpush.msra.mxu0 %v2564
      %2939 = vmatpush.msra.mxu0 %v2532
      %2940 = vmatpush.msra.mxu0 %v2500
      %2941 = vmatmul.f32.gmra.mxu0 %v2783
      %v2942 = vpop.f32.mrf.mxu0
      %v2943 = vadd.f32 0.0, %v2942
      %2944 = vdwg.mxu0
      %2945 = vmatpush.msra.mxu0 0.0
      %2946 = vmatpush.msra.mxu0 0.0
      %2947 = vmatpush.msra.mxu0 0.0
      %2948 = vmatpush.msra.mxu0 0.0
      %2949 = vmatpush.msra.mxu0 0.0
      %2950 = vmatpush.msra.mxu0 0.0
      %2951 = vmatpush.msra.mxu0 0.0
      %2952 = vmatpush.msra.mxu0 %v2757
      %2953 = vmatpush.msra.mxu0 %v2725
      %2954 = vmatpush.msra.mxu0 %v2693
      %2955 = vmatpush.msra.mxu0 %v2661
      %2956 = vmatpush.msra.mxu0 %v2629
      %2957 = vmatpush.msra.mxu0 %v2597
      %2958 = vmatpush.msra.mxu0 %v2565
      %2959 = vmatpush.msra.mxu0 %v2533
      %2960 = vmatpush.msra.mxu0 %v2501
      %2961 = vmatmul.f32.gmra.mxu0 %v2783
      %v2962 = vpop.f32.mrf.mxu0
      %v2963 = vadd.f32 0.0, %v2962
      %2964 = vdwg.mxu0
      %2965 = vmatpush.msra.mxu0 0.0
      %2966 = vmatpush.msra.mxu0 0.0
      %2967 = vmatpush.msra.mxu0 0.0
      %2968 = vmatpush.msra.mxu0 0.0
      %2969 = vmatpush.msra.mxu0 0.0
      %2970 = vmatpush.msra.mxu0 0.0
      %2971 = vmatpush.msra.mxu0 0.0
      %2972 = vmatpush.msra.mxu0 %v2758
      %2973 = vmatpush.msra.mxu0 %v2726
      %2974 = vmatpush.msra.mxu0 %v2694
      %2975 = vmatpush.msra.mxu0 %v2662
      %2976 = vmatpush.msra.mxu0 %v2630
      %2977 = vmatpush.msra.mxu0 %v2598
      %2978 = vmatpush.msra.mxu0 %v2566
      %2979 = vmatpush.msra.mxu0 %v2534
      %2980 = vmatpush.msra.mxu0 %v2502
      %2981 = vmatmul.f32.gmra.mxu0 %v2783
      %v2982 = vpop.f32.mrf.mxu0
      %v2983 = vadd.f32 0.0, %v2982
      %2984 = vdwg.mxu0
      %2985 = vmatpush.msra.mxu0 0.0
      %2986 = vmatpush.msra.mxu0 0.0
      %2987 = vmatpush.msra.mxu0 0.0
      %2988 = vmatpush.msra.mxu0 0.0
      %2989 = vmatpush.msra.mxu0 0.0
      %2990 = vmatpush.msra.mxu0 0.0
      %2991 = vmatpush.msra.mxu0 0.0
      %2992 = vmatpush.msra.mxu0 %v2759
      %2993 = vmatpush.msra.mxu0 %v2727
      %2994 = vmatpush.msra.mxu0 %v2695
      %2995 = vmatpush.msra.mxu0 %v2663
      %2996 = vmatpush.msra.mxu0 %v2631
      %2997 = vmatpush.msra.mxu0 %v2599
      %2998 = vmatpush.msra.mxu0 %v2567
      %2999 = vmatpush.msra.mxu0 %v2535
      %3000 = vmatpush.msra.mxu0 %v2503
      %3001 = vmatmul.f32.gmra.mxu0 %v2783
      %v3002 = vpop.f32.mrf.mxu0
      %v3003 = vadd.f32 0.0, %v3002
      %3004 = vdwg.mxu0
      %3005 = vmatpush.msra.mxu0 0.0
      %3006 = vmatpush.msra.mxu0 0.0
      %3007 = vmatpush.msra.mxu0 0.0
      %3008 = vmatpush.msra.mxu0 0.0
      %3009 = vmatpush.msra.mxu0 0.0
      %3010 = vmatpush.msra.mxu0 0.0
      %3011 = vmatpush.msra.mxu0 0.0
      %3012 = vmatpush.msra.mxu0 %v2760
      %3013 = vmatpush.msra.mxu0 %v2728
      %3014 = vmatpush.msra.mxu0 %v2696
      %3015 = vmatpush.msra.mxu0 %v2664
      %3016 = vmatpush.msra.mxu0 %v2632
      %3017 = vmatpush.msra.mxu0 %v2600
      %3018 = vmatpush.msra.mxu0 %v2568
      %3019 = vmatpush.msra.mxu0 %v2536
      %3020 = vmatpush.msra.mxu0 %v2504
      %3021 = vmatmul.f32.gmra.mxu0 %v2783
      %v3022 = vpop.f32.mrf.mxu0
      %v3023 = vadd.f32 0.0, %v3022
      %3024 = vdwg.mxu0
      %3025 = vmatpush.msra.mxu0 0.0
      %3026 = vmatpush.msra.mxu0 0.0
      %3027 = vmatpush.msra.mxu0 0.0
      %3028 = vmatpush.msra.mxu0 0.0
      %3029 = vmatpush.msra.mxu0 0.0
      %3030 = vmatpush.msra.mxu0 0.0
      %3031 = vmatpush.msra.mxu0 0.0
      %3032 = vmatpush.msra.mxu0 %v2761
      %3033 = vmatpush.msra.mxu0 %v2729
      %3034 = vmatpush.msra.mxu0 %v2697
      %3035 = vmatpush.msra.mxu0 %v2665
      %3036 = vmatpush.msra.mxu0 %v2633
      %3037 = vmatpush.msra.mxu0 %v2601
      %3038 = vmatpush.msra.mxu0 %v2569
      %3039 = vmatpush.msra.mxu0 %v2537
      %3040 = vmatpush.msra.mxu0 %v2505
      %3041 = vmatmul.f32.gmra.mxu0 %v2783
      %v3042 = vpop.f32.mrf.mxu0
      %v3043 = vadd.f32 0.0, %v3042
      %3044 = vdwg.mxu0
      %3045 = vmatpush.msra.mxu0 0.0
      %3046 = vmatpush.msra.mxu0 0.0
      %3047 = vmatpush.msra.mxu0 0.0
      %3048 = vmatpush.msra.mxu0 0.0
      %3049 = vmatpush.msra.mxu0 0.0
      %3050 = vmatpush.msra.mxu0 0.0
      %3051 = vmatpush.msra.mxu0 0.0
      %3052 = vmatpush.msra.mxu0 %v2762
      %3053 = vmatpush.msra.mxu0 %v2730
      %3054 = vmatpush.msra.mxu0 %v2698
      %3055 = vmatpush.msra.mxu0 %v2666
      %3056 = vmatpush.msra.mxu0 %v2634
      %3057 = vmatpush.msra.mxu0 %v2602
      %3058 = vmatpush.msra.mxu0 %v2570
      %3059 = vmatpush.msra.mxu0 %v2538
      %3060 = vmatpush.msra.mxu0 %v2506
      %3061 = vmatmul.f32.gmra.mxu0 %v2783
      %v3062 = vpop.f32.mrf.mxu0
      %v3063 = vadd.f32 0.0, %v3062
      %3064 = vdwg.mxu0
      %3065 = vmatpush.msra.mxu0 0.0
      %3066 = vmatpush.msra.mxu0 0.0
      %3067 = vmatpush.msra.mxu0 0.0
      %3068 = vmatpush.msra.mxu0 0.0
      %3069 = vmatpush.msra.mxu0 0.0
      %3070 = vmatpush.msra.mxu0 0.0
      %3071 = vmatpush.msra.mxu0 0.0
      %3072 = vmatpush.msra.mxu0 %v2763
      %3073 = vmatpush.msra.mxu0 %v2731
      %3074 = vmatpush.msra.mxu0 %v2699
      %3075 = vmatpush.msra.mxu0 %v2667
      %3076 = vmatpush.msra.mxu0 %v2635
      %3077 = vmatpush.msra.mxu0 %v2603
      %3078 = vmatpush.msra.mxu0 %v2571
      %3079 = vmatpush.msra.mxu0 %v2539
      %3080 = vmatpush.msra.mxu0 %v2507
      %3081 = vmatmul.f32.gmra.mxu0 %v2783
      %v3082 = vpop.f32.mrf.mxu0
      %v3083 = vadd.f32 0.0, %v3082
      %3084 = vdwg.mxu0
      %3085 = vmatpush.msra.mxu0 0.0
      %3086 = vmatpush.msra.mxu0 0.0
      %3087 = vmatpush.msra.mxu0 0.0
      %3088 = vmatpush.msra.mxu0 0.0
      %3089 = vmatpush.msra.mxu0 0.0
      %3090 = vmatpush.msra.mxu0 0.0
      %3091 = vmatpush.msra.mxu0 0.0
      %3092 = vmatpush.msra.mxu0 %v2764
      %3093 = vmatpush.msra.mxu0 %v2732
      %3094 = vmatpush.msra.mxu0 %v2700
      %3095 = vmatpush.msra.mxu0 %v2668
      %3096 = vmatpush.msra.mxu0 %v2636
      %3097 = vmatpush.msra.mxu0 %v2604
      %3098 = vmatpush.msra.mxu0 %v2572
      %3099 = vmatpush.msra.mxu0 %v2540
      %3100 = vmatpush.msra.mxu0 %v2508
      %3101 = vmatmul.f32.gmra.mxu0 %v2783
      %v3102 = vpop.f32.mrf.mxu0
      %v3103 = vadd.f32 0.0, %v3102
      %3104 = vdwg.mxu0
      %3105 = vmatpush.msra.mxu0 0.0
      %3106 = vmatpush.msra.mxu0 0.0
      %3107 = vmatpush.msra.mxu0 0.0
      %3108 = vmatpush.msra.mxu0 0.0
      %3109 = vmatpush.msra.mxu0 0.0
      %3110 = vmatpush.msra.mxu0 0.0
      %3111 = vmatpush.msra.mxu0 0.0
      %3112 = vmatpush.msra.mxu0 %v2765
      %3113 = vmatpush.msra.mxu0 %v2733
      %3114 = vmatpush.msra.mxu0 %v2701
      %3115 = vmatpush.msra.mxu0 %v2669
      %3116 = vmatpush.msra.mxu0 %v2637
      %3117 = vmatpush.msra.mxu0 %v2605
      %3118 = vmatpush.msra.mxu0 %v2573
      %3119 = vmatpush.msra.mxu0 %v2541
      %3120 = vmatpush.msra.mxu0 %v2509
      %3121 = vmatmul.f32.gmra.mxu0 %v2783
      %v3122 = vpop.f32.mrf.mxu0
      %v3123 = vadd.f32 0.0, %v3122
      %3124 = vdwg.mxu0
      %3125 = vmatpush.msra.mxu0 0.0
      %3126 = vmatpush.msra.mxu0 0.0
      %3127 = vmatpush.msra.mxu0 0.0
      %3128 = vmatpush.msra.mxu0 0.0
      %3129 = vmatpush.msra.mxu0 0.0
      %3130 = vmatpush.msra.mxu0 0.0
      %3131 = vmatpush.msra.mxu0 0.0
      %3132 = vmatpush.msra.mxu0 %v2766
      %3133 = vmatpush.msra.mxu0 %v2734
      %3134 = vmatpush.msra.mxu0 %v2702
      %3135 = vmatpush.msra.mxu0 %v2670
      %3136 = vmatpush.msra.mxu0 %v2638
      %3137 = vmatpush.msra.mxu0 %v2606
      %3138 = vmatpush.msra.mxu0 %v2574
      %3139 = vmatpush.msra.mxu0 %v2542
      %3140 = vmatpush.msra.mxu0 %v2510
      %3141 = vmatmul.f32.gmra.mxu0 %v2783
      %v3142 = vpop.f32.mrf.mxu0
      %v3143 = vadd.f32 0.0, %v3142
      %3144 = vdwg.mxu0
      %3145 = vmatpush.msra.mxu0 0.0
      %3146 = vmatpush.msra.mxu0 0.0
      %3147 = vmatpush.msra.mxu0 0.0
      %3148 = vmatpush.msra.mxu0 0.0
      %3149 = vmatpush.msra.mxu0 0.0
      %3150 = vmatpush.msra.mxu0 0.0
      %3151 = vmatpush.msra.mxu0 0.0
      %3152 = vmatpush.msra.mxu0 %v2767
      %3153 = vmatpush.msra.mxu0 %v2735
      %3154 = vmatpush.msra.mxu0 %v2703
      %3155 = vmatpush.msra.mxu0 %v2671
      %3156 = vmatpush.msra.mxu0 %v2639
      %3157 = vmatpush.msra.mxu0 %v2607
      %3158 = vmatpush.msra.mxu0 %v2575
      %3159 = vmatpush.msra.mxu0 %v2543
      %3160 = vmatpush.msra.mxu0 %v2511
      %3161 = vmatmul.f32.gmra.mxu0 %v2783
      %v3162 = vpop.f32.mrf.mxu0
      %v3163 = vadd.f32 0.0, %v3162
      %3164 = vdwg.mxu0
      %3165 = vmatpush.msra.mxu0 0.0
      %3166 = vmatpush.msra.mxu0 0.0
      %3167 = vmatpush.msra.mxu0 0.0
      %3168 = vmatpush.msra.mxu0 0.0
      %3169 = vmatpush.msra.mxu0 0.0
      %3170 = vmatpush.msra.mxu0 0.0
      %3171 = vmatpush.msra.mxu0 0.0
      %3172 = vmatpush.msra.mxu0 %v2768
      %3173 = vmatpush.msra.mxu0 %v2736
      %3174 = vmatpush.msra.mxu0 %v2704
      %3175 = vmatpush.msra.mxu0 %v2672
      %3176 = vmatpush.msra.mxu0 %v2640
      %3177 = vmatpush.msra.mxu0 %v2608
      %3178 = vmatpush.msra.mxu0 %v2576
      %3179 = vmatpush.msra.mxu0 %v2544
      %3180 = vmatpush.msra.mxu0 %v2512
      %3181 = vmatmul.f32.gmra.mxu0 %v2783
      %v3182 = vpop.f32.mrf.mxu0
      %v3183 = vadd.f32 0.0, %v3182
      %3184 = vdwg.mxu0
      %3185 = vmatpush.msra.mxu0 0.0
      %3186 = vmatpush.msra.mxu0 0.0
      %3187 = vmatpush.msra.mxu0 0.0
      %3188 = vmatpush.msra.mxu0 0.0
      %3189 = vmatpush.msra.mxu0 0.0
      %3190 = vmatpush.msra.mxu0 0.0
      %3191 = vmatpush.msra.mxu0 0.0
      %3192 = vmatpush.msra.mxu0 %v2769
      %3193 = vmatpush.msra.mxu0 %v2737
      %3194 = vmatpush.msra.mxu0 %v2705
      %3195 = vmatpush.msra.mxu0 %v2673
      %3196 = vmatpush.msra.mxu0 %v2641
      %3197 = vmatpush.msra.mxu0 %v2609
      %3198 = vmatpush.msra.mxu0 %v2577
      %3199 = vmatpush.msra.mxu0 %v2545
      %3200 = vmatpush.msra.mxu0 %v2513
      %3201 = vmatmul.f32.gmra.mxu0 %v2783
      %v3202 = vpop.f32.mrf.mxu0
      %v3203 = vadd.f32 0.0, %v3202
      %3204 = vdwg.mxu0
      %3205 = vmatpush.msra.mxu0 0.0
      %3206 = vmatpush.msra.mxu0 0.0
      %3207 = vmatpush.msra.mxu0 0.0
      %3208 = vmatpush.msra.mxu0 0.0
      %3209 = vmatpush.msra.mxu0 0.0
      %3210 = vmatpush.msra.mxu0 0.0
      %3211 = vmatpush.msra.mxu0 0.0
      %3212 = vmatpush.msra.mxu0 %v2770
      %3213 = vmatpush.msra.mxu0 %v2738
      %3214 = vmatpush.msra.mxu0 %v2706
      %3215 = vmatpush.msra.mxu0 %v2674
      %3216 = vmatpush.msra.mxu0 %v2642
      %3217 = vmatpush.msra.mxu0 %v2610
      %3218 = vmatpush.msra.mxu0 %v2578
      %3219 = vmatpush.msra.mxu0 %v2546
      %3220 = vmatpush.msra.mxu0 %v2514
      %3221 = vmatmul.f32.gmra.mxu0 %v2783
      %v3222 = vpop.f32.mrf.mxu0
      %v3223 = vadd.f32 0.0, %v3222
      %3224 = vdwg.mxu0
      %3225 = vmatpush.msra.mxu0 0.0
      %3226 = vmatpush.msra.mxu0 0.0
      %3227 = vmatpush.msra.mxu0 0.0
      %3228 = vmatpush.msra.mxu0 0.0
      %3229 = vmatpush.msra.mxu0 0.0
      %3230 = vmatpush.msra.mxu0 0.0
      %3231 = vmatpush.msra.mxu0 0.0
      %3232 = vmatpush.msra.mxu0 %v2771
      %3233 = vmatpush.msra.mxu0 %v2739
      %3234 = vmatpush.msra.mxu0 %v2707
      %3235 = vmatpush.msra.mxu0 %v2675
      %3236 = vmatpush.msra.mxu0 %v2643
      %3237 = vmatpush.msra.mxu0 %v2611
      %3238 = vmatpush.msra.mxu0 %v2579
      %3239 = vmatpush.msra.mxu0 %v2547
      %3240 = vmatpush.msra.mxu0 %v2515
      %3241 = vmatmul.f32.gmra.mxu0 %v2783
      %v3242 = vpop.f32.mrf.mxu0
      %v3243 = vadd.f32 0.0, %v3242
      %3244 = vdwg.mxu0
      %3245 = vmatpush.msra.mxu0 0.0
      %3246 = vmatpush.msra.mxu0 0.0
      %3247 = vmatpush.msra.mxu0 0.0
      %3248 = vmatpush.msra.mxu0 0.0
      %3249 = vmatpush.msra.mxu0 0.0
      %3250 = vmatpush.msra.mxu0 0.0
      %3251 = vmatpush.msra.mxu0 0.0
      %3252 = vmatpush.msra.mxu0 %v2772
      %3253 = vmatpush.msra.mxu0 %v2740
      %3254 = vmatpush.msra.mxu0 %v2708
      %3255 = vmatpush.msra.mxu0 %v2676
      %3256 = vmatpush.msra.mxu0 %v2644
      %3257 = vmatpush.msra.mxu0 %v2612
      %3258 = vmatpush.msra.mxu0 %v2580
      %3259 = vmatpush.msra.mxu0 %v2548
      %3260 = vmatpush.msra.mxu0 %v2516
      %3261 = vmatmul.f32.gmra.mxu0 %v2783
      %v3262 = vpop.f32.mrf.mxu0
      %v3263 = vadd.f32 0.0, %v3262
      %3264 = vdwg.mxu0
      %3265 = vmatpush.msra.mxu0 0.0
      %3266 = vmatpush.msra.mxu0 0.0
      %3267 = vmatpush.msra.mxu0 0.0
      %3268 = vmatpush.msra.mxu0 0.0
      %3269 = vmatpush.msra.mxu0 0.0
      %3270 = vmatpush.msra.mxu0 0.0
      %3271 = vmatpush.msra.mxu0 0.0
      %3272 = vmatpush.msra.mxu0 %v2773
      %3273 = vmatpush.msra.mxu0 %v2741
      %3274 = vmatpush.msra.mxu0 %v2709
      %3275 = vmatpush.msra.mxu0 %v2677
      %3276 = vmatpush.msra.mxu0 %v2645
      %3277 = vmatpush.msra.mxu0 %v2613
      %3278 = vmatpush.msra.mxu0 %v2581
      %3279 = vmatpush.msra.mxu0 %v2549
      %3280 = vmatpush.msra.mxu0 %v2517
      %3281 = vmatmul.f32.gmra.mxu0 %v2783
      %v3282 = vpop.f32.mrf.mxu0
      %v3283 = vadd.f32 0.0, %v3282
      %3284 = vdwg.mxu0
      %3285 = vmatpush.msra.mxu0 0.0
      %3286 = vmatpush.msra.mxu0 0.0
      %3287 = vmatpush.msra.mxu0 0.0
      %3288 = vmatpush.msra.mxu0 0.0
      %3289 = vmatpush.msra.mxu0 0.0
      %3290 = vmatpush.msra.mxu0 0.0
      %3291 = vmatpush.msra.mxu0 0.0
      %3292 = vmatpush.msra.mxu0 %v2774
      %3293 = vmatpush.msra.mxu0 %v2742
      %3294 = vmatpush.msra.mxu0 %v2710
      %3295 = vmatpush.msra.mxu0 %v2678
      %3296 = vmatpush.msra.mxu0 %v2646
      %3297 = vmatpush.msra.mxu0 %v2614
      %3298 = vmatpush.msra.mxu0 %v2582
      %3299 = vmatpush.msra.mxu0 %v2550
      %3300 = vmatpush.msra.mxu0 %v2518
      %3301 = vmatmul.f32.gmra.mxu0 %v2783
      %v3302 = vpop.f32.mrf.mxu0
      %v3303 = vadd.f32 0.0, %v3302
      %3304 = vdwg.mxu0
      %3305 = vmatpush.msra.mxu0 0.0
      %3306 = vmatpush.msra.mxu0 0.0
      %3307 = vmatpush.msra.mxu0 0.0
      %3308 = vmatpush.msra.mxu0 0.0
      %3309 = vmatpush.msra.mxu0 0.0
      %3310 = vmatpush.msra.mxu0 0.0
      %3311 = vmatpush.msra.mxu0 0.0
      %3312 = vmatpush.msra.mxu0 %v2775
      %3313 = vmatpush.msra.mxu0 %v2743
      %3314 = vmatpush.msra.mxu0 %v2711
      %3315 = vmatpush.msra.mxu0 %v2679
      %3316 = vmatpush.msra.mxu0 %v2647
      %3317 = vmatpush.msra.mxu0 %v2615
      %3318 = vmatpush.msra.mxu0 %v2583
      %3319 = vmatpush.msra.mxu0 %v2551
      %3320 = vmatpush.msra.mxu0 %v2519
      %3321 = vmatmul.f32.gmra.mxu0 %v2783
      %v3322 = vpop.f32.mrf.mxu0
      %v3323 = vadd.f32 0.0, %v3322
      %3324 = vdwg.mxu0
      %3325 = vmatpush.msra.mxu0 0.0
      %3326 = vmatpush.msra.mxu0 0.0
      %3327 = vmatpush.msra.mxu0 0.0
      %3328 = vmatpush.msra.mxu0 0.0
      %3329 = vmatpush.msra.mxu0 0.0
      %3330 = vmatpush.msra.mxu0 0.0
      %3331 = vmatpush.msra.mxu0 0.0
      %3332 = vmatpush.msra.mxu0 %v2776
      %3333 = vmatpush.msra.mxu0 %v2744
      %3334 = vmatpush.msra.mxu0 %v2712
      %3335 = vmatpush.msra.mxu0 %v2680
      %3336 = vmatpush.msra.mxu0 %v2648
      %3337 = vmatpush.msra.mxu0 %v2616
      %3338 = vmatpush.msra.mxu0 %v2584
      %3339 = vmatpush.msra.mxu0 %v2552
      %3340 = vmatpush.msra.mxu0 %v2520
      %3341 = vmatmul.f32.gmra.mxu0 %v2783
      %v3342 = vpop.f32.mrf.mxu0
      %v3343 = vadd.f32 0.0, %v3342
      %3344 = vdwg.mxu0
      %3345 = vmatpush.msra.mxu0 0.0
      %3346 = vmatpush.msra.mxu0 0.0
      %3347 = vmatpush.msra.mxu0 0.0
      %3348 = vmatpush.msra.mxu0 0.0
      %3349 = vmatpush.msra.mxu0 0.0
      %3350 = vmatpush.msra.mxu0 0.0
      %3351 = vmatpush.msra.mxu0 0.0
      %3352 = vmatpush.msra.mxu0 %v2777
      %3353 = vmatpush.msra.mxu0 %v2745
      %3354 = vmatpush.msra.mxu0 %v2713
      %3355 = vmatpush.msra.mxu0 %v2681
      %3356 = vmatpush.msra.mxu0 %v2649
      %3357 = vmatpush.msra.mxu0 %v2617
      %3358 = vmatpush.msra.mxu0 %v2585
      %3359 = vmatpush.msra.mxu0 %v2553
      %3360 = vmatpush.msra.mxu0 %v2521
      %3361 = vmatmul.f32.gmra.mxu0 %v2783
      %v3362 = vpop.f32.mrf.mxu0
      %v3363 = vadd.f32 0.0, %v3362
      %3364 = vdwg.mxu0
      %3365 = vmatpush.msra.mxu0 0.0
      %3366 = vmatpush.msra.mxu0 0.0
      %3367 = vmatpush.msra.mxu0 0.0
      %3368 = vmatpush.msra.mxu0 0.0
      %3369 = vmatpush.msra.mxu0 0.0
      %3370 = vmatpush.msra.mxu0 0.0
      %3371 = vmatpush.msra.mxu0 0.0
      %3372 = vmatpush.msra.mxu0 %v2778
      %3373 = vmatpush.msra.mxu0 %v2746
      %3374 = vmatpush.msra.mxu0 %v2714
      %3375 = vmatpush.msra.mxu0 %v2682
      %3376 = vmatpush.msra.mxu0 %v2650
      %3377 = vmatpush.msra.mxu0 %v2618
      %3378 = vmatpush.msra.mxu0 %v2586
      %3379 = vmatpush.msra.mxu0 %v2554
      %3380 = vmatpush.msra.mxu0 %v2522
      %3381 = vmatmul.f32.gmra.mxu0 %v2783
      %v3382 = vpop.f32.mrf.mxu0
      %v3383 = vadd.f32 0.0, %v3382
      %3384 = vdwg.mxu0
      %3385 = vmatpush.msra.mxu0 0.0
      %3386 = vmatpush.msra.mxu0 0.0
      %3387 = vmatpush.msra.mxu0 0.0
      %3388 = vmatpush.msra.mxu0 0.0
      %3389 = vmatpush.msra.mxu0 0.0
      %3390 = vmatpush.msra.mxu0 0.0
      %3391 = vmatpush.msra.mxu0 0.0
      %3392 = vmatpush.msra.mxu0 %v2779
      %3393 = vmatpush.msra.mxu0 %v2747
      %3394 = vmatpush.msra.mxu0 %v2715
      %3395 = vmatpush.msra.mxu0 %v2683
      %3396 = vmatpush.msra.mxu0 %v2651
      %3397 = vmatpush.msra.mxu0 %v2619
      %3398 = vmatpush.msra.mxu0 %v2587
      %3399 = vmatpush.msra.mxu0 %v2555
      %3400 = vmatpush.msra.mxu0 %v2523
      %3401 = vmatmul.f32.gmra.mxu0 %v2783
      %v3402 = vpop.f32.mrf.mxu0
      %v3403 = vadd.f32 0.0, %v3402
      %3404 = vdwg.mxu0
      %3405 = vmatpush.msra.mxu0 0.0
      %3406 = vmatpush.msra.mxu0 0.0
      %3407 = vmatpush.msra.mxu0 0.0
      %3408 = vmatpush.msra.mxu0 0.0
      %3409 = vmatpush.msra.mxu0 0.0
      %3410 = vmatpush.msra.mxu0 0.0
      %3411 = vmatpush.msra.mxu0 0.0
      %3412 = vmatpush.msra.mxu0 %v2780
      %3413 = vmatpush.msra.mxu0 %v2748
      %3414 = vmatpush.msra.mxu0 %v2716
      %3415 = vmatpush.msra.mxu0 %v2684
      %3416 = vmatpush.msra.mxu0 %v2652
      %3417 = vmatpush.msra.mxu0 %v2620
      %3418 = vmatpush.msra.mxu0 %v2588
      %3419 = vmatpush.msra.mxu0 %v2556
      %3420 = vmatpush.msra.mxu0 %v2524
      %3421 = vmatmul.f32.gmra.mxu0 %v2783
      %v3422 = vpop.f32.mrf.mxu0
      %v3423 = vadd.f32 0.0, %v3422
      %3424 = vdwg.mxu0
      %v3425 = vtanh.pop %v2803
      %v3426 = vtanh.pop %v2823
      %v3427 = vtanh.pop %v2843
      %v3428 = vtanh.pop %v2863
      %v3429 = vtanh.pop %v2883
      %v3430 = vtanh.pop %v2903
      %v3431 = vtanh.pop %v2923
      %v3432 = vtanh.pop %v2943
      %v3433 = vtanh.pop %v2963
      %v3434 = vtanh.pop %v2983
      %v3435 = vtanh.pop %v3003
      %v3436 = vtanh.pop %v3023
      %v3437 = vtanh.pop %v3043
      %v3438 = vtanh.pop %v3063
      %v3439 = vtanh.pop %v3083
      %v3440 = vtanh.pop %v3103
      %v3441 = vtanh.pop %v3123
      %v3442 = vtanh.pop %v3143
      %v3443 = vtanh.pop %v3163
      %v3444 = vtanh.pop %v3183
      %v3445 = vtanh.pop %v3203
      %v3446 = vtanh.pop %v3223
      %v3447 = vtanh.pop %v3243
      %v3448 = vtanh.pop %v3263
      %v3449 = vtanh.pop %v3283
      %v3450 = vtanh.pop %v3303
      %v3451 = vtanh.pop %v3323
      %v3452 = vtanh.pop %v3343
      %v3453 = vtanh.pop %v3363
      %v3454 = vtanh.pop %v3383
      %v3455 = vtanh.pop %v3403
      %v3456 = vtanh.pop %v3423
      %v3489 = vrot.slane %v3426, 4
      %v3490 = vrot.slane %v3428, 4
      %v3491 = vrot.slane %v3430, 4
      %v3492 = vrot.slane %v3432, 4
      %v3493 = vrot.slane %v3434, 4
      %v3494 = vrot.slane %v3436, 4
      %v3495 = vrot.slane %v3438, 4
      %v3496 = vrot.slane %v3440, 4
      %v3497 = vrot.slane %v3442, 4
      %v3498 = vrot.slane %v3444, 4
      %v3499 = vrot.slane %v3446, 4
      %v3500 = vrot.slane %v3448, 4
      %v3501 = vrot.slane %v3450, 4
      %v3502 = vrot.slane %v3452, 4
      %v3503 = vrot.slane %v3454, 4
      %v3504 = vrot.slane %v3456, 4
      %vm3505 = vcmask 1043456
      %v3506 = vsel %vm3505, %v3425, %v3489
      %v3507 = vsel %vm3505, %v3427, %v3490
      %v3508 = vsel %vm3505, %v3429, %v3491
      %v3509 = vsel %vm3505, %v3431, %v3492
      %v3510 = vsel %vm3505, %v3433, %v3493
      %v3511 = vsel %vm3505, %v3435, %v3494
      %v3512 = vsel %vm3505, %v3437, %v3495
      %v3513 = vsel %vm3505, %v3439, %v3496
      %v3514 = vsel %vm3505, %v3441, %v3497
      %v3515 = vsel %vm3505, %v3443, %v3498
      %v3516 = vsel %vm3505, %v3445, %v3499
      %v3517 = vsel %vm3505, %v3447, %v3500
      %v3518 = vsel %vm3505, %v3449, %v3501
      %v3519 = vsel %vm3505, %v3451, %v3502
      %v3520 = vsel %vm3505, %v3453, %v3503
      %v3521 = vsel %vm3505, %v3455, %v3504
      %3538 = vst [vmem:[%s143] sm:$0x77] %v3506
      %3539 = vst [vmem:[%s143 + $0x8] sm:$0x77] %v3507
      %3540 = vst [vmem:[%s143 + $0x10] sm:$0x77] %v3508
      %3541 = vst [vmem:[%s143 + $0x18] sm:$0x77] %v3509
      %3542 = vst [vmem:[%s143 + $0x20] sm:$0x77] %v3510
      %3543 = vst [vmem:[%s143 + $0x28] sm:$0x77] %v3511
      %3544 = vst [vmem:[%s143 + $0x30] sm:$0x77] %v3512
      %3545 = vst [vmem:[%s143 + $0x38] sm:$0x77] %v3513
      %3546 = vst [vmem:[%s143 + $0x40] sm:$0x77] %v3514
      %3547 = vst [vmem:[%s143 + $0x48] sm:$0x77] %v3515
      %3548 = vst [vmem:[%s143 + $0x50] sm:$0x77] %v3516
      %3549 = vst [vmem:[%s143 + $0x58] sm:$0x77] %v3517
      %3550 = vst [vmem:[%s143 + $0x60] sm:$0x77] %v3518
      %3551 = vst [vmem:[%s143 + $0x68] sm:$0x77] %v3519
      %3552 = vst [vmem:[%s143 + $0x70] sm:$0x77] %v3520
      %3553 = vst [vmem:[%s143 + $0x78] sm:$0x77] %v3521
      %p3554 = scmp.lt.s32.totalorder %s13, 1
      %s3555 = scalar_select %p3554, %s13, 1
      %s3556 = smul.addr %s3555, 32
      %s3557 = smul.addr %s3556, 4
      %s3558 = scalar_lea.vmem %s2, %s3557
      // Predicated region
      $region29: #{get_image_g.1} parent=27 // pred_check
        %p3559 = pneg %p78
      $region30: #{get_image_g.1} parent=27 // pred_check_branch
        %3561 = sbr.rel (%p3559) target = $region32
      $region31: #{get_image_g.1} parent=27 // pred_region
        _
      $region32: #{get_image_g.1} parent=27 // pred_fallthru
        _
    $region28: #{get_image_g.1} parent=5 // pred_fallthru
      _
    %p3562 = scmp.le.s32.totalorder 2, %s8
    // Predicated region
    $region33: #{get_image_g.1} parent=5 // pred_check
      %p3563 = pneg %p3562
    $region34: #{get_image_g.1} parent=5 // pred_check_branch
      %3565 = sbr.rel (%p3563) target = $region36
    $region35: #{get_image_g.1} parent=5 // pred_region
      %s3566 = ssub.s32 %s8, 2
      // Predicated region
      $region37: #{get_image_g.1} parent=35 // pred_check
        %p3567 = pneg %p84
      $region38: #{get_image_g.1} parent=35 // pred_check_branch
        %3569 = sbr.rel (%p3567) target = $region40
      $region39: #{get_image_g.1} parent=35 // pred_region
        %p3570 = scmp.lt.s32.totalorder %s14, 1
        %s3571 = scalar_select %p3570, %s14, 1
        %s3572 = smul.addr %s3571, 32
        %s3573 = smul.addr %s3572, 4
        %s3574 = scalar_lea.vmem %s2, %s3573
      $region40: #{get_image_g.1} parent=35 // pred_fallthru
        _
    $region36: #{get_image_g.1} parent=5 // pred_fallthru
      _
  $region6: #{get_image_g.1} parent=0 // loop_footer
    %s12 = sadd.s32 1, %s8
  $region7: #{get_image_g.1} parent=0 // loop_footer_branch
    %7 = sbr.rel target = $region3
  $region8: #{get_image_g.1} parent=0 // loop_exit
    _

</llo_original>
